<compile_context>
chip_gen: v7x
topology: tpu7x:2x2x1
jax: 0.10.0
libtpu: 0.0.40
codegen_flags: <defaults>
</compile_context>

<pallas_src>
import jax
import jax.numpy as jnp
from jax.experimental import pallas as pl
from jax.experimental.pallas import tpu as pltpu

C = 128           # num_channels  (torchpwl.PWL(num_channels=128, ...))
K = 101           # num_breakpoints -> K delta-slope segments
K_PAD = 104       # sublane-aligned storage rows for the (K, C) parameter tables
SUB_MAX = 128     # register-resident rows per inner sub-chunk


def _round_up(v, m):
    return ((v + m - 1) // m) * m


def _choose_blocks(rows):
    """Return (row_block, sub_chunk, rows_padded).

    Large inputs: 256-2048-row DMA blocks (amortize the ~0.35 us/step pipeline
    overhead to ~1-2%) arranged as an even grid of >= 2 steps (>= 4 once the
    input is big enough) so v7x's two TensorCores get balanced work under
    dimension_semantics=("parallel",).  Small inputs: one register-resident
    block, split in two when possible so the grid still has >= 2 steps.
    """
    if rows < 2 * SUB_MAX:
        blk = max(8, _round_up((rows + 1) // 2, 8))
        return blk, blk, _round_up(rows, blk)
    if rows >= 8192:
        target = 2048
    elif rows >= 4096:
        target = 1024
    elif rows >= 2048:
        target = 512
    else:
        target = 256
    n_steps = max(2, -(-rows // target))
    if n_steps % 2:
        n_steps += 1                      # even grid -> balanced across 2 TCs
    row_block = _round_up(-(-rows // n_steps), SUB_MAX)
    return row_block, SUB_MAX, row_block * n_steps


def _make_pwl_kernel(row_block, sub):
    n_sub = row_block // sub

    def kernel(x_ref, xp_ref, ds_ref, tail_ref, o_ref):
        # x_ref   : (row_block, C)  input rows, channels on the lane axis
        # xp_ref  : (K_PAD, C)      sorted breakpoints (rows >= K never read)
        # ds_ref  : (K_PAD, C)      delta slopes s_{k+1}-s_k (rows >= K never read)
        # tail_ref: (8, C)          row0 = x_0, row1 = s_0 (left slope), row2 = bias
        x0 = tail_ref[0:1, :]
        s0 = tail_ref[1:2, :]
        b = tail_ref[2:3, :]

        def process(off):
            # TODO(synk): for bf16 activations on v6e/v7x, do the per-segment
            # sub/max/mul in bf16 with the accumulator kept in f32 for ~2x VPU
            # throughput (skip on v5e: no bf16 VPU).
            x = x_ref[pl.ds(off, sub), :].astype(jnp.float32)
            acc = b + s0 * (x - x0)                      # left-tail / anchor term
            # Fully static unroll over exactly K segments: every parameter
            # offset is a compile-time constant (no loop/branch overhead, no
            # dead padded segments).
            for k in range(K):
                xp_k = xp_ref[k:k + 1, :]
                ds_k = ds_ref[k:k + 1, :]
                acc = acc + ds_k * jnp.maximum(x - xp_k, 0.0)
            o_ref[pl.ds(off, sub), :] = acc.astype(o_ref.dtype)

        if n_sub == 1:
            process(0)
        else:
            @pl.loop(0, n_sub)
            def _(r):
                process(pl.multiple_of(r * sub, sub))

    return kernel


def pwl_rows_pallas(x2d, xp_sorted_ck, slopes_ck, bias_c):
    """Apply the per-channel PWL to (rows, C) data (channels on the last axis)."""
    rows = x2d.shape[0]
    assert x2d.shape[1] == C

    row_block, sub, rows_p = _choose_blocks(rows)
    if rows_p != rows:
        x2d = jnp.pad(x2d, ((0, rows_p - rows), (0, 0)))

    xp = jnp.asarray(xp_sorted_ck, jnp.float32)            # (C, K)
    sl = jnp.asarray(slopes_ck, jnp.float32)               # (C, K+1)
    ds = sl[:, 1:] - sl[:, :-1]                            # (C, K) delta slopes
    pad = K_PAD - K
    xp_kc = jnp.pad(xp.T, ((0, pad), (0, 0)))              # (K_PAD, C) tail rows unused
    ds_kc = jnp.pad(ds.T, ((0, pad), (0, 0)))              # (K_PAD, C)
    tail = jnp.zeros((8, C), jnp.float32)
    tail = tail.at[0].set(xp[:, 0])                        # x_first
    tail = tail.at[1].set(sl[:, 0])                        # left-tail slope s_0
    tail = tail.at[2].set(jnp.asarray(bias_c, jnp.float32))

    out2d = pl.pallas_call(
        _make_pwl_kernel(row_block, sub),
        out_shape=jax.ShapeDtypeStruct((rows_p, C), x2d.dtype),
        grid_spec=pltpu.PrefetchScalarGridSpec(
            num_scalar_prefetch=0,
            grid=(rows_p // row_block,),
            in_specs=[
                pl.BlockSpec((row_block, C), lambda i: (i, 0)),
                pl.BlockSpec((K_PAD, C), lambda i: (0, 0)),
                pl.BlockSpec((K_PAD, C), lambda i: (0, 0)),
                pl.BlockSpec((8, C), lambda i: (0, 0)),
            ],
            out_specs=pl.BlockSpec((row_block, C), lambda i: (i, 0)),
        ),
        compiler_params=pltpu.CompilerParams(
            dimension_semantics=("parallel",)),
    )(x2d, xp_kc, ds_kc, tail)

    return out2d[:rows]


def pwl_pallas(x_nchw, xp_sorted_ck, slopes_ck, bias_c):
    """Apply the per-channel PWL to an NCHW tensor via the Pallas kernel."""
    B, Cin, H, W = x_nchw.shape
    assert Cin == C
    # TODO(synk): keep activations NHWC across adjacent layers (call
    # pwl_rows_pallas directly) to drop these two full-tensor HBM transpose
    # passes; the kernel itself is layout-agnostic.
    x2d = jnp.transpose(x_nchw, (0, 2, 3, 1)).reshape(-1, C)
    out2d = pwl_rows_pallas(x2d, xp_sorted_ck, slopes_ck, bias_c)
    return jnp.transpose(out2d.reshape(B, H, W, C), (0, 3, 1, 2))


def nonlinear_layer_forward(state, xp_sorted_ck, slopes_ck, bias_c):
    """Mirror of NonlinearLayer.forward: dict in, dict out."""
    conv1_output = state["conv1_output"]
    state["nonlinear_output"] = pwl_pallas(conv1_output, xp_sorted_ck,
                                           slopes_ck, bias_c)
    return state


def pwl_reference(x_nchw, xp_sorted_ck, slopes_ck, bias_c):
    """Pure-JAX reference reproducing torchpwl BaseSlopedPWL.forward (gather)."""
    B, Cc, H, W = x_nchw.shape
    x = jnp.transpose(x_nchw, (0, 2, 3, 1)).reshape(-1, Cc).astype(jnp.float32)
    skips = jnp.roll(xp_sorted_ck, -1, axis=1) - xp_sorted_ck
    skip_deltas = skips * slopes_ck[:, 1:]
    biases = bias_c[:, None]
    cumsums = jnp.cumsum(skip_deltas, axis=1)[:, :-1]
    betas = jnp.concatenate([biases, biases, cumsums + biases], axis=1)         # (C, K+1)
    breakpoints = jnp.concatenate([xp_sorted_ck[:, :1], xp_sorted_ck], axis=1)  # (C, K+1)
    b_ids = jnp.sum((x[:, :, None] - xp_sorted_ck[None, :, :]) >= 0, axis=2)    # (N, C)
    ch = jnp.arange(Cc)[None, :]
    sel_b = betas[ch, b_ids]
    sel_x = breakpoints[ch, b_ids]
    sel_s = slopes_ck[ch, b_ids]
    out = sel_b + (x - sel_x) * sel_s
    return jnp.transpose(out.reshape(B, H, W, Cc), (0, 3, 1, 2)).astype(x_nchw.dtype)


if __name__ == "__main__":
    key = jax.random.PRNGKey(0)
    k1, k2, k3, k4 = jax.random.split(key, 4)

    # Deterministic synthetic PWL parameters (shapes from torchpwl.PWL(128, 101)):
    x_positions = 2.0 * jax.random.normal(k1, (C, K), jnp.float32)
    xp_sorted = jnp.sort(x_positions, axis=1)
    slopes = jnp.ones((C, K + 1), jnp.float32) + 0.05 * jax.random.normal(
        k2, (C, K + 1), jnp.float32)
    biases = xp_sorted[:, 0]   # torchpwl anchors PWL value at the first breakpoint

    # Small NCHW activation (128 rows -> clamped block, grid of 2 steps, n_sub=1).
    conv1_output = 3.0 * jax.random.normal(k3, (2, C, 8, 8), jnp.float32)
    state = {"conv1_output": conv1_output}
    state = nonlinear_layer_forward(state, xp_sorted, slopes, biases)
    nonlinear = jax.block_until_ready(state["nonlinear_output"])
    ref = pwl_reference(conv1_output, xp_sorted, slopes, biases)
    assert nonlinear.shape == conv1_output.shape
    assert nonlinear.dtype == conv1_output.dtype
    err1 = float(jnp.max(jnp.abs(nonlinear - ref)))
    assert jnp.allclose(nonlinear, ref, atol=1e-3, rtol=1e-3), err1

    # Larger activation: exercises the even grid of 4 steps and n_sub > 1 path.
    x_big = 3.0 * jax.random.normal(k4, (4, C, 16, 16), jnp.float32)
    out_big = jax.block_until_ready(pwl_pallas(x_big, xp_sorted, slopes, biases))
    ref_big = pwl_reference(x_big, xp_sorted, slopes, biases)
    err2 = float(jnp.max(jnp.abs(out_big - ref_big)))
    assert jnp.allclose(out_big, ref_big, atol=1e-3, rtol=1e-3), err2

    print("KERNEL_OK")
</pallas_src>

<mosaic_0001>
module attributes {stable_mosaic.version = 11 : i64} {
  func.func @kernel(%arg0: i32, %arg1: memref<64x128xf32, #tpu.memory_space<vmem>>, %arg2: memref<104x128xf32, #tpu.memory_space<vmem>>, %arg3: memref<104x128xf32, #tpu.memory_space<vmem>>, %arg4: memref<8x128xf32, #tpu.memory_space<vmem>>, %arg5: memref<64x128xf32, #tpu.memory_space<vmem>>) attributes {dimension_semantics = [#tpu.dimension_semantics<parallel>], iteration_bounds = array<i64: 2>, scalar_prefetch = 0 : i64, scratch_operands = 0 : i64, tpu.core_type = #tpu.core_type<tc>, window_params = [{transform_indices = @transform_0, window_bounds = array<i64: 64, 128>}, {pipeline_mode = #tpu.pipeline_mode<synchronous>, transform_indices = @transform_1, window_bounds = array<i64: 104, 128>}, {pipeline_mode = #tpu.pipeline_mode<synchronous>, transform_indices = @transform_2, window_bounds = array<i64: 104, 128>}, {pipeline_mode = #tpu.pipeline_mode<synchronous>, transform_indices = @transform_3, window_bounds = array<i64: 8, 128>}, {transform_indices = @transform_4, window_bounds = array<i64: 64, 128>}]} {
    %c0 = arith.constant 0 : index
    %c0_0 = arith.constant 0 : index
    %0 = vector.load %arg4[%c0, %c0_0] : memref<8x128xf32, #tpu.memory_space<vmem>>, vector<1x128xf32>
    %c1 = arith.constant 1 : index
    %c0_1 = arith.constant 0 : index
    %1 = vector.load %arg4[%c1, %c0_1] : memref<8x128xf32, #tpu.memory_space<vmem>>, vector<1x128xf32>
    %c2 = arith.constant 2 : index
    %c0_2 = arith.constant 0 : index
    %2 = vector.load %arg4[%c2, %c0_2] : memref<8x128xf32, #tpu.memory_space<vmem>>, vector<1x128xf32>
    %c0_3 = arith.constant 0 : index
    %c0_4 = arith.constant 0 : index
    %3 = vector.load %arg1[%c0_3, %c0_4] : memref<64x128xf32, #tpu.memory_space<vmem>>, vector<64x128xf32>
    %4 = vector.broadcast %0 : vector<1x128xf32> to vector<64x128xf32>
    %5 = arith.subf %3, %4 : vector<64x128xf32>
    %6 = vector.broadcast %1 : vector<1x128xf32> to vector<64x128xf32>
    %7 = arith.mulf %6, %5 : vector<64x128xf32>
    %8 = vector.broadcast %2 : vector<1x128xf32> to vector<64x128xf32>
    %9 = arith.addf %8, %7 : vector<64x128xf32>
    %c0_5 = arith.constant 0 : index
    %c0_6 = arith.constant 0 : index
    %10 = vector.load %arg2[%c0_5, %c0_6] : memref<104x128xf32, #tpu.memory_space<vmem>>, vector<1x128xf32>
    %c0_7 = arith.constant 0 : index
    %c0_8 = arith.constant 0 : index
    %11 = vector.load %arg3[%c0_7, %c0_8] : memref<104x128xf32, #tpu.memory_space<vmem>>, vector<1x128xf32>
    %12 = vector.broadcast %10 : vector<1x128xf32> to vector<64x128xf32>
    %13 = arith.subf %3, %12 : vector<64x128xf32>
    %cst = arith.constant 0.000000e+00 : f32
    %14 = vector.broadcast %cst : f32 to vector<64x128xf32>
    %15 = arith.maximumf %13, %14 : vector<64x128xf32>
    %16 = vector.broadcast %11 : vector<1x128xf32> to vector<64x128xf32>
    %17 = arith.mulf %16, %15 : vector<64x128xf32>
    %18 = arith.addf %9, %17 : vector<64x128xf32>
    %c1_9 = arith.constant 1 : index
    %c0_10 = arith.constant 0 : index
    %19 = vector.load %arg2[%c1_9, %c0_10] : memref<104x128xf32, #tpu.memory_space<vmem>>, vector<1x128xf32>
    %c1_11 = arith.constant 1 : index
    %c0_12 = arith.constant 0 : index
    %20 = vector.load %arg3[%c1_11, %c0_12] : memref<104x128xf32, #tpu.memory_space<vmem>>, vector<1x128xf32>
    %21 = vector.broadcast %19 : vector<1x128xf32> to vector<64x128xf32>
    %22 = arith.subf %3, %21 : vector<64x128xf32>
    %cst_13 = arith.constant 0.000000e+00 : f32
    %23 = vector.broadcast %cst_13 : f32 to vector<64x128xf32>
    %24 = arith.maximumf %22, %23 : vector<64x128xf32>
    %25 = vector.broadcast %20 : vector<1x128xf32> to vector<64x128xf32>
    %26 = arith.mulf %25, %24 : vector<64x128xf32>
    %27 = arith.addf %18, %26 : vector<64x128xf32>
    %c2_14 = arith.constant 2 : index
    %c0_15 = arith.constant 0 : index
    %28 = vector.load %arg2[%c2_14, %c0_15] : memref<104x128xf32, #tpu.memory_space<vmem>>, vector<1x128xf32>
    %c2_16 = arith.constant 2 : index
    %c0_17 = arith.constant 0 : index
    %29 = vector.load %arg3[%c2_16, %c0_17] : memref<104x128xf32, #tpu.memory_space<vmem>>, vector<1x128xf32>
    %30 = vector.broadcast %28 : vector<1x128xf32> to vector<64x128xf32>
    %31 = arith.subf %3, %30 : vector<64x128xf32>
    %cst_18 = arith.constant 0.000000e+00 : f32
    %32 = vector.broadcast %cst_18 : f32 to vector<64x128xf32>
    %33 = arith.maximumf %31, %32 : vector<64x128xf32>
    %34 = vector.broadcast %29 : vector<1x128xf32> to vector<64x128xf32>
    %35 = arith.mulf %34, %33 : vector<64x128xf32>
    %36 = arith.addf %27, %35 : vector<64x128xf32>
    %c3 = arith.constant 3 : index
    %c0_19 = arith.constant 0 : index
    %37 = vector.load %arg2[%c3, %c0_19] : memref<104x128xf32, #tpu.memory_space<vmem>>, vector<1x128xf32>
    %c3_20 = arith.constant 3 : index
    %c0_21 = arith.constant 0 : index
    %38 = vector.load %arg3[%c3_20, %c0_21] : memref<104x128xf32, #tpu.memory_space<vmem>>, vector<1x128xf32>
    %39 = vector.broadcast %37 : vector<1x128xf32> to vector<64x128xf32>
    %40 = arith.subf %3, %39 : vector<64x128xf32>
    %cst_22 = arith.constant 0.000000e+00 : f32
    %41 = vector.broadcast %cst_22 : f32 to vector<64x128xf32>
    %42 = arith.maximumf %40, %41 : vector<64x128xf32>
    %43 = vector.broadcast %38 : vector<1x128xf32> to vector<64x128xf32>
    %44 = arith.mulf %43, %42 : vector<64x128xf32>
    %45 = arith.addf %36, %44 : vector<64x128xf32>
    %c4 = arith.constant 4 : index
    %c0_23 = arith.constant 0 : index
    %46 = vector.load %arg2[%c4, %c0_23] : memref<104x128xf32, #tpu.memory_space<vmem>>, vector<1x128xf32>
    %c4_24 = arith.constant 4 : index
    %c0_25 = arith.constant 0 : index
    %47 = vector.load %arg3[%c4_24, %c0_25] : memref<104x128xf32, #tpu.memory_space<vmem>>, vector<1x128xf32>
    %48 = vector.broadcast %46 : vector<1x128xf32> to vector<64x128xf32>
    %49 = arith.subf %3, %48 : vector<64x128xf32>
    %cst_26 = arith.constant 0.000000e+00 : f32
    %50 = vector.broadcast %cst_26 : f32 to vector<64x128xf32>
    %51 = arith.maximumf %49, %50 : vector<64x128xf32>
    %52 = vector.broadcast %47 : vector<1x128xf32> to vector<64x128xf32>
    %53 = arith.mulf %52, %51 : vector<64x128xf32>
    %54 = arith.addf %45, %53 : vector<64x128xf32>
    %c5 = arith.constant 5 : index
    %c0_27 = arith.constant 0 : index
    %55 = vector.load %arg2[%c5, %c0_27] : memref<104x128xf32, #tpu.memory_space<vmem>>, vector<1x128xf32>
    %c5_28 = arith.constant 5 : index
    %c0_29 = arith.constant 0 : index
    %56 = vector.load %arg3[%c5_28, %c0_29] : memref<104x128xf32, #tpu.memory_space<vmem>>, vector<1x128xf32>
    %57 = vector.broadcast %55 : vector<1x128xf32> to vector<64x128xf32>
    %58 = arith.subf %3, %57 : vector<64x128xf32>
    %cst_30 = arith.constant 0.000000e+00 : f32
    %59 = vector.broadcast %cst_30 : f32 to vector<64x128xf32>
    %60 = arith.maximumf %58, %59 : vector<64x128xf32>
    %61 = vector.broadcast %56 : vector<1x128xf32> to vector<64x128xf32>
    %62 = arith.mulf %61, %60 : vector<64x128xf32>
    %63 = arith.addf %54, %62 : vector<64x128xf32>
    %c6 = arith.constant 6 : index
    %c0_31 = arith.constant 0 : index
    %64 = vector.load %arg2[%c6, %c0_31] : memref<104x128xf32, #tpu.memory_space<vmem>>, vector<1x128xf32>
    %c6_32 = arith.constant 6 : index
    %c0_33 = arith.constant 0 : index
    %65 = vector.load %arg3[%c6_32, %c0_33] : memref<104x128xf32, #tpu.memory_space<vmem>>, vector<1x128xf32>
    %66 = vector.broadcast %64 : vector<1x128xf32> to vector<64x128xf32>
    %67 = arith.subf %3, %66 : vector<64x128xf32>
    %cst_34 = arith.constant 0.000000e+00 : f32
    %68 = vector.broadcast %cst_34 : f32 to vector<64x128xf32>
    %69 = arith.maximumf %67, %68 : vector<64x128xf32>
    %70 = vector.broadcast %65 : vector<1x128xf32> to vector<64x128xf32>
    %71 = arith.mulf %70, %69 : vector<64x128xf32>
    %72 = arith.addf %63, %71 : vector<64x128xf32>
    %c7 = arith.constant 7 : index
    %c0_35 = arith.constant 0 : index
    %73 = vector.load %arg2[%c7, %c0_35] : memref<104x128xf32, #tpu.memory_space<vmem>>, vector<1x128xf32>
    %c7_36 = arith.constant 7 : index
    %c0_37 = arith.constant 0 : index
    %74 = vector.load %arg3[%c7_36, %c0_37] : memref<104x128xf32, #tpu.memory_space<vmem>>, vector<1x128xf32>
    %75 = vector.broadcast %73 : vector<1x128xf32> to vector<64x128xf32>
    %76 = arith.subf %3, %75 : vector<64x128xf32>
    %cst_38 = arith.constant 0.000000e+00 : f32
    %77 = vector.broadcast %cst_38 : f32 to vector<64x128xf32>
    %78 = arith.maximumf %76, %77 : vector<64x128xf32>
    %79 = vector.broadcast %74 : vector<1x128xf32> to vector<64x128xf32>
    %80 = arith.mulf %79, %78 : vector<64x128xf32>
    %81 = arith.addf %72, %80 : vector<64x128xf32>
    %c8 = arith.constant 8 : index
    %c0_39 = arith.constant 0 : index
    %82 = vector.load %arg2[%c8, %c0_39] : memref<104x128xf32, #tpu.memory_space<vmem>>, vector<1x128xf32>
    %c8_40 = arith.constant 8 : index
    %c0_41 = arith.constant 0 : index
    %83 = vector.load %arg3[%c8_40, %c0_41] : memref<104x128xf32, #tpu.memory_space<vmem>>, vector<1x128xf32>
    %84 = vector.broadcast %82 : vector<1x128xf32> to vector<64x128xf32>
    %85 = arith.subf %3, %84 : vector<64x128xf32>
    %cst_42 = arith.constant 0.000000e+00 : f32
    %86 = vector.broadcast %cst_42 : f32 to vector<64x128xf32>
    %87 = arith.maximumf %85, %86 : vector<64x128xf32>
    %88 = vector.broadcast %83 : vector<1x128xf32> to vector<64x128xf32>
    %89 = arith.mulf %88, %87 : vector<64x128xf32>
    %90 = arith.addf %81, %89 : vector<64x128xf32>
    %c9 = arith.constant 9 : index
    %c0_43 = arith.constant 0 : index
    %91 = vector.load %arg2[%c9, %c0_43] : memref<104x128xf32, #tpu.memory_space<vmem>>, vector<1x128xf32>
    %c9_44 = arith.constant 9 : index
    %c0_45 = arith.constant 0 : index
    %92 = vector.load %arg3[%c9_44, %c0_45] : memref<104x128xf32, #tpu.memory_space<vmem>>, vector<1x128xf32>
    %93 = vector.broadcast %91 : vector<1x128xf32> to vector<64x128xf32>
    %94 = arith.subf %3, %93 : vector<64x128xf32>
    %cst_46 = arith.constant 0.000000e+00 : f32
    %95 = vector.broadcast %cst_46 : f32 to vector<64x128xf32>
    %96 = arith.maximumf %94, %95 : vector<64x128xf32>
    %97 = vector.broadcast %92 : vector<1x128xf32> to vector<64x128xf32>
    %98 = arith.mulf %97, %96 : vector<64x128xf32>
    %99 = arith.addf %90, %98 : vector<64x128xf32>
    %c10 = arith.constant 10 : index
    %c0_47 = arith.constant 0 : index
    %100 = vector.load %arg2[%c10, %c0_47] : memref<104x128xf32, #tpu.memory_space<vmem>>, vector<1x128xf32>
    %c10_48 = arith.constant 10 : index
    %c0_49 = arith.constant 0 : index
    %101 = vector.load %arg3[%c10_48, %c0_49] : memref<104x128xf32, #tpu.memory_space<vmem>>, vector<1x128xf32>
    %102 = vector.broadcast %100 : vector<1x128xf32> to vector<64x128xf32>
    %103 = arith.subf %3, %102 : vector<64x128xf32>
    %cst_50 = arith.constant 0.000000e+00 : f32
    %104 = vector.broadcast %cst_50 : f32 to vector<64x128xf32>
    %105 = arith.maximumf %103, %104 : vector<64x128xf32>
    %106 = vector.broadcast %101 : vector<1x128xf32> to vector<64x128xf32>
    %107 = arith.mulf %106, %105 : vector<64x128xf32>
    %108 = arith.addf %99, %107 : vector<64x128xf32>
    %c11 = arith.constant 11 : index
    %c0_51 = arith.constant 0 : index
    %109 = vector.load %arg2[%c11, %c0_51] : memref<104x128xf32, #tpu.memory_space<vmem>>, vector<1x128xf32>
    %c11_52 = arith.constant 11 : index
    %c0_53 = arith.constant 0 : index
    %110 = vector.load %arg3[%c11_52, %c0_53] : memref<104x128xf32, #tpu.memory_space<vmem>>, vector<1x128xf32>
    %111 = vector.broadcast %109 : vector<1x128xf32> to vector<64x128xf32>
    %112 = arith.subf %3, %111 : vector<64x128xf32>
    %cst_54 = arith.constant 0.000000e+00 : f32
    %113 = vector.broadcast %cst_54 : f32 to vector<64x128xf32>
    %114 = arith.maximumf %112, %113 : vector<64x128xf32>
    %115 = vector.broadcast %110 : vector<1x128xf32> to vector<64x128xf32>
    %116 = arith.mulf %115, %114 : vector<64x128xf32>
    %117 = arith.addf %108, %116 : vector<64x128xf32>
    %c12 = arith.constant 12 : index
    %c0_55 = arith.constant 0 : index
    %118 = vector.load %arg2[%c12, %c0_55] : memref<104x128xf32, #tpu.memory_space<vmem>>, vector<1x128xf32>
    %c12_56 = arith.constant 12 : index
    %c0_57 = arith.constant 0 : index
    %119 = vector.load %arg3[%c12_56, %c0_57] : memref<104x128xf32, #tpu.memory_space<vmem>>, vector<1x128xf32>
    %120 = vector.broadcast %118 : vector<1x128xf32> to vector<64x128xf32>
    %121 = arith.subf %3, %120 : vector<64x128xf32>
    %cst_58 = arith.constant 0.000000e+00 : f32
    %122 = vector.broadcast %cst_58 : f32 to vector<64x128xf32>
    %123 = arith.maximumf %121, %122 : vector<64x128xf32>
    %124 = vector.broadcast %119 : vector<1x128xf32> to vector<64x128xf32>
    %125 = arith.mulf %124, %123 : vector<64x128xf32>
    %126 = arith.addf %117, %125 : vector<64x128xf32>
    %c13 = arith.constant 13 : index
    %c0_59 = arith.constant 0 : index
    %127 = vector.load %arg2[%c13, %c0_59] : memref<104x128xf32, #tpu.memory_space<vmem>>, vector<1x128xf32>
    %c13_60 = arith.constant 13 : index
    %c0_61 = arith.constant 0 : index
    %128 = vector.load %arg3[%c13_60, %c0_61] : memref<104x128xf32, #tpu.memory_space<vmem>>, vector<1x128xf32>
    %129 = vector.broadcast %127 : vector<1x128xf32> to vector<64x128xf32>
    %130 = arith.subf %3, %129 : vector<64x128xf32>
    %cst_62 = arith.constant 0.000000e+00 : f32
    %131 = vector.broadcast %cst_62 : f32 to vector<64x128xf32>
    %132 = arith.maximumf %130, %131 : vector<64x128xf32>
    %133 = vector.broadcast %128 : vector<1x128xf32> to vector<64x128xf32>
    %134 = arith.mulf %133, %132 : vector<64x128xf32>
    %135 = arith.addf %126, %134 : vector<64x128xf32>
    %c14 = arith.constant 14 : index
    %c0_63 = arith.constant 0 : index
    %136 = vector.load %arg2[%c14, %c0_63] : memref<104x128xf32, #tpu.memory_space<vmem>>, vector<1x128xf32>
    %c14_64 = arith.constant 14 : index
    %c0_65 = arith.constant 0 : index
    %137 = vector.load %arg3[%c14_64, %c0_65] : memref<104x128xf32, #tpu.memory_space<vmem>>, vector<1x128xf32>
    %138 = vector.broadcast %136 : vector<1x128xf32> to vector<64x128xf32>
    %139 = arith.subf %3, %138 : vector<64x128xf32>
    %cst_66 = arith.constant 0.000000e+00 : f32
    %140 = vector.broadcast %cst_66 : f32 to vector<64x128xf32>
    %141 = arith.maximumf %139, %140 : vector<64x128xf32>
    %142 = vector.broadcast %137 : vector<1x128xf32> to vector<64x128xf32>
    %143 = arith.mulf %142, %141 : vector<64x128xf32>
    %144 = arith.addf %135, %143 : vector<64x128xf32>
    %c15 = arith.constant 15 : index
    %c0_67 = arith.constant 0 : index
    %145 = vector.load %arg2[%c15, %c0_67] : memref<104x128xf32, #tpu.memory_space<vmem>>, vector<1x128xf32>
    %c15_68 = arith.constant 15 : index
    %c0_69 = arith.constant 0 : index
    %146 = vector.load %arg3[%c15_68, %c0_69] : memref<104x128xf32, #tpu.memory_space<vmem>>, vector<1x128xf32>
    %147 = vector.broadcast %145 : vector<1x128xf32> to vector<64x128xf32>
    %148 = arith.subf %3, %147 : vector<64x128xf32>
    %cst_70 = arith.constant 0.000000e+00 : f32
    %149 = vector.broadcast %cst_70 : f32 to vector<64x128xf32>
    %150 = arith.maximumf %148, %149 : vector<64x128xf32>
    %151 = vector.broadcast %146 : vector<1x128xf32> to vector<64x128xf32>
    %152 = arith.mulf %151, %150 : vector<64x128xf32>
    %153 = arith.addf %144, %152 : vector<64x128xf32>
    %c16 = arith.constant 16 : index
    %c0_71 = arith.constant 0 : index
    %154 = vector.load %arg2[%c16, %c0_71] : memref<104x128xf32, #tpu.memory_space<vmem>>, vector<1x128xf32>
    %c16_72 = arith.constant 16 : index
    %c0_73 = arith.constant 0 : index
    %155 = vector.load %arg3[%c16_72, %c0_73] : memref<104x128xf32, #tpu.memory_space<vmem>>, vector<1x128xf32>
    %156 = vector.broadcast %154 : vector<1x128xf32> to vector<64x128xf32>
    %157 = arith.subf %3, %156 : vector<64x128xf32>
    %cst_74 = arith.constant 0.000000e+00 : f32
    %158 = vector.broadcast %cst_74 : f32 to vector<64x128xf32>
    %159 = arith.maximumf %157, %158 : vector<64x128xf32>
    %160 = vector.broadcast %155 : vector<1x128xf32> to vector<64x128xf32>
    %161 = arith.mulf %160, %159 : vector<64x128xf32>
    %162 = arith.addf %153, %161 : vector<64x128xf32>
    %c17 = arith.constant 17 : index
    %c0_75 = arith.constant 0 : index
    %163 = vector.load %arg2[%c17, %c0_75] : memref<104x128xf32, #tpu.memory_space<vmem>>, vector<1x128xf32>
    %c17_76 = arith.constant 17 : index
    %c0_77 = arith.constant 0 : index
    %164 = vector.load %arg3[%c17_76, %c0_77] : memref<104x128xf32, #tpu.memory_space<vmem>>, vector<1x128xf32>
    %165 = vector.broadcast %163 : vector<1x128xf32> to vector<64x128xf32>
    %166 = arith.subf %3, %165 : vector<64x128xf32>
    %cst_78 = arith.constant 0.000000e+00 : f32
    %167 = vector.broadcast %cst_78 : f32 to vector<64x128xf32>
    %168 = arith.maximumf %166, %167 : vector<64x128xf32>
    %169 = vector.broadcast %164 : vector<1x128xf32> to vector<64x128xf32>
    %170 = arith.mulf %169, %168 : vector<64x128xf32>
    %171 = arith.addf %162, %170 : vector<64x128xf32>
    %c18 = arith.constant 18 : index
    %c0_79 = arith.constant 0 : index
    %172 = vector.load %arg2[%c18, %c0_79] : memref<104x128xf32, #tpu.memory_space<vmem>>, vector<1x128xf32>
    %c18_80 = arith.constant 18 : index
    %c0_81 = arith.constant 0 : index
    %173 = vector.load %arg3[%c18_80, %c0_81] : memref<104x128xf32, #tpu.memory_space<vmem>>, vector<1x128xf32>
    %174 = vector.broadcast %172 : vector<1x128xf32> to vector<64x128xf32>
    %175 = arith.subf %3, %174 : vector<64x128xf32>
    %cst_82 = arith.constant 0.000000e+00 : f32
    %176 = vector.broadcast %cst_82 : f32 to vector<64x128xf32>
    %177 = arith.maximumf %175, %176 : vector<64x128xf32>
    %178 = vector.broadcast %173 : vector<1x128xf32> to vector<64x128xf32>
    %179 = arith.mulf %178, %177 : vector<64x128xf32>
    %180 = arith.addf %171, %179 : vector<64x128xf32>
    %c19 = arith.constant 19 : index
    %c0_83 = arith.constant 0 : index
    %181 = vector.load %arg2[%c19, %c0_83] : memref<104x128xf32, #tpu.memory_space<vmem>>, vector<1x128xf32>
    %c19_84 = arith.constant 19 : index
    %c0_85 = arith.constant 0 : index
    %182 = vector.load %arg3[%c19_84, %c0_85] : memref<104x128xf32, #tpu.memory_space<vmem>>, vector<1x128xf32>
    %183 = vector.broadcast %181 : vector<1x128xf32> to vector<64x128xf32>
    %184 = arith.subf %3, %183 : vector<64x128xf32>
    %cst_86 = arith.constant 0.000000e+00 : f32
    %185 = vector.broadcast %cst_86 : f32 to vector<64x128xf32>
    %186 = arith.maximumf %184, %185 : vector<64x128xf32>
    %187 = vector.broadcast %182 : vector<1x128xf32> to vector<64x128xf32>
    %188 = arith.mulf %187, %186 : vector<64x128xf32>
    %189 = arith.addf %180, %188 : vector<64x128xf32>
    %c20 = arith.constant 20 : index
    %c0_87 = arith.constant 0 : index
    %190 = vector.load %arg2[%c20, %c0_87] : memref<104x128xf32, #tpu.memory_space<vmem>>, vector<1x128xf32>
    %c20_88 = arith.constant 20 : index
    %c0_89 = arith.constant 0 : index
    %191 = vector.load %arg3[%c20_88, %c0_89] : memref<104x128xf32, #tpu.memory_space<vmem>>, vector<1x128xf32>
    %192 = vector.broadcast %190 : vector<1x128xf32> to vector<64x128xf32>
    %193 = arith.subf %3, %192 : vector<64x128xf32>
    %cst_90 = arith.constant 0.000000e+00 : f32
    %194 = vector.broadcast %cst_90 : f32 to vector<64x128xf32>
    %195 = arith.maximumf %193, %194 : vector<64x128xf32>
    %196 = vector.broadcast %191 : vector<1x128xf32> to vector<64x128xf32>
    %197 = arith.mulf %196, %195 : vector<64x128xf32>
    %198 = arith.addf %189, %197 : vector<64x128xf32>
    %c21 = arith.constant 21 : index
    %c0_91 = arith.constant 0 : index
    %199 = vector.load %arg2[%c21, %c0_91] : memref<104x128xf32, #tpu.memory_space<vmem>>, vector<1x128xf32>
    %c21_92 = arith.constant 21 : index
    %c0_93 = arith.constant 0 : index
    %200 = vector.load %arg3[%c21_92, %c0_93] : memref<104x128xf32, #tpu.memory_space<vmem>>, vector<1x128xf32>
    %201 = vector.broadcast %199 : vector<1x128xf32> to vector<64x128xf32>
    %202 = arith.subf %3, %201 : vector<64x128xf32>
    %cst_94 = arith.constant 0.000000e+00 : f32
    %203 = vector.broadcast %cst_94 : f32 to vector<64x128xf32>
    %204 = arith.maximumf %202, %203 : vector<64x128xf32>
    %205 = vector.broadcast %200 : vector<1x128xf32> to vector<64x128xf32>
    %206 = arith.mulf %205, %204 : vector<64x128xf32>
    %207 = arith.addf %198, %206 : vector<64x128xf32>
    %c22 = arith.constant 22 : index
    %c0_95 = arith.constant 0 : index
    %208 = vector.load %arg2[%c22, %c0_95] : memref<104x128xf32, #tpu.memory_space<vmem>>, vector<1x128xf32>
    %c22_96 = arith.constant 22 : index
    %c0_97 = arith.constant 0 : index
    %209 = vector.load %arg3[%c22_96, %c0_97] : memref<104x128xf32, #tpu.memory_space<vmem>>, vector<1x128xf32>
    %210 = vector.broadcast %208 : vector<1x128xf32> to vector<64x128xf32>
    %211 = arith.subf %3, %210 : vector<64x128xf32>
    %cst_98 = arith.constant 0.000000e+00 : f32
    %212 = vector.broadcast %cst_98 : f32 to vector<64x128xf32>
    %213 = arith.maximumf %211, %212 : vector<64x128xf32>
    %214 = vector.broadcast %209 : vector<1x128xf32> to vector<64x128xf32>
    %215 = arith.mulf %214, %213 : vector<64x128xf32>
    %216 = arith.addf %207, %215 : vector<64x128xf32>
    %c23 = arith.constant 23 : index
    %c0_99 = arith.constant 0 : index
    %217 = vector.load %arg2[%c23, %c0_99] : memref<104x128xf32, #tpu.memory_space<vmem>>, vector<1x128xf32>
    %c23_100 = arith.constant 23 : index
    %c0_101 = arith.constant 0 : index
    %218 = vector.load %arg3[%c23_100, %c0_101] : memref<104x128xf32, #tpu.memory_space<vmem>>, vector<1x128xf32>
    %219 = vector.broadcast %217 : vector<1x128xf32> to vector<64x128xf32>
    %220 = arith.subf %3, %219 : vector<64x128xf32>
    %cst_102 = arith.constant 0.000000e+00 : f32
    %221 = vector.broadcast %cst_102 : f32 to vector<64x128xf32>
    %222 = arith.maximumf %220, %221 : vector<64x128xf32>
    %223 = vector.broadcast %218 : vector<1x128xf32> to vector<64x128xf32>
    %224 = arith.mulf %223, %222 : vector<64x128xf32>
    %225 = arith.addf %216, %224 : vector<64x128xf32>
    %c24 = arith.constant 24 : index
    %c0_103 = arith.constant 0 : index
    %226 = vector.load %arg2[%c24, %c0_103] : memref<104x128xf32, #tpu.memory_space<vmem>>, vector<1x128xf32>
    %c24_104 = arith.constant 24 : index
    %c0_105 = arith.constant 0 : index
    %227 = vector.load %arg3[%c24_104, %c0_105] : memref<104x128xf32, #tpu.memory_space<vmem>>, vector<1x128xf32>
    %228 = vector.broadcast %226 : vector<1x128xf32> to vector<64x128xf32>
    %229 = arith.subf %3, %228 : vector<64x128xf32>
    %cst_106 = arith.constant 0.000000e+00 : f32
    %230 = vector.broadcast %cst_106 : f32 to vector<64x128xf32>
    %231 = arith.maximumf %229, %230 : vector<64x128xf32>
    %232 = vector.broadcast %227 : vector<1x128xf32> to vector<64x128xf32>
    %233 = arith.mulf %232, %231 : vector<64x128xf32>
    %234 = arith.addf %225, %233 : vector<64x128xf32>
    %c25 = arith.constant 25 : index
    %c0_107 = arith.constant 0 : index
    %235 = vector.load %arg2[%c25, %c0_107] : memref<104x128xf32, #tpu.memory_space<vmem>>, vector<1x128xf32>
    %c25_108 = arith.constant 25 : index
    %c0_109 = arith.constant 0 : index
    %236 = vector.load %arg3[%c25_108, %c0_109] : memref<104x128xf32, #tpu.memory_space<vmem>>, vector<1x128xf32>
    %237 = vector.broadcast %235 : vector<1x128xf32> to vector<64x128xf32>
    %238 = arith.subf %3, %237 : vector<64x128xf32>
    %cst_110 = arith.constant 0.000000e+00 : f32
    %239 = vector.broadcast %cst_110 : f32 to vector<64x128xf32>
    %240 = arith.maximumf %238, %239 : vector<64x128xf32>
    %241 = vector.broadcast %236 : vector<1x128xf32> to vector<64x128xf32>
    %242 = arith.mulf %241, %240 : vector<64x128xf32>
    %243 = arith.addf %234, %242 : vector<64x128xf32>
    %c26 = arith.constant 26 : index
    %c0_111 = arith.constant 0 : index
    %244 = vector.load %arg2[%c26, %c0_111] : memref<104x128xf32, #tpu.memory_space<vmem>>, vector<1x128xf32>
    %c26_112 = arith.constant 26 : index
    %c0_113 = arith.constant 0 : index
    %245 = vector.load %arg3[%c26_112, %c0_113] : memref<104x128xf32, #tpu.memory_space<vmem>>, vector<1x128xf32>
    %246 = vector.broadcast %244 : vector<1x128xf32> to vector<64x128xf32>
    %247 = arith.subf %3, %246 : vector<64x128xf32>
    %cst_114 = arith.constant 0.000000e+00 : f32
    %248 = vector.broadcast %cst_114 : f32 to vector<64x128xf32>
    %249 = arith.maximumf %247, %248 : vector<64x128xf32>
    %250 = vector.broadcast %245 : vector<1x128xf32> to vector<64x128xf32>
    %251 = arith.mulf %250, %249 : vector<64x128xf32>
    %252 = arith.addf %243, %251 : vector<64x128xf32>
    %c27 = arith.constant 27 : index
    %c0_115 = arith.constant 0 : index
    %253 = vector.load %arg2[%c27, %c0_115] : memref<104x128xf32, #tpu.memory_space<vmem>>, vector<1x128xf32>
    %c27_116 = arith.constant 27 : index
    %c0_117 = arith.constant 0 : index
    %254 = vector.load %arg3[%c27_116, %c0_117] : memref<104x128xf32, #tpu.memory_space<vmem>>, vector<1x128xf32>
    %255 = vector.broadcast %253 : vector<1x128xf32> to vector<64x128xf32>
    %256 = arith.subf %3, %255 : vector<64x128xf32>
    %cst_118 = arith.constant 0.000000e+00 : f32
    %257 = vector.broadcast %cst_118 : f32 to vector<64x128xf32>
    %258 = arith.maximumf %256, %257 : vector<64x128xf32>
    %259 = vector.broadcast %254 : vector<1x128xf32> to vector<64x128xf32>
    %260 = arith.mulf %259, %258 : vector<64x128xf32>
    %261 = arith.addf %252, %260 : vector<64x128xf32>
    %c28 = arith.constant 28 : index
    %c0_119 = arith.constant 0 : index
    %262 = vector.load %arg2[%c28, %c0_119] : memref<104x128xf32, #tpu.memory_space<vmem>>, vector<1x128xf32>
    %c28_120 = arith.constant 28 : index
    %c0_121 = arith.constant 0 : index
    %263 = vector.load %arg3[%c28_120, %c0_121] : memref<104x128xf32, #tpu.memory_space<vmem>>, vector<1x128xf32>
    %264 = vector.broadcast %262 : vector<1x128xf32> to vector<64x128xf32>
    %265 = arith.subf %3, %264 : vector<64x128xf32>
    %cst_122 = arith.constant 0.000000e+00 : f32
    %266 = vector.broadcast %cst_122 : f32 to vector<64x128xf32>
    %267 = arith.maximumf %265, %266 : vector<64x128xf32>
    %268 = vector.broadcast %263 : vector<1x128xf32> to vector<64x128xf32>
    %269 = arith.mulf %268, %267 : vector<64x128xf32>
    %270 = arith.addf %261, %269 : vector<64x128xf32>
    %c29 = arith.constant 29 : index
    %c0_123 = arith.constant 0 : index
    %271 = vector.load %arg2[%c29, %c0_123] : memref<104x128xf32, #tpu.memory_space<vmem>>, vector<1x128xf32>
    %c29_124 = arith.constant 29 : index
    %c0_125 = arith.constant 0 : index
    %272 = vector.load %arg3[%c29_124, %c0_125] : memref<104x128xf32, #tpu.memory_space<vmem>>, vector<1x128xf32>
    %273 = vector.broadcast %271 : vector<1x128xf32> to vector<64x128xf32>
    %274 = arith.subf %3, %273 : vector<64x128xf32>
    %cst_126 = arith.constant 0.000000e+00 : f32
    %275 = vector.broadcast %cst_126 : f32 to vector<64x128xf32>
    %276 = arith.maximumf %274, %275 : vector<64x128xf32>
    %277 = vector.broadcast %272 : vector<1x128xf32> to vector<64x128xf32>
    %278 = arith.mulf %277, %276 : vector<64x128xf32>
    %279 = arith.addf %270, %278 : vector<64x128xf32>
    %c30 = arith.constant 30 : index
    %c0_127 = arith.constant 0 : index
    %280 = vector.load %arg2[%c30, %c0_127] : memref<104x128xf32, #tpu.memory_space<vmem>>, vector<1x128xf32>
    %c30_128 = arith.constant 30 : index
    %c0_129 = arith.constant 0 : index
    %281 = vector.load %arg3[%c30_128, %c0_129] : memref<104x128xf32, #tpu.memory_space<vmem>>, vector<1x128xf32>
    %282 = vector.broadcast %280 : vector<1x128xf32> to vector<64x128xf32>
    %283 = arith.subf %3, %282 : vector<64x128xf32>
    %cst_130 = arith.constant 0.000000e+00 : f32
    %284 = vector.broadcast %cst_130 : f32 to vector<64x128xf32>
    %285 = arith.maximumf %283, %284 : vector<64x128xf32>
    %286 = vector.broadcast %281 : vector<1x128xf32> to vector<64x128xf32>
    %287 = arith.mulf %286, %285 : vector<64x128xf32>
    %288 = arith.addf %279, %287 : vector<64x128xf32>
    %c31 = arith.constant 31 : index
    %c0_131 = arith.constant 0 : index
    %289 = vector.load %arg2[%c31, %c0_131] : memref<104x128xf32, #tpu.memory_space<vmem>>, vector<1x128xf32>
    %c31_132 = arith.constant 31 : index
    %c0_133 = arith.constant 0 : index
    %290 = vector.load %arg3[%c31_132, %c0_133] : memref<104x128xf32, #tpu.memory_space<vmem>>, vector<1x128xf32>
    %291 = vector.broadcast %289 : vector<1x128xf32> to vector<64x128xf32>
    %292 = arith.subf %3, %291 : vector<64x128xf32>
    %cst_134 = arith.constant 0.000000e+00 : f32
    %293 = vector.broadcast %cst_134 : f32 to vector<64x128xf32>
    %294 = arith.maximumf %292, %293 : vector<64x128xf32>
    %295 = vector.broadcast %290 : vector<1x128xf32> to vector<64x128xf32>
    %296 = arith.mulf %295, %294 : vector<64x128xf32>
    %297 = arith.addf %288, %296 : vector<64x128xf32>
    %c32 = arith.constant 32 : index
    %c0_135 = arith.constant 0 : index
    %298 = vector.load %arg2[%c32, %c0_135] : memref<104x128xf32, #tpu.memory_space<vmem>>, vector<1x128xf32>
    %c32_136 = arith.constant 32 : index
    %c0_137 = arith.constant 0 : index
    %299 = vector.load %arg3[%c32_136, %c0_137] : memref<104x128xf32, #tpu.memory_space<vmem>>, vector<1x128xf32>
    %300 = vector.broadcast %298 : vector<1x128xf32> to vector<64x128xf32>
    %301 = arith.subf %3, %300 : vector<64x128xf32>
    %cst_138 = arith.constant 0.000000e+00 : f32
    %302 = vector.broadcast %cst_138 : f32 to vector<64x128xf32>
    %303 = arith.maximumf %301, %302 : vector<64x128xf32>
    %304 = vector.broadcast %299 : vector<1x128xf32> to vector<64x128xf32>
    %305 = arith.mulf %304, %303 : vector<64x128xf32>
    %306 = arith.addf %297, %305 : vector<64x128xf32>
    %c33 = arith.constant 33 : index
    %c0_139 = arith.constant 0 : index
    %307 = vector.load %arg2[%c33, %c0_139] : memref<104x128xf32, #tpu.memory_space<vmem>>, vector<1x128xf32>
    %c33_140 = arith.constant 33 : index
    %c0_141 = arith.constant 0 : index
    %308 = vector.load %arg3[%c33_140, %c0_141] : memref<104x128xf32, #tpu.memory_space<vmem>>, vector<1x128xf32>
    %309 = vector.broadcast %307 : vector<1x128xf32> to vector<64x128xf32>
    %310 = arith.subf %3, %309 : vector<64x128xf32>
    %cst_142 = arith.constant 0.000000e+00 : f32
    %311 = vector.broadcast %cst_142 : f32 to vector<64x128xf32>
    %312 = arith.maximumf %310, %311 : vector<64x128xf32>
    %313 = vector.broadcast %308 : vector<1x128xf32> to vector<64x128xf32>
    %314 = arith.mulf %313, %312 : vector<64x128xf32>
    %315 = arith.addf %306, %314 : vector<64x128xf32>
    %c34 = arith.constant 34 : index
    %c0_143 = arith.constant 0 : index
    %316 = vector.load %arg2[%c34, %c0_143] : memref<104x128xf32, #tpu.memory_space<vmem>>, vector<1x128xf32>
    %c34_144 = arith.constant 34 : index
    %c0_145 = arith.constant 0 : index
    %317 = vector.load %arg3[%c34_144, %c0_145] : memref<104x128xf32, #tpu.memory_space<vmem>>, vector<1x128xf32>
    %318 = vector.broadcast %316 : vector<1x128xf32> to vector<64x128xf32>
    %319 = arith.subf %3, %318 : vector<64x128xf32>
    %cst_146 = arith.constant 0.000000e+00 : f32
    %320 = vector.broadcast %cst_146 : f32 to vector<64x128xf32>
    %321 = arith.maximumf %319, %320 : vector<64x128xf32>
    %322 = vector.broadcast %317 : vector<1x128xf32> to vector<64x128xf32>
    %323 = arith.mulf %322, %321 : vector<64x128xf32>
    %324 = arith.addf %315, %323 : vector<64x128xf32>
    %c35 = arith.constant 35 : index
    %c0_147 = arith.constant 0 : index
    %325 = vector.load %arg2[%c35, %c0_147] : memref<104x128xf32, #tpu.memory_space<vmem>>, vector<1x128xf32>
    %c35_148 = arith.constant 35 : index
    %c0_149 = arith.constant 0 : index
    %326 = vector.load %arg3[%c35_148, %c0_149] : memref<104x128xf32, #tpu.memory_space<vmem>>, vector<1x128xf32>
    %327 = vector.broadcast %325 : vector<1x128xf32> to vector<64x128xf32>
    %328 = arith.subf %3, %327 : vector<64x128xf32>
    %cst_150 = arith.constant 0.000000e+00 : f32
    %329 = vector.broadcast %cst_150 : f32 to vector<64x128xf32>
    %330 = arith.maximumf %328, %329 : vector<64x128xf32>
    %331 = vector.broadcast %326 : vector<1x128xf32> to vector<64x128xf32>
    %332 = arith.mulf %331, %330 : vector<64x128xf32>
    %333 = arith.addf %324, %332 : vector<64x128xf32>
    %c36 = arith.constant 36 : index
    %c0_151 = arith.constant 0 : index
    %334 = vector.load %arg2[%c36, %c0_151] : memref<104x128xf32, #tpu.memory_space<vmem>>, vector<1x128xf32>
    %c36_152 = arith.constant 36 : index
    %c0_153 = arith.constant 0 : index
    %335 = vector.load %arg3[%c36_152, %c0_153] : memref<104x128xf32, #tpu.memory_space<vmem>>, vector<1x128xf32>
    %336 = vector.broadcast %334 : vector<1x128xf32> to vector<64x128xf32>
    %337 = arith.subf %3, %336 : vector<64x128xf32>
    %cst_154 = arith.constant 0.000000e+00 : f32
    %338 = vector.broadcast %cst_154 : f32 to vector<64x128xf32>
    %339 = arith.maximumf %337, %338 : vector<64x128xf32>
    %340 = vector.broadcast %335 : vector<1x128xf32> to vector<64x128xf32>
    %341 = arith.mulf %340, %339 : vector<64x128xf32>
    %342 = arith.addf %333, %341 : vector<64x128xf32>
    %c37 = arith.constant 37 : index
    %c0_155 = arith.constant 0 : index
    %343 = vector.load %arg2[%c37, %c0_155] : memref<104x128xf32, #tpu.memory_space<vmem>>, vector<1x128xf32>
    %c37_156 = arith.constant 37 : index
    %c0_157 = arith.constant 0 : index
    %344 = vector.load %arg3[%c37_156, %c0_157] : memref<104x128xf32, #tpu.memory_space<vmem>>, vector<1x128xf32>
    %345 = vector.broadcast %343 : vector<1x128xf32> to vector<64x128xf32>
    %346 = arith.subf %3, %345 : vector<64x128xf32>
    %cst_158 = arith.constant 0.000000e+00 : f32
    %347 = vector.broadcast %cst_158 : f32 to vector<64x128xf32>
    %348 = arith.maximumf %346, %347 : vector<64x128xf32>
    %349 = vector.broadcast %344 : vector<1x128xf32> to vector<64x128xf32>
    %350 = arith.mulf %349, %348 : vector<64x128xf32>
    %351 = arith.addf %342, %350 : vector<64x128xf32>
    %c38 = arith.constant 38 : index
    %c0_159 = arith.constant 0 : index
    %352 = vector.load %arg2[%c38, %c0_159] : memref<104x128xf32, #tpu.memory_space<vmem>>, vector<1x128xf32>
    %c38_160 = arith.constant 38 : index
    %c0_161 = arith.constant 0 : index
    %353 = vector.load %arg3[%c38_160, %c0_161] : memref<104x128xf32, #tpu.memory_space<vmem>>, vector<1x128xf32>
    %354 = vector.broadcast %352 : vector<1x128xf32> to vector<64x128xf32>
    %355 = arith.subf %3, %354 : vector<64x128xf32>
    %cst_162 = arith.constant 0.000000e+00 : f32
    %356 = vector.broadcast %cst_162 : f32 to vector<64x128xf32>
    %357 = arith.maximumf %355, %356 : vector<64x128xf32>
    %358 = vector.broadcast %353 : vector<1x128xf32> to vector<64x128xf32>
    %359 = arith.mulf %358, %357 : vector<64x128xf32>
    %360 = arith.addf %351, %359 : vector<64x128xf32>
    %c39 = arith.constant 39 : index
    %c0_163 = arith.constant 0 : index
    %361 = vector.load %arg2[%c39, %c0_163] : memref<104x128xf32, #tpu.memory_space<vmem>>, vector<1x128xf32>
    %c39_164 = arith.constant 39 : index
    %c0_165 = arith.constant 0 : index
    %362 = vector.load %arg3[%c39_164, %c0_165] : memref<104x128xf32, #tpu.memory_space<vmem>>, vector<1x128xf32>
    %363 = vector.broadcast %361 : vector<1x128xf32> to vector<64x128xf32>
    %364 = arith.subf %3, %363 : vector<64x128xf32>
    %cst_166 = arith.constant 0.000000e+00 : f32
    %365 = vector.broadcast %cst_166 : f32 to vector<64x128xf32>
    %366 = arith.maximumf %364, %365 : vector<64x128xf32>
    %367 = vector.broadcast %362 : vector<1x128xf32> to vector<64x128xf32>
    %368 = arith.mulf %367, %366 : vector<64x128xf32>
    %369 = arith.addf %360, %368 : vector<64x128xf32>
    %c40 = arith.constant 40 : index
    %c0_167 = arith.constant 0 : index
    %370 = vector.load %arg2[%c40, %c0_167] : memref<104x128xf32, #tpu.memory_space<vmem>>, vector<1x128xf32>
    %c40_168 = arith.constant 40 : index
    %c0_169 = arith.constant 0 : index
    %371 = vector.load %arg3[%c40_168, %c0_169] : memref<104x128xf32, #tpu.memory_space<vmem>>, vector<1x128xf32>
    %372 = vector.broadcast %370 : vector<1x128xf32> to vector<64x128xf32>
    %373 = arith.subf %3, %372 : vector<64x128xf32>
    %cst_170 = arith.constant 0.000000e+00 : f32
    %374 = vector.broadcast %cst_170 : f32 to vector<64x128xf32>
    %375 = arith.maximumf %373, %374 : vector<64x128xf32>
    %376 = vector.broadcast %371 : vector<1x128xf32> to vector<64x128xf32>
    %377 = arith.mulf %376, %375 : vector<64x128xf32>
    %378 = arith.addf %369, %377 : vector<64x128xf32>
    %c41 = arith.constant 41 : index
    %c0_171 = arith.constant 0 : index
    %379 = vector.load %arg2[%c41, %c0_171] : memref<104x128xf32, #tpu.memory_space<vmem>>, vector<1x128xf32>
    %c41_172 = arith.constant 41 : index
    %c0_173 = arith.constant 0 : index
    %380 = vector.load %arg3[%c41_172, %c0_173] : memref<104x128xf32, #tpu.memory_space<vmem>>, vector<1x128xf32>
    %381 = vector.broadcast %379 : vector<1x128xf32> to vector<64x128xf32>
    %382 = arith.subf %3, %381 : vector<64x128xf32>
    %cst_174 = arith.constant 0.000000e+00 : f32
    %383 = vector.broadcast %cst_174 : f32 to vector<64x128xf32>
    %384 = arith.maximumf %382, %383 : vector<64x128xf32>
    %385 = vector.broadcast %380 : vector<1x128xf32> to vector<64x128xf32>
    %386 = arith.mulf %385, %384 : vector<64x128xf32>
    %387 = arith.addf %378, %386 : vector<64x128xf32>
    %c42 = arith.constant 42 : index
    %c0_175 = arith.constant 0 : index
    %388 = vector.load %arg2[%c42, %c0_175] : memref<104x128xf32, #tpu.memory_space<vmem>>, vector<1x128xf32>
    %c42_176 = arith.constant 42 : index
    %c0_177 = arith.constant 0 : index
    %389 = vector.load %arg3[%c42_176, %c0_177] : memref<104x128xf32, #tpu.memory_space<vmem>>, vector<1x128xf32>
    %390 = vector.broadcast %388 : vector<1x128xf32> to vector<64x128xf32>
    %391 = arith.subf %3, %390 : vector<64x128xf32>
    %cst_178 = arith.constant 0.000000e+00 : f32
    %392 = vector.broadcast %cst_178 : f32 to vector<64x128xf32>
    %393 = arith.maximumf %391, %392 : vector<64x128xf32>
    %394 = vector.broadcast %389 : vector<1x128xf32> to vector<64x128xf32>
    %395 = arith.mulf %394, %393 : vector<64x128xf32>
    %396 = arith.addf %387, %395 : vector<64x128xf32>
    %c43 = arith.constant 43 : index
    %c0_179 = arith.constant 0 : index
    %397 = vector.load %arg2[%c43, %c0_179] : memref<104x128xf32, #tpu.memory_space<vmem>>, vector<1x128xf32>
    %c43_180 = arith.constant 43 : index
    %c0_181 = arith.constant 0 : index
    %398 = vector.load %arg3[%c43_180, %c0_181] : memref<104x128xf32, #tpu.memory_space<vmem>>, vector<1x128xf32>
    %399 = vector.broadcast %397 : vector<1x128xf32> to vector<64x128xf32>
    %400 = arith.subf %3, %399 : vector<64x128xf32>
    %cst_182 = arith.constant 0.000000e+00 : f32
    %401 = vector.broadcast %cst_182 : f32 to vector<64x128xf32>
    %402 = arith.maximumf %400, %401 : vector<64x128xf32>
    %403 = vector.broadcast %398 : vector<1x128xf32> to vector<64x128xf32>
    %404 = arith.mulf %403, %402 : vector<64x128xf32>
    %405 = arith.addf %396, %404 : vector<64x128xf32>
    %c44 = arith.constant 44 : index
    %c0_183 = arith.constant 0 : index
    %406 = vector.load %arg2[%c44, %c0_183] : memref<104x128xf32, #tpu.memory_space<vmem>>, vector<1x128xf32>
    %c44_184 = arith.constant 44 : index
    %c0_185 = arith.constant 0 : index
    %407 = vector.load %arg3[%c44_184, %c0_185] : memref<104x128xf32, #tpu.memory_space<vmem>>, vector<1x128xf32>
    %408 = vector.broadcast %406 : vector<1x128xf32> to vector<64x128xf32>
    %409 = arith.subf %3, %408 : vector<64x128xf32>
    %cst_186 = arith.constant 0.000000e+00 : f32
    %410 = vector.broadcast %cst_186 : f32 to vector<64x128xf32>
    %411 = arith.maximumf %409, %410 : vector<64x128xf32>
    %412 = vector.broadcast %407 : vector<1x128xf32> to vector<64x128xf32>
    %413 = arith.mulf %412, %411 : vector<64x128xf32>
    %414 = arith.addf %405, %413 : vector<64x128xf32>
    %c45 = arith.constant 45 : index
    %c0_187 = arith.constant 0 : index
    %415 = vector.load %arg2[%c45, %c0_187] : memref<104x128xf32, #tpu.memory_space<vmem>>, vector<1x128xf32>
    %c45_188 = arith.constant 45 : index
    %c0_189 = arith.constant 0 : index
    %416 = vector.load %arg3[%c45_188, %c0_189] : memref<104x128xf32, #tpu.memory_space<vmem>>, vector<1x128xf32>
    %417 = vector.broadcast %415 : vector<1x128xf32> to vector<64x128xf32>
    %418 = arith.subf %3, %417 : vector<64x128xf32>
    %cst_190 = arith.constant 0.000000e+00 : f32
    %419 = vector.broadcast %cst_190 : f32 to vector<64x128xf32>
    %420 = arith.maximumf %418, %419 : vector<64x128xf32>
    %421 = vector.broadcast %416 : vector<1x128xf32> to vector<64x128xf32>
    %422 = arith.mulf %421, %420 : vector<64x128xf32>
    %423 = arith.addf %414, %422 : vector<64x128xf32>
    %c46 = arith.constant 46 : index
    %c0_191 = arith.constant 0 : index
    %424 = vector.load %arg2[%c46, %c0_191] : memref<104x128xf32, #tpu.memory_space<vmem>>, vector<1x128xf32>
    %c46_192 = arith.constant 46 : index
    %c0_193 = arith.constant 0 : index
    %425 = vector.load %arg3[%c46_192, %c0_193] : memref<104x128xf32, #tpu.memory_space<vmem>>, vector<1x128xf32>
    %426 = vector.broadcast %424 : vector<1x128xf32> to vector<64x128xf32>
    %427 = arith.subf %3, %426 : vector<64x128xf32>
    %cst_194 = arith.constant 0.000000e+00 : f32
    %428 = vector.broadcast %cst_194 : f32 to vector<64x128xf32>
    %429 = arith.maximumf %427, %428 : vector<64x128xf32>
    %430 = vector.broadcast %425 : vector<1x128xf32> to vector<64x128xf32>
    %431 = arith.mulf %430, %429 : vector<64x128xf32>
    %432 = arith.addf %423, %431 : vector<64x128xf32>
    %c47 = arith.constant 47 : index
    %c0_195 = arith.constant 0 : index
    %433 = vector.load %arg2[%c47, %c0_195] : memref<104x128xf32, #tpu.memory_space<vmem>>, vector<1x128xf32>
    %c47_196 = arith.constant 47 : index
    %c0_197 = arith.constant 0 : index
    %434 = vector.load %arg3[%c47_196, %c0_197] : memref<104x128xf32, #tpu.memory_space<vmem>>, vector<1x128xf32>
    %435 = vector.broadcast %433 : vector<1x128xf32> to vector<64x128xf32>
    %436 = arith.subf %3, %435 : vector<64x128xf32>
    %cst_198 = arith.constant 0.000000e+00 : f32
    %437 = vector.broadcast %cst_198 : f32 to vector<64x128xf32>
    %438 = arith.maximumf %436, %437 : vector<64x128xf32>
    %439 = vector.broadcast %434 : vector<1x128xf32> to vector<64x128xf32>
    %440 = arith.mulf %439, %438 : vector<64x128xf32>
    %441 = arith.addf %432, %440 : vector<64x128xf32>
    %c48 = arith.constant 48 : index
    %c0_199 = arith.constant 0 : index
    %442 = vector.load %arg2[%c48, %c0_199] : memref<104x128xf32, #tpu.memory_space<vmem>>, vector<1x128xf32>
    %c48_200 = arith.constant 48 : index
    %c0_201 = arith.constant 0 : index
    %443 = vector.load %arg3[%c48_200, %c0_201] : memref<104x128xf32, #tpu.memory_space<vmem>>, vector<1x128xf32>
    %444 = vector.broadcast %442 : vector<1x128xf32> to vector<64x128xf32>
    %445 = arith.subf %3, %444 : vector<64x128xf32>
    %cst_202 = arith.constant 0.000000e+00 : f32
    %446 = vector.broadcast %cst_202 : f32 to vector<64x128xf32>
    %447 = arith.maximumf %445, %446 : vector<64x128xf32>
    %448 = vector.broadcast %443 : vector<1x128xf32> to vector<64x128xf32>
    %449 = arith.mulf %448, %447 : vector<64x128xf32>
    %450 = arith.addf %441, %449 : vector<64x128xf32>
    %c49 = arith.constant 49 : index
    %c0_203 = arith.constant 0 : index
    %451 = vector.load %arg2[%c49, %c0_203] : memref<104x128xf32, #tpu.memory_space<vmem>>, vector<1x128xf32>
    %c49_204 = arith.constant 49 : index
    %c0_205 = arith.constant 0 : index
    %452 = vector.load %arg3[%c49_204, %c0_205] : memref<104x128xf32, #tpu.memory_space<vmem>>, vector<1x128xf32>
    %453 = vector.broadcast %451 : vector<1x128xf32> to vector<64x128xf32>
    %454 = arith.subf %3, %453 : vector<64x128xf32>
    %cst_206 = arith.constant 0.000000e+00 : f32
    %455 = vector.broadcast %cst_206 : f32 to vector<64x128xf32>
    %456 = arith.maximumf %454, %455 : vector<64x128xf32>
    %457 = vector.broadcast %452 : vector<1x128xf32> to vector<64x128xf32>
    %458 = arith.mulf %457, %456 : vector<64x128xf32>
    %459 = arith.addf %450, %458 : vector<64x128xf32>
    %c50 = arith.constant 50 : index
    %c0_207 = arith.constant 0 : index
    %460 = vector.load %arg2[%c50, %c0_207] : memref<104x128xf32, #tpu.memory_space<vmem>>, vector<1x128xf32>
    %c50_208 = arith.constant 50 : index
    %c0_209 = arith.constant 0 : index
    %461 = vector.load %arg3[%c50_208, %c0_209] : memref<104x128xf32, #tpu.memory_space<vmem>>, vector<1x128xf32>
    %462 = vector.broadcast %460 : vector<1x128xf32> to vector<64x128xf32>
    %463 = arith.subf %3, %462 : vector<64x128xf32>
    %cst_210 = arith.constant 0.000000e+00 : f32
    %464 = vector.broadcast %cst_210 : f32 to vector<64x128xf32>
    %465 = arith.maximumf %463, %464 : vector<64x128xf32>
    %466 = vector.broadcast %461 : vector<1x128xf32> to vector<64x128xf32>
    %467 = arith.mulf %466, %465 : vector<64x128xf32>
    %468 = arith.addf %459, %467 : vector<64x128xf32>
    %c51 = arith.constant 51 : index
    %c0_211 = arith.constant 0 : index
    %469 = vector.load %arg2[%c51, %c0_211] : memref<104x128xf32, #tpu.memory_space<vmem>>, vector<1x128xf32>
    %c51_212 = arith.constant 51 : index
    %c0_213 = arith.constant 0 : index
    %470 = vector.load %arg3[%c51_212, %c0_213] : memref<104x128xf32, #tpu.memory_space<vmem>>, vector<1x128xf32>
    %471 = vector.broadcast %469 : vector<1x128xf32> to vector<64x128xf32>
    %472 = arith.subf %3, %471 : vector<64x128xf32>
    %cst_214 = arith.constant 0.000000e+00 : f32
    %473 = vector.broadcast %cst_214 : f32 to vector<64x128xf32>
    %474 = arith.maximumf %472, %473 : vector<64x128xf32>
    %475 = vector.broadcast %470 : vector<1x128xf32> to vector<64x128xf32>
    %476 = arith.mulf %475, %474 : vector<64x128xf32>
    %477 = arith.addf %468, %476 : vector<64x128xf32>
    %c52 = arith.constant 52 : index
    %c0_215 = arith.constant 0 : index
    %478 = vector.load %arg2[%c52, %c0_215] : memref<104x128xf32, #tpu.memory_space<vmem>>, vector<1x128xf32>
    %c52_216 = arith.constant 52 : index
    %c0_217 = arith.constant 0 : index
    %479 = vector.load %arg3[%c52_216, %c0_217] : memref<104x128xf32, #tpu.memory_space<vmem>>, vector<1x128xf32>
    %480 = vector.broadcast %478 : vector<1x128xf32> to vector<64x128xf32>
    %481 = arith.subf %3, %480 : vector<64x128xf32>
    %cst_218 = arith.constant 0.000000e+00 : f32
    %482 = vector.broadcast %cst_218 : f32 to vector<64x128xf32>
    %483 = arith.maximumf %481, %482 : vector<64x128xf32>
    %484 = vector.broadcast %479 : vector<1x128xf32> to vector<64x128xf32>
    %485 = arith.mulf %484, %483 : vector<64x128xf32>
    %486 = arith.addf %477, %485 : vector<64x128xf32>
    %c53 = arith.constant 53 : index
    %c0_219 = arith.constant 0 : index
    %487 = vector.load %arg2[%c53, %c0_219] : memref<104x128xf32, #tpu.memory_space<vmem>>, vector<1x128xf32>
    %c53_220 = arith.constant 53 : index
    %c0_221 = arith.constant 0 : index
    %488 = vector.load %arg3[%c53_220, %c0_221] : memref<104x128xf32, #tpu.memory_space<vmem>>, vector<1x128xf32>
    %489 = vector.broadcast %487 : vector<1x128xf32> to vector<64x128xf32>
    %490 = arith.subf %3, %489 : vector<64x128xf32>
    %cst_222 = arith.constant 0.000000e+00 : f32
    %491 = vector.broadcast %cst_222 : f32 to vector<64x128xf32>
    %492 = arith.maximumf %490, %491 : vector<64x128xf32>
    %493 = vector.broadcast %488 : vector<1x128xf32> to vector<64x128xf32>
    %494 = arith.mulf %493, %492 : vector<64x128xf32>
    %495 = arith.addf %486, %494 : vector<64x128xf32>
    %c54 = arith.constant 54 : index
    %c0_223 = arith.constant 0 : index
    %496 = vector.load %arg2[%c54, %c0_223] : memref<104x128xf32, #tpu.memory_space<vmem>>, vector<1x128xf32>
    %c54_224 = arith.constant 54 : index
    %c0_225 = arith.constant 0 : index
    %497 = vector.load %arg3[%c54_224, %c0_225] : memref<104x128xf32, #tpu.memory_space<vmem>>, vector<1x128xf32>
    %498 = vector.broadcast %496 : vector<1x128xf32> to vector<64x128xf32>
    %499 = arith.subf %3, %498 : vector<64x128xf32>
    %cst_226 = arith.constant 0.000000e+00 : f32
    %500 = vector.broadcast %cst_226 : f32 to vector<64x128xf32>
    %501 = arith.maximumf %499, %500 : vector<64x128xf32>
    %502 = vector.broadcast %497 : vector<1x128xf32> to vector<64x128xf32>
    %503 = arith.mulf %502, %501 : vector<64x128xf32>
    %504 = arith.addf %495, %503 : vector<64x128xf32>
    %c55 = arith.constant 55 : index
    %c0_227 = arith.constant 0 : index
    %505 = vector.load %arg2[%c55, %c0_227] : memref<104x128xf32, #tpu.memory_space<vmem>>, vector<1x128xf32>
    %c55_228 = arith.constant 55 : index
    %c0_229 = arith.constant 0 : index
    %506 = vector.load %arg3[%c55_228, %c0_229] : memref<104x128xf32, #tpu.memory_space<vmem>>, vector<1x128xf32>
    %507 = vector.broadcast %505 : vector<1x128xf32> to vector<64x128xf32>
    %508 = arith.subf %3, %507 : vector<64x128xf32>
    %cst_230 = arith.constant 0.000000e+00 : f32
    %509 = vector.broadcast %cst_230 : f32 to vector<64x128xf32>
    %510 = arith.maximumf %508, %509 : vector<64x128xf32>
    %511 = vector.broadcast %506 : vector<1x128xf32> to vector<64x128xf32>
    %512 = arith.mulf %511, %510 : vector<64x128xf32>
    %513 = arith.addf %504, %512 : vector<64x128xf32>
    %c56 = arith.constant 56 : index
    %c0_231 = arith.constant 0 : index
    %514 = vector.load %arg2[%c56, %c0_231] : memref<104x128xf32, #tpu.memory_space<vmem>>, vector<1x128xf32>
    %c56_232 = arith.constant 56 : index
    %c0_233 = arith.constant 0 : index
    %515 = vector.load %arg3[%c56_232, %c0_233] : memref<104x128xf32, #tpu.memory_space<vmem>>, vector<1x128xf32>
    %516 = vector.broadcast %514 : vector<1x128xf32> to vector<64x128xf32>
    %517 = arith.subf %3, %516 : vector<64x128xf32>
    %cst_234 = arith.constant 0.000000e+00 : f32
    %518 = vector.broadcast %cst_234 : f32 to vector<64x128xf32>
    %519 = arith.maximumf %517, %518 : vector<64x128xf32>
    %520 = vector.broadcast %515 : vector<1x128xf32> to vector<64x128xf32>
    %521 = arith.mulf %520, %519 : vector<64x128xf32>
    %522 = arith.addf %513, %521 : vector<64x128xf32>
    %c57 = arith.constant 57 : index
    %c0_235 = arith.constant 0 : index
    %523 = vector.load %arg2[%c57, %c0_235] : memref<104x128xf32, #tpu.memory_space<vmem>>, vector<1x128xf32>
    %c57_236 = arith.constant 57 : index
    %c0_237 = arith.constant 0 : index
    %524 = vector.load %arg3[%c57_236, %c0_237] : memref<104x128xf32, #tpu.memory_space<vmem>>, vector<1x128xf32>
    %525 = vector.broadcast %523 : vector<1x128xf32> to vector<64x128xf32>
    %526 = arith.subf %3, %525 : vector<64x128xf32>
    %cst_238 = arith.constant 0.000000e+00 : f32
    %527 = vector.broadcast %cst_238 : f32 to vector<64x128xf32>
    %528 = arith.maximumf %526, %527 : vector<64x128xf32>
    %529 = vector.broadcast %524 : vector<1x128xf32> to vector<64x128xf32>
    %530 = arith.mulf %529, %528 : vector<64x128xf32>
    %531 = arith.addf %522, %530 : vector<64x128xf32>
    %c58 = arith.constant 58 : index
    %c0_239 = arith.constant 0 : index
    %532 = vector.load %arg2[%c58, %c0_239] : memref<104x128xf32, #tpu.memory_space<vmem>>, vector<1x128xf32>
    %c58_240 = arith.constant 58 : index
    %c0_241 = arith.constant 0 : index
    %533 = vector.load %arg3[%c58_240, %c0_241] : memref<104x128xf32, #tpu.memory_space<vmem>>, vector<1x128xf32>
    %534 = vector.broadcast %532 : vector<1x128xf32> to vector<64x128xf32>
    %535 = arith.subf %3, %534 : vector<64x128xf32>
    %cst_242 = arith.constant 0.000000e+00 : f32
    %536 = vector.broadcast %cst_242 : f32 to vector<64x128xf32>
    %537 = arith.maximumf %535, %536 : vector<64x128xf32>
    %538 = vector.broadcast %533 : vector<1x128xf32> to vector<64x128xf32>
    %539 = arith.mulf %538, %537 : vector<64x128xf32>
    %540 = arith.addf %531, %539 : vector<64x128xf32>
    %c59 = arith.constant 59 : index
    %c0_243 = arith.constant 0 : index
    %541 = vector.load %arg2[%c59, %c0_243] : memref<104x128xf32, #tpu.memory_space<vmem>>, vector<1x128xf32>
    %c59_244 = arith.constant 59 : index
    %c0_245 = arith.constant 0 : index
    %542 = vector.load %arg3[%c59_244, %c0_245] : memref<104x128xf32, #tpu.memory_space<vmem>>, vector<1x128xf32>
    %543 = vector.broadcast %541 : vector<1x128xf32> to vector<64x128xf32>
    %544 = arith.subf %3, %543 : vector<64x128xf32>
    %cst_246 = arith.constant 0.000000e+00 : f32
    %545 = vector.broadcast %cst_246 : f32 to vector<64x128xf32>
    %546 = arith.maximumf %544, %545 : vector<64x128xf32>
    %547 = vector.broadcast %542 : vector<1x128xf32> to vector<64x128xf32>
    %548 = arith.mulf %547, %546 : vector<64x128xf32>
    %549 = arith.addf %540, %548 : vector<64x128xf32>
    %c60 = arith.constant 60 : index
    %c0_247 = arith.constant 0 : index
    %550 = vector.load %arg2[%c60, %c0_247] : memref<104x128xf32, #tpu.memory_space<vmem>>, vector<1x128xf32>
    %c60_248 = arith.constant 60 : index
    %c0_249 = arith.constant 0 : index
    %551 = vector.load %arg3[%c60_248, %c0_249] : memref<104x128xf32, #tpu.memory_space<vmem>>, vector<1x128xf32>
    %552 = vector.broadcast %550 : vector<1x128xf32> to vector<64x128xf32>
    %553 = arith.subf %3, %552 : vector<64x128xf32>
    %cst_250 = arith.constant 0.000000e+00 : f32
    %554 = vector.broadcast %cst_250 : f32 to vector<64x128xf32>
    %555 = arith.maximumf %553, %554 : vector<64x128xf32>
    %556 = vector.broadcast %551 : vector<1x128xf32> to vector<64x128xf32>
    %557 = arith.mulf %556, %555 : vector<64x128xf32>
    %558 = arith.addf %549, %557 : vector<64x128xf32>
    %c61 = arith.constant 61 : index
    %c0_251 = arith.constant 0 : index
    %559 = vector.load %arg2[%c61, %c0_251] : memref<104x128xf32, #tpu.memory_space<vmem>>, vector<1x128xf32>
    %c61_252 = arith.constant 61 : index
    %c0_253 = arith.constant 0 : index
    %560 = vector.load %arg3[%c61_252, %c0_253] : memref<104x128xf32, #tpu.memory_space<vmem>>, vector<1x128xf32>
    %561 = vector.broadcast %559 : vector<1x128xf32> to vector<64x128xf32>
    %562 = arith.subf %3, %561 : vector<64x128xf32>
    %cst_254 = arith.constant 0.000000e+00 : f32
    %563 = vector.broadcast %cst_254 : f32 to vector<64x128xf32>
    %564 = arith.maximumf %562, %563 : vector<64x128xf32>
    %565 = vector.broadcast %560 : vector<1x128xf32> to vector<64x128xf32>
    %566 = arith.mulf %565, %564 : vector<64x128xf32>
    %567 = arith.addf %558, %566 : vector<64x128xf32>
    %c62 = arith.constant 62 : index
    %c0_255 = arith.constant 0 : index
    %568 = vector.load %arg2[%c62, %c0_255] : memref<104x128xf32, #tpu.memory_space<vmem>>, vector<1x128xf32>
    %c62_256 = arith.constant 62 : index
    %c0_257 = arith.constant 0 : index
    %569 = vector.load %arg3[%c62_256, %c0_257] : memref<104x128xf32, #tpu.memory_space<vmem>>, vector<1x128xf32>
    %570 = vector.broadcast %568 : vector<1x128xf32> to vector<64x128xf32>
    %571 = arith.subf %3, %570 : vector<64x128xf32>
    %cst_258 = arith.constant 0.000000e+00 : f32
    %572 = vector.broadcast %cst_258 : f32 to vector<64x128xf32>
    %573 = arith.maximumf %571, %572 : vector<64x128xf32>
    %574 = vector.broadcast %569 : vector<1x128xf32> to vector<64x128xf32>
    %575 = arith.mulf %574, %573 : vector<64x128xf32>
    %576 = arith.addf %567, %575 : vector<64x128xf32>
    %c63 = arith.constant 63 : index
    %c0_259 = arith.constant 0 : index
    %577 = vector.load %arg2[%c63, %c0_259] : memref<104x128xf32, #tpu.memory_space<vmem>>, vector<1x128xf32>
    %c63_260 = arith.constant 63 : index
    %c0_261 = arith.constant 0 : index
    %578 = vector.load %arg3[%c63_260, %c0_261] : memref<104x128xf32, #tpu.memory_space<vmem>>, vector<1x128xf32>
    %579 = vector.broadcast %577 : vector<1x128xf32> to vector<64x128xf32>
    %580 = arith.subf %3, %579 : vector<64x128xf32>
    %cst_262 = arith.constant 0.000000e+00 : f32
    %581 = vector.broadcast %cst_262 : f32 to vector<64x128xf32>
    %582 = arith.maximumf %580, %581 : vector<64x128xf32>
    %583 = vector.broadcast %578 : vector<1x128xf32> to vector<64x128xf32>
    %584 = arith.mulf %583, %582 : vector<64x128xf32>
    %585 = arith.addf %576, %584 : vector<64x128xf32>
    %c64 = arith.constant 64 : index
    %c0_263 = arith.constant 0 : index
    %586 = vector.load %arg2[%c64, %c0_263] : memref<104x128xf32, #tpu.memory_space<vmem>>, vector<1x128xf32>
    %c64_264 = arith.constant 64 : index
    %c0_265 = arith.constant 0 : index
    %587 = vector.load %arg3[%c64_264, %c0_265] : memref<104x128xf32, #tpu.memory_space<vmem>>, vector<1x128xf32>
    %588 = vector.broadcast %586 : vector<1x128xf32> to vector<64x128xf32>
    %589 = arith.subf %3, %588 : vector<64x128xf32>
    %cst_266 = arith.constant 0.000000e+00 : f32
    %590 = vector.broadcast %cst_266 : f32 to vector<64x128xf32>
    %591 = arith.maximumf %589, %590 : vector<64x128xf32>
    %592 = vector.broadcast %587 : vector<1x128xf32> to vector<64x128xf32>
    %593 = arith.mulf %592, %591 : vector<64x128xf32>
    %594 = arith.addf %585, %593 : vector<64x128xf32>
    %c65 = arith.constant 65 : index
    %c0_267 = arith.constant 0 : index
    %595 = vector.load %arg2[%c65, %c0_267] : memref<104x128xf32, #tpu.memory_space<vmem>>, vector<1x128xf32>
    %c65_268 = arith.constant 65 : index
    %c0_269 = arith.constant 0 : index
    %596 = vector.load %arg3[%c65_268, %c0_269] : memref<104x128xf32, #tpu.memory_space<vmem>>, vector<1x128xf32>
    %597 = vector.broadcast %595 : vector<1x128xf32> to vector<64x128xf32>
    %598 = arith.subf %3, %597 : vector<64x128xf32>
    %cst_270 = arith.constant 0.000000e+00 : f32
    %599 = vector.broadcast %cst_270 : f32 to vector<64x128xf32>
    %600 = arith.maximumf %598, %599 : vector<64x128xf32>
    %601 = vector.broadcast %596 : vector<1x128xf32> to vector<64x128xf32>
    %602 = arith.mulf %601, %600 : vector<64x128xf32>
    %603 = arith.addf %594, %602 : vector<64x128xf32>
    %c66 = arith.constant 66 : index
    %c0_271 = arith.constant 0 : index
    %604 = vector.load %arg2[%c66, %c0_271] : memref<104x128xf32, #tpu.memory_space<vmem>>, vector<1x128xf32>
    %c66_272 = arith.constant 66 : index
    %c0_273 = arith.constant 0 : index
    %605 = vector.load %arg3[%c66_272, %c0_273] : memref<104x128xf32, #tpu.memory_space<vmem>>, vector<1x128xf32>
    %606 = vector.broadcast %604 : vector<1x128xf32> to vector<64x128xf32>
    %607 = arith.subf %3, %606 : vector<64x128xf32>
    %cst_274 = arith.constant 0.000000e+00 : f32
    %608 = vector.broadcast %cst_274 : f32 to vector<64x128xf32>
    %609 = arith.maximumf %607, %608 : vector<64x128xf32>
    %610 = vector.broadcast %605 : vector<1x128xf32> to vector<64x128xf32>
    %611 = arith.mulf %610, %609 : vector<64x128xf32>
    %612 = arith.addf %603, %611 : vector<64x128xf32>
    %c67 = arith.constant 67 : index
    %c0_275 = arith.constant 0 : index
    %613 = vector.load %arg2[%c67, %c0_275] : memref<104x128xf32, #tpu.memory_space<vmem>>, vector<1x128xf32>
    %c67_276 = arith.constant 67 : index
    %c0_277 = arith.constant 0 : index
    %614 = vector.load %arg3[%c67_276, %c0_277] : memref<104x128xf32, #tpu.memory_space<vmem>>, vector<1x128xf32>
    %615 = vector.broadcast %613 : vector<1x128xf32> to vector<64x128xf32>
    %616 = arith.subf %3, %615 : vector<64x128xf32>
    %cst_278 = arith.constant 0.000000e+00 : f32
    %617 = vector.broadcast %cst_278 : f32 to vector<64x128xf32>
    %618 = arith.maximumf %616, %617 : vector<64x128xf32>
    %619 = vector.broadcast %614 : vector<1x128xf32> to vector<64x128xf32>
    %620 = arith.mulf %619, %618 : vector<64x128xf32>
    %621 = arith.addf %612, %620 : vector<64x128xf32>
    %c68 = arith.constant 68 : index
    %c0_279 = arith.constant 0 : index
    %622 = vector.load %arg2[%c68, %c0_279] : memref<104x128xf32, #tpu.memory_space<vmem>>, vector<1x128xf32>
    %c68_280 = arith.constant 68 : index
    %c0_281 = arith.constant 0 : index
    %623 = vector.load %arg3[%c68_280, %c0_281] : memref<104x128xf32, #tpu.memory_space<vmem>>, vector<1x128xf32>
    %624 = vector.broadcast %622 : vector<1x128xf32> to vector<64x128xf32>
    %625 = arith.subf %3, %624 : vector<64x128xf32>
    %cst_282 = arith.constant 0.000000e+00 : f32
    %626 = vector.broadcast %cst_282 : f32 to vector<64x128xf32>
    %627 = arith.maximumf %625, %626 : vector<64x128xf32>
    %628 = vector.broadcast %623 : vector<1x128xf32> to vector<64x128xf32>
    %629 = arith.mulf %628, %627 : vector<64x128xf32>
    %630 = arith.addf %621, %629 : vector<64x128xf32>
    %c69 = arith.constant 69 : index
    %c0_283 = arith.constant 0 : index
    %631 = vector.load %arg2[%c69, %c0_283] : memref<104x128xf32, #tpu.memory_space<vmem>>, vector<1x128xf32>
    %c69_284 = arith.constant 69 : index
    %c0_285 = arith.constant 0 : index
    %632 = vector.load %arg3[%c69_284, %c0_285] : memref<104x128xf32, #tpu.memory_space<vmem>>, vector<1x128xf32>
    %633 = vector.broadcast %631 : vector<1x128xf32> to vector<64x128xf32>
    %634 = arith.subf %3, %633 : vector<64x128xf32>
    %cst_286 = arith.constant 0.000000e+00 : f32
    %635 = vector.broadcast %cst_286 : f32 to vector<64x128xf32>
    %636 = arith.maximumf %634, %635 : vector<64x128xf32>
    %637 = vector.broadcast %632 : vector<1x128xf32> to vector<64x128xf32>
    %638 = arith.mulf %637, %636 : vector<64x128xf32>
    %639 = arith.addf %630, %638 : vector<64x128xf32>
    %c70 = arith.constant 70 : index
    %c0_287 = arith.constant 0 : index
    %640 = vector.load %arg2[%c70, %c0_287] : memref<104x128xf32, #tpu.memory_space<vmem>>, vector<1x128xf32>
    %c70_288 = arith.constant 70 : index
    %c0_289 = arith.constant 0 : index
    %641 = vector.load %arg3[%c70_288, %c0_289] : memref<104x128xf32, #tpu.memory_space<vmem>>, vector<1x128xf32>
    %642 = vector.broadcast %640 : vector<1x128xf32> to vector<64x128xf32>
    %643 = arith.subf %3, %642 : vector<64x128xf32>
    %cst_290 = arith.constant 0.000000e+00 : f32
    %644 = vector.broadcast %cst_290 : f32 to vector<64x128xf32>
    %645 = arith.maximumf %643, %644 : vector<64x128xf32>
    %646 = vector.broadcast %641 : vector<1x128xf32> to vector<64x128xf32>
    %647 = arith.mulf %646, %645 : vector<64x128xf32>
    %648 = arith.addf %639, %647 : vector<64x128xf32>
    %c71 = arith.constant 71 : index
    %c0_291 = arith.constant 0 : index
    %649 = vector.load %arg2[%c71, %c0_291] : memref<104x128xf32, #tpu.memory_space<vmem>>, vector<1x128xf32>
    %c71_292 = arith.constant 71 : index
    %c0_293 = arith.constant 0 : index
    %650 = vector.load %arg3[%c71_292, %c0_293] : memref<104x128xf32, #tpu.memory_space<vmem>>, vector<1x128xf32>
    %651 = vector.broadcast %649 : vector<1x128xf32> to vector<64x128xf32>
    %652 = arith.subf %3, %651 : vector<64x128xf32>
    %cst_294 = arith.constant 0.000000e+00 : f32
    %653 = vector.broadcast %cst_294 : f32 to vector<64x128xf32>
    %654 = arith.maximumf %652, %653 : vector<64x128xf32>
    %655 = vector.broadcast %650 : vector<1x128xf32> to vector<64x128xf32>
    %656 = arith.mulf %655, %654 : vector<64x128xf32>
    %657 = arith.addf %648, %656 : vector<64x128xf32>
    %c72 = arith.constant 72 : index
    %c0_295 = arith.constant 0 : index
    %658 = vector.load %arg2[%c72, %c0_295] : memref<104x128xf32, #tpu.memory_space<vmem>>, vector<1x128xf32>
    %c72_296 = arith.constant 72 : index
    %c0_297 = arith.constant 0 : index
    %659 = vector.load %arg3[%c72_296, %c0_297] : memref<104x128xf32, #tpu.memory_space<vmem>>, vector<1x128xf32>
    %660 = vector.broadcast %658 : vector<1x128xf32> to vector<64x128xf32>
    %661 = arith.subf %3, %660 : vector<64x128xf32>
    %cst_298 = arith.constant 0.000000e+00 : f32
    %662 = vector.broadcast %cst_298 : f32 to vector<64x128xf32>
    %663 = arith.maximumf %661, %662 : vector<64x128xf32>
    %664 = vector.broadcast %659 : vector<1x128xf32> to vector<64x128xf32>
    %665 = arith.mulf %664, %663 : vector<64x128xf32>
    %666 = arith.addf %657, %665 : vector<64x128xf32>
    %c73 = arith.constant 73 : index
    %c0_299 = arith.constant 0 : index
    %667 = vector.load %arg2[%c73, %c0_299] : memref<104x128xf32, #tpu.memory_space<vmem>>, vector<1x128xf32>
    %c73_300 = arith.constant 73 : index
    %c0_301 = arith.constant 0 : index
    %668 = vector.load %arg3[%c73_300, %c0_301] : memref<104x128xf32, #tpu.memory_space<vmem>>, vector<1x128xf32>
    %669 = vector.broadcast %667 : vector<1x128xf32> to vector<64x128xf32>
    %670 = arith.subf %3, %669 : vector<64x128xf32>
    %cst_302 = arith.constant 0.000000e+00 : f32
    %671 = vector.broadcast %cst_302 : f32 to vector<64x128xf32>
    %672 = arith.maximumf %670, %671 : vector<64x128xf32>
    %673 = vector.broadcast %668 : vector<1x128xf32> to vector<64x128xf32>
    %674 = arith.mulf %673, %672 : vector<64x128xf32>
    %675 = arith.addf %666, %674 : vector<64x128xf32>
    %c74 = arith.constant 74 : index
    %c0_303 = arith.constant 0 : index
    %676 = vector.load %arg2[%c74, %c0_303] : memref<104x128xf32, #tpu.memory_space<vmem>>, vector<1x128xf32>
    %c74_304 = arith.constant 74 : index
    %c0_305 = arith.constant 0 : index
    %677 = vector.load %arg3[%c74_304, %c0_305] : memref<104x128xf32, #tpu.memory_space<vmem>>, vector<1x128xf32>
    %678 = vector.broadcast %676 : vector<1x128xf32> to vector<64x128xf32>
    %679 = arith.subf %3, %678 : vector<64x128xf32>
    %cst_306 = arith.constant 0.000000e+00 : f32
    %680 = vector.broadcast %cst_306 : f32 to vector<64x128xf32>
    %681 = arith.maximumf %679, %680 : vector<64x128xf32>
    %682 = vector.broadcast %677 : vector<1x128xf32> to vector<64x128xf32>
    %683 = arith.mulf %682, %681 : vector<64x128xf32>
    %684 = arith.addf %675, %683 : vector<64x128xf32>
    %c75 = arith.constant 75 : index
    %c0_307 = arith.constant 0 : index
    %685 = vector.load %arg2[%c75, %c0_307] : memref<104x128xf32, #tpu.memory_space<vmem>>, vector<1x128xf32>
    %c75_308 = arith.constant 75 : index
    %c0_309 = arith.constant 0 : index
    %686 = vector.load %arg3[%c75_308, %c0_309] : memref<104x128xf32, #tpu.memory_space<vmem>>, vector<1x128xf32>
    %687 = vector.broadcast %685 : vector<1x128xf32> to vector<64x128xf32>
    %688 = arith.subf %3, %687 : vector<64x128xf32>
    %cst_310 = arith.constant 0.000000e+00 : f32
    %689 = vector.broadcast %cst_310 : f32 to vector<64x128xf32>
    %690 = arith.maximumf %688, %689 : vector<64x128xf32>
    %691 = vector.broadcast %686 : vector<1x128xf32> to vector<64x128xf32>
    %692 = arith.mulf %691, %690 : vector<64x128xf32>
    %693 = arith.addf %684, %692 : vector<64x128xf32>
    %c76 = arith.constant 76 : index
    %c0_311 = arith.constant 0 : index
    %694 = vector.load %arg2[%c76, %c0_311] : memref<104x128xf32, #tpu.memory_space<vmem>>, vector<1x128xf32>
    %c76_312 = arith.constant 76 : index
    %c0_313 = arith.constant 0 : index
    %695 = vector.load %arg3[%c76_312, %c0_313] : memref<104x128xf32, #tpu.memory_space<vmem>>, vector<1x128xf32>
    %696 = vector.broadcast %694 : vector<1x128xf32> to vector<64x128xf32>
    %697 = arith.subf %3, %696 : vector<64x128xf32>
    %cst_314 = arith.constant 0.000000e+00 : f32
    %698 = vector.broadcast %cst_314 : f32 to vector<64x128xf32>
    %699 = arith.maximumf %697, %698 : vector<64x128xf32>
    %700 = vector.broadcast %695 : vector<1x128xf32> to vector<64x128xf32>
    %701 = arith.mulf %700, %699 : vector<64x128xf32>
    %702 = arith.addf %693, %701 : vector<64x128xf32>
    %c77 = arith.constant 77 : index
    %c0_315 = arith.constant 0 : index
    %703 = vector.load %arg2[%c77, %c0_315] : memref<104x128xf32, #tpu.memory_space<vmem>>, vector<1x128xf32>
    %c77_316 = arith.constant 77 : index
    %c0_317 = arith.constant 0 : index
    %704 = vector.load %arg3[%c77_316, %c0_317] : memref<104x128xf32, #tpu.memory_space<vmem>>, vector<1x128xf32>
    %705 = vector.broadcast %703 : vector<1x128xf32> to vector<64x128xf32>
    %706 = arith.subf %3, %705 : vector<64x128xf32>
    %cst_318 = arith.constant 0.000000e+00 : f32
    %707 = vector.broadcast %cst_318 : f32 to vector<64x128xf32>
    %708 = arith.maximumf %706, %707 : vector<64x128xf32>
    %709 = vector.broadcast %704 : vector<1x128xf32> to vector<64x128xf32>
    %710 = arith.mulf %709, %708 : vector<64x128xf32>
    %711 = arith.addf %702, %710 : vector<64x128xf32>
    %c78 = arith.constant 78 : index
    %c0_319 = arith.constant 0 : index
    %712 = vector.load %arg2[%c78, %c0_319] : memref<104x128xf32, #tpu.memory_space<vmem>>, vector<1x128xf32>
    %c78_320 = arith.constant 78 : index
    %c0_321 = arith.constant 0 : index
    %713 = vector.load %arg3[%c78_320, %c0_321] : memref<104x128xf32, #tpu.memory_space<vmem>>, vector<1x128xf32>
    %714 = vector.broadcast %712 : vector<1x128xf32> to vector<64x128xf32>
    %715 = arith.subf %3, %714 : vector<64x128xf32>
    %cst_322 = arith.constant 0.000000e+00 : f32
    %716 = vector.broadcast %cst_322 : f32 to vector<64x128xf32>
    %717 = arith.maximumf %715, %716 : vector<64x128xf32>
    %718 = vector.broadcast %713 : vector<1x128xf32> to vector<64x128xf32>
    %719 = arith.mulf %718, %717 : vector<64x128xf32>
    %720 = arith.addf %711, %719 : vector<64x128xf32>
    %c79 = arith.constant 79 : index
    %c0_323 = arith.constant 0 : index
    %721 = vector.load %arg2[%c79, %c0_323] : memref<104x128xf32, #tpu.memory_space<vmem>>, vector<1x128xf32>
    %c79_324 = arith.constant 79 : index
    %c0_325 = arith.constant 0 : index
    %722 = vector.load %arg3[%c79_324, %c0_325] : memref<104x128xf32, #tpu.memory_space<vmem>>, vector<1x128xf32>
    %723 = vector.broadcast %721 : vector<1x128xf32> to vector<64x128xf32>
    %724 = arith.subf %3, %723 : vector<64x128xf32>
    %cst_326 = arith.constant 0.000000e+00 : f32
    %725 = vector.broadcast %cst_326 : f32 to vector<64x128xf32>
    %726 = arith.maximumf %724, %725 : vector<64x128xf32>
    %727 = vector.broadcast %722 : vector<1x128xf32> to vector<64x128xf32>
    %728 = arith.mulf %727, %726 : vector<64x128xf32>
    %729 = arith.addf %720, %728 : vector<64x128xf32>
    %c80 = arith.constant 80 : index
    %c0_327 = arith.constant 0 : index
    %730 = vector.load %arg2[%c80, %c0_327] : memref<104x128xf32, #tpu.memory_space<vmem>>, vector<1x128xf32>
    %c80_328 = arith.constant 80 : index
    %c0_329 = arith.constant 0 : index
    %731 = vector.load %arg3[%c80_328, %c0_329] : memref<104x128xf32, #tpu.memory_space<vmem>>, vector<1x128xf32>
    %732 = vector.broadcast %730 : vector<1x128xf32> to vector<64x128xf32>
    %733 = arith.subf %3, %732 : vector<64x128xf32>
    %cst_330 = arith.constant 0.000000e+00 : f32
    %734 = vector.broadcast %cst_330 : f32 to vector<64x128xf32>
    %735 = arith.maximumf %733, %734 : vector<64x128xf32>
    %736 = vector.broadcast %731 : vector<1x128xf32> to vector<64x128xf32>
    %737 = arith.mulf %736, %735 : vector<64x128xf32>
    %738 = arith.addf %729, %737 : vector<64x128xf32>
    %c81 = arith.constant 81 : index
    %c0_331 = arith.constant 0 : index
    %739 = vector.load %arg2[%c81, %c0_331] : memref<104x128xf32, #tpu.memory_space<vmem>>, vector<1x128xf32>
    %c81_332 = arith.constant 81 : index
    %c0_333 = arith.constant 0 : index
    %740 = vector.load %arg3[%c81_332, %c0_333] : memref<104x128xf32, #tpu.memory_space<vmem>>, vector<1x128xf32>
    %741 = vector.broadcast %739 : vector<1x128xf32> to vector<64x128xf32>
    %742 = arith.subf %3, %741 : vector<64x128xf32>
    %cst_334 = arith.constant 0.000000e+00 : f32
    %743 = vector.broadcast %cst_334 : f32 to vector<64x128xf32>
    %744 = arith.maximumf %742, %743 : vector<64x128xf32>
    %745 = vector.broadcast %740 : vector<1x128xf32> to vector<64x128xf32>
    %746 = arith.mulf %745, %744 : vector<64x128xf32>
    %747 = arith.addf %738, %746 : vector<64x128xf32>
    %c82 = arith.constant 82 : index
    %c0_335 = arith.constant 0 : index
    %748 = vector.load %arg2[%c82, %c0_335] : memref<104x128xf32, #tpu.memory_space<vmem>>, vector<1x128xf32>
    %c82_336 = arith.constant 82 : index
    %c0_337 = arith.constant 0 : index
    %749 = vector.load %arg3[%c82_336, %c0_337] : memref<104x128xf32, #tpu.memory_space<vmem>>, vector<1x128xf32>
    %750 = vector.broadcast %748 : vector<1x128xf32> to vector<64x128xf32>
    %751 = arith.subf %3, %750 : vector<64x128xf32>
    %cst_338 = arith.constant 0.000000e+00 : f32
    %752 = vector.broadcast %cst_338 : f32 to vector<64x128xf32>
    %753 = arith.maximumf %751, %752 : vector<64x128xf32>
    %754 = vector.broadcast %749 : vector<1x128xf32> to vector<64x128xf32>
    %755 = arith.mulf %754, %753 : vector<64x128xf32>
    %756 = arith.addf %747, %755 : vector<64x128xf32>
    %c83 = arith.constant 83 : index
    %c0_339 = arith.constant 0 : index
    %757 = vector.load %arg2[%c83, %c0_339] : memref<104x128xf32, #tpu.memory_space<vmem>>, vector<1x128xf32>
    %c83_340 = arith.constant 83 : index
    %c0_341 = arith.constant 0 : index
    %758 = vector.load %arg3[%c83_340, %c0_341] : memref<104x128xf32, #tpu.memory_space<vmem>>, vector<1x128xf32>
    %759 = vector.broadcast %757 : vector<1x128xf32> to vector<64x128xf32>
    %760 = arith.subf %3, %759 : vector<64x128xf32>
    %cst_342 = arith.constant 0.000000e+00 : f32
    %761 = vector.broadcast %cst_342 : f32 to vector<64x128xf32>
    %762 = arith.maximumf %760, %761 : vector<64x128xf32>
    %763 = vector.broadcast %758 : vector<1x128xf32> to vector<64x128xf32>
    %764 = arith.mulf %763, %762 : vector<64x128xf32>
    %765 = arith.addf %756, %764 : vector<64x128xf32>
    %c84 = arith.constant 84 : index
    %c0_343 = arith.constant 0 : index
    %766 = vector.load %arg2[%c84, %c0_343] : memref<104x128xf32, #tpu.memory_space<vmem>>, vector<1x128xf32>
    %c84_344 = arith.constant 84 : index
    %c0_345 = arith.constant 0 : index
    %767 = vector.load %arg3[%c84_344, %c0_345] : memref<104x128xf32, #tpu.memory_space<vmem>>, vector<1x128xf32>
    %768 = vector.broadcast %766 : vector<1x128xf32> to vector<64x128xf32>
    %769 = arith.subf %3, %768 : vector<64x128xf32>
    %cst_346 = arith.constant 0.000000e+00 : f32
    %770 = vector.broadcast %cst_346 : f32 to vector<64x128xf32>
    %771 = arith.maximumf %769, %770 : vector<64x128xf32>
    %772 = vector.broadcast %767 : vector<1x128xf32> to vector<64x128xf32>
    %773 = arith.mulf %772, %771 : vector<64x128xf32>
    %774 = arith.addf %765, %773 : vector<64x128xf32>
    %c85 = arith.constant 85 : index
    %c0_347 = arith.constant 0 : index
    %775 = vector.load %arg2[%c85, %c0_347] : memref<104x128xf32, #tpu.memory_space<vmem>>, vector<1x128xf32>
    %c85_348 = arith.constant 85 : index
    %c0_349 = arith.constant 0 : index
    %776 = vector.load %arg3[%c85_348, %c0_349] : memref<104x128xf32, #tpu.memory_space<vmem>>, vector<1x128xf32>
    %777 = vector.broadcast %775 : vector<1x128xf32> to vector<64x128xf32>
    %778 = arith.subf %3, %777 : vector<64x128xf32>
    %cst_350 = arith.constant 0.000000e+00 : f32
    %779 = vector.broadcast %cst_350 : f32 to vector<64x128xf32>
    %780 = arith.maximumf %778, %779 : vector<64x128xf32>
    %781 = vector.broadcast %776 : vector<1x128xf32> to vector<64x128xf32>
    %782 = arith.mulf %781, %780 : vector<64x128xf32>
    %783 = arith.addf %774, %782 : vector<64x128xf32>
    %c86 = arith.constant 86 : index
    %c0_351 = arith.constant 0 : index
    %784 = vector.load %arg2[%c86, %c0_351] : memref<104x128xf32, #tpu.memory_space<vmem>>, vector<1x128xf32>
    %c86_352 = arith.constant 86 : index
    %c0_353 = arith.constant 0 : index
    %785 = vector.load %arg3[%c86_352, %c0_353] : memref<104x128xf32, #tpu.memory_space<vmem>>, vector<1x128xf32>
    %786 = vector.broadcast %784 : vector<1x128xf32> to vector<64x128xf32>
    %787 = arith.subf %3, %786 : vector<64x128xf32>
    %cst_354 = arith.constant 0.000000e+00 : f32
    %788 = vector.broadcast %cst_354 : f32 to vector<64x128xf32>
    %789 = arith.maximumf %787, %788 : vector<64x128xf32>
    %790 = vector.broadcast %785 : vector<1x128xf32> to vector<64x128xf32>
    %791 = arith.mulf %790, %789 : vector<64x128xf32>
    %792 = arith.addf %783, %791 : vector<64x128xf32>
    %c87 = arith.constant 87 : index
    %c0_355 = arith.constant 0 : index
    %793 = vector.load %arg2[%c87, %c0_355] : memref<104x128xf32, #tpu.memory_space<vmem>>, vector<1x128xf32>
    %c87_356 = arith.constant 87 : index
    %c0_357 = arith.constant 0 : index
    %794 = vector.load %arg3[%c87_356, %c0_357] : memref<104x128xf32, #tpu.memory_space<vmem>>, vector<1x128xf32>
    %795 = vector.broadcast %793 : vector<1x128xf32> to vector<64x128xf32>
    %796 = arith.subf %3, %795 : vector<64x128xf32>
    %cst_358 = arith.constant 0.000000e+00 : f32
    %797 = vector.broadcast %cst_358 : f32 to vector<64x128xf32>
    %798 = arith.maximumf %796, %797 : vector<64x128xf32>
    %799 = vector.broadcast %794 : vector<1x128xf32> to vector<64x128xf32>
    %800 = arith.mulf %799, %798 : vector<64x128xf32>
    %801 = arith.addf %792, %800 : vector<64x128xf32>
    %c88 = arith.constant 88 : index
    %c0_359 = arith.constant 0 : index
    %802 = vector.load %arg2[%c88, %c0_359] : memref<104x128xf32, #tpu.memory_space<vmem>>, vector<1x128xf32>
    %c88_360 = arith.constant 88 : index
    %c0_361 = arith.constant 0 : index
    %803 = vector.load %arg3[%c88_360, %c0_361] : memref<104x128xf32, #tpu.memory_space<vmem>>, vector<1x128xf32>
    %804 = vector.broadcast %802 : vector<1x128xf32> to vector<64x128xf32>
    %805 = arith.subf %3, %804 : vector<64x128xf32>
    %cst_362 = arith.constant 0.000000e+00 : f32
    %806 = vector.broadcast %cst_362 : f32 to vector<64x128xf32>
    %807 = arith.maximumf %805, %806 : vector<64x128xf32>
    %808 = vector.broadcast %803 : vector<1x128xf32> to vector<64x128xf32>
    %809 = arith.mulf %808, %807 : vector<64x128xf32>
    %810 = arith.addf %801, %809 : vector<64x128xf32>
    %c89 = arith.constant 89 : index
    %c0_363 = arith.constant 0 : index
    %811 = vector.load %arg2[%c89, %c0_363] : memref<104x128xf32, #tpu.memory_space<vmem>>, vector<1x128xf32>
    %c89_364 = arith.constant 89 : index
    %c0_365 = arith.constant 0 : index
    %812 = vector.load %arg3[%c89_364, %c0_365] : memref<104x128xf32, #tpu.memory_space<vmem>>, vector<1x128xf32>
    %813 = vector.broadcast %811 : vector<1x128xf32> to vector<64x128xf32>
    %814 = arith.subf %3, %813 : vector<64x128xf32>
    %cst_366 = arith.constant 0.000000e+00 : f32
    %815 = vector.broadcast %cst_366 : f32 to vector<64x128xf32>
    %816 = arith.maximumf %814, %815 : vector<64x128xf32>
    %817 = vector.broadcast %812 : vector<1x128xf32> to vector<64x128xf32>
    %818 = arith.mulf %817, %816 : vector<64x128xf32>
    %819 = arith.addf %810, %818 : vector<64x128xf32>
    %c90 = arith.constant 90 : index
    %c0_367 = arith.constant 0 : index
    %820 = vector.load %arg2[%c90, %c0_367] : memref<104x128xf32, #tpu.memory_space<vmem>>, vector<1x128xf32>
    %c90_368 = arith.constant 90 : index
    %c0_369 = arith.constant 0 : index
    %821 = vector.load %arg3[%c90_368, %c0_369] : memref<104x128xf32, #tpu.memory_space<vmem>>, vector<1x128xf32>
    %822 = vector.broadcast %820 : vector<1x128xf32> to vector<64x128xf32>
    %823 = arith.subf %3, %822 : vector<64x128xf32>
    %cst_370 = arith.constant 0.000000e+00 : f32
    %824 = vector.broadcast %cst_370 : f32 to vector<64x128xf32>
    %825 = arith.maximumf %823, %824 : vector<64x128xf32>
    %826 = vector.broadcast %821 : vector<1x128xf32> to vector<64x128xf32>
    %827 = arith.mulf %826, %825 : vector<64x128xf32>
    %828 = arith.addf %819, %827 : vector<64x128xf32>
    %c91 = arith.constant 91 : index
    %c0_371 = arith.constant 0 : index
    %829 = vector.load %arg2[%c91, %c0_371] : memref<104x128xf32, #tpu.memory_space<vmem>>, vector<1x128xf32>
    %c91_372 = arith.constant 91 : index
    %c0_373 = arith.constant 0 : index
    %830 = vector.load %arg3[%c91_372, %c0_373] : memref<104x128xf32, #tpu.memory_space<vmem>>, vector<1x128xf32>
    %831 = vector.broadcast %829 : vector<1x128xf32> to vector<64x128xf32>
    %832 = arith.subf %3, %831 : vector<64x128xf32>
    %cst_374 = arith.constant 0.000000e+00 : f32
    %833 = vector.broadcast %cst_374 : f32 to vector<64x128xf32>
    %834 = arith.maximumf %832, %833 : vector<64x128xf32>
    %835 = vector.broadcast %830 : vector<1x128xf32> to vector<64x128xf32>
    %836 = arith.mulf %835, %834 : vector<64x128xf32>
    %837 = arith.addf %828, %836 : vector<64x128xf32>
    %c92 = arith.constant 92 : index
    %c0_375 = arith.constant 0 : index
    %838 = vector.load %arg2[%c92, %c0_375] : memref<104x128xf32, #tpu.memory_space<vmem>>, vector<1x128xf32>
    %c92_376 = arith.constant 92 : index
    %c0_377 = arith.constant 0 : index
    %839 = vector.load %arg3[%c92_376, %c0_377] : memref<104x128xf32, #tpu.memory_space<vmem>>, vector<1x128xf32>
    %840 = vector.broadcast %838 : vector<1x128xf32> to vector<64x128xf32>
    %841 = arith.subf %3, %840 : vector<64x128xf32>
    %cst_378 = arith.constant 0.000000e+00 : f32
    %842 = vector.broadcast %cst_378 : f32 to vector<64x128xf32>
    %843 = arith.maximumf %841, %842 : vector<64x128xf32>
    %844 = vector.broadcast %839 : vector<1x128xf32> to vector<64x128xf32>
    %845 = arith.mulf %844, %843 : vector<64x128xf32>
    %846 = arith.addf %837, %845 : vector<64x128xf32>
    %c93 = arith.constant 93 : index
    %c0_379 = arith.constant 0 : index
    %847 = vector.load %arg2[%c93, %c0_379] : memref<104x128xf32, #tpu.memory_space<vmem>>, vector<1x128xf32>
    %c93_380 = arith.constant 93 : index
    %c0_381 = arith.constant 0 : index
    %848 = vector.load %arg3[%c93_380, %c0_381] : memref<104x128xf32, #tpu.memory_space<vmem>>, vector<1x128xf32>
    %849 = vector.broadcast %847 : vector<1x128xf32> to vector<64x128xf32>
    %850 = arith.subf %3, %849 : vector<64x128xf32>
    %cst_382 = arith.constant 0.000000e+00 : f32
    %851 = vector.broadcast %cst_382 : f32 to vector<64x128xf32>
    %852 = arith.maximumf %850, %851 : vector<64x128xf32>
    %853 = vector.broadcast %848 : vector<1x128xf32> to vector<64x128xf32>
    %854 = arith.mulf %853, %852 : vector<64x128xf32>
    %855 = arith.addf %846, %854 : vector<64x128xf32>
    %c94 = arith.constant 94 : index
    %c0_383 = arith.constant 0 : index
    %856 = vector.load %arg2[%c94, %c0_383] : memref<104x128xf32, #tpu.memory_space<vmem>>, vector<1x128xf32>
    %c94_384 = arith.constant 94 : index
    %c0_385 = arith.constant 0 : index
    %857 = vector.load %arg3[%c94_384, %c0_385] : memref<104x128xf32, #tpu.memory_space<vmem>>, vector<1x128xf32>
    %858 = vector.broadcast %856 : vector<1x128xf32> to vector<64x128xf32>
    %859 = arith.subf %3, %858 : vector<64x128xf32>
    %cst_386 = arith.constant 0.000000e+00 : f32
    %860 = vector.broadcast %cst_386 : f32 to vector<64x128xf32>
    %861 = arith.maximumf %859, %860 : vector<64x128xf32>
    %862 = vector.broadcast %857 : vector<1x128xf32> to vector<64x128xf32>
    %863 = arith.mulf %862, %861 : vector<64x128xf32>
    %864 = arith.addf %855, %863 : vector<64x128xf32>
    %c95 = arith.constant 95 : index
    %c0_387 = arith.constant 0 : index
    %865 = vector.load %arg2[%c95, %c0_387] : memref<104x128xf32, #tpu.memory_space<vmem>>, vector<1x128xf32>
    %c95_388 = arith.constant 95 : index
    %c0_389 = arith.constant 0 : index
    %866 = vector.load %arg3[%c95_388, %c0_389] : memref<104x128xf32, #tpu.memory_space<vmem>>, vector<1x128xf32>
    %867 = vector.broadcast %865 : vector<1x128xf32> to vector<64x128xf32>
    %868 = arith.subf %3, %867 : vector<64x128xf32>
    %cst_390 = arith.constant 0.000000e+00 : f32
    %869 = vector.broadcast %cst_390 : f32 to vector<64x128xf32>
    %870 = arith.maximumf %868, %869 : vector<64x128xf32>
    %871 = vector.broadcast %866 : vector<1x128xf32> to vector<64x128xf32>
    %872 = arith.mulf %871, %870 : vector<64x128xf32>
    %873 = arith.addf %864, %872 : vector<64x128xf32>
    %c96 = arith.constant 96 : index
    %c0_391 = arith.constant 0 : index
    %874 = vector.load %arg2[%c96, %c0_391] : memref<104x128xf32, #tpu.memory_space<vmem>>, vector<1x128xf32>
    %c96_392 = arith.constant 96 : index
    %c0_393 = arith.constant 0 : index
    %875 = vector.load %arg3[%c96_392, %c0_393] : memref<104x128xf32, #tpu.memory_space<vmem>>, vector<1x128xf32>
    %876 = vector.broadcast %874 : vector<1x128xf32> to vector<64x128xf32>
    %877 = arith.subf %3, %876 : vector<64x128xf32>
    %cst_394 = arith.constant 0.000000e+00 : f32
    %878 = vector.broadcast %cst_394 : f32 to vector<64x128xf32>
    %879 = arith.maximumf %877, %878 : vector<64x128xf32>
    %880 = vector.broadcast %875 : vector<1x128xf32> to vector<64x128xf32>
    %881 = arith.mulf %880, %879 : vector<64x128xf32>
    %882 = arith.addf %873, %881 : vector<64x128xf32>
    %c97 = arith.constant 97 : index
    %c0_395 = arith.constant 0 : index
    %883 = vector.load %arg2[%c97, %c0_395] : memref<104x128xf32, #tpu.memory_space<vmem>>, vector<1x128xf32>
    %c97_396 = arith.constant 97 : index
    %c0_397 = arith.constant 0 : index
    %884 = vector.load %arg3[%c97_396, %c0_397] : memref<104x128xf32, #tpu.memory_space<vmem>>, vector<1x128xf32>
    %885 = vector.broadcast %883 : vector<1x128xf32> to vector<64x128xf32>
    %886 = arith.subf %3, %885 : vector<64x128xf32>
    %cst_398 = arith.constant 0.000000e+00 : f32
    %887 = vector.broadcast %cst_398 : f32 to vector<64x128xf32>
    %888 = arith.maximumf %886, %887 : vector<64x128xf32>
    %889 = vector.broadcast %884 : vector<1x128xf32> to vector<64x128xf32>
    %890 = arith.mulf %889, %888 : vector<64x128xf32>
    %891 = arith.addf %882, %890 : vector<64x128xf32>
    %c98 = arith.constant 98 : index
    %c0_399 = arith.constant 0 : index
    %892 = vector.load %arg2[%c98, %c0_399] : memref<104x128xf32, #tpu.memory_space<vmem>>, vector<1x128xf32>
    %c98_400 = arith.constant 98 : index
    %c0_401 = arith.constant 0 : index
    %893 = vector.load %arg3[%c98_400, %c0_401] : memref<104x128xf32, #tpu.memory_space<vmem>>, vector<1x128xf32>
    %894 = vector.broadcast %892 : vector<1x128xf32> to vector<64x128xf32>
    %895 = arith.subf %3, %894 : vector<64x128xf32>
    %cst_402 = arith.constant 0.000000e+00 : f32
    %896 = vector.broadcast %cst_402 : f32 to vector<64x128xf32>
    %897 = arith.maximumf %895, %896 : vector<64x128xf32>
    %898 = vector.broadcast %893 : vector<1x128xf32> to vector<64x128xf32>
    %899 = arith.mulf %898, %897 : vector<64x128xf32>
    %900 = arith.addf %891, %899 : vector<64x128xf32>
    %c99 = arith.constant 99 : index
    %c0_403 = arith.constant 0 : index
    %901 = vector.load %arg2[%c99, %c0_403] : memref<104x128xf32, #tpu.memory_space<vmem>>, vector<1x128xf32>
    %c99_404 = arith.constant 99 : index
    %c0_405 = arith.constant 0 : index
    %902 = vector.load %arg3[%c99_404, %c0_405] : memref<104x128xf32, #tpu.memory_space<vmem>>, vector<1x128xf32>
    %903 = vector.broadcast %901 : vector<1x128xf32> to vector<64x128xf32>
    %904 = arith.subf %3, %903 : vector<64x128xf32>
    %cst_406 = arith.constant 0.000000e+00 : f32
    %905 = vector.broadcast %cst_406 : f32 to vector<64x128xf32>
    %906 = arith.maximumf %904, %905 : vector<64x128xf32>
    %907 = vector.broadcast %902 : vector<1x128xf32> to vector<64x128xf32>
    %908 = arith.mulf %907, %906 : vector<64x128xf32>
    %909 = arith.addf %900, %908 : vector<64x128xf32>
    %c100 = arith.constant 100 : index
    %c0_407 = arith.constant 0 : index
    %910 = vector.load %arg2[%c100, %c0_407] : memref<104x128xf32, #tpu.memory_space<vmem>>, vector<1x128xf32>
    %c100_408 = arith.constant 100 : index
    %c0_409 = arith.constant 0 : index
    %911 = vector.load %arg3[%c100_408, %c0_409] : memref<104x128xf32, #tpu.memory_space<vmem>>, vector<1x128xf32>
    %912 = vector.broadcast %910 : vector<1x128xf32> to vector<64x128xf32>
    %913 = arith.subf %3, %912 : vector<64x128xf32>
    %cst_410 = arith.constant 0.000000e+00 : f32
    %914 = vector.broadcast %cst_410 : f32 to vector<64x128xf32>
    %915 = arith.maximumf %913, %914 : vector<64x128xf32>
    %916 = vector.broadcast %911 : vector<1x128xf32> to vector<64x128xf32>
    %917 = arith.mulf %916, %915 : vector<64x128xf32>
    %918 = arith.addf %909, %917 : vector<64x128xf32>
    %c0_411 = arith.constant 0 : index
    %c0_412 = arith.constant 0 : index
    %919 = vector.load %arg5[%c0_411, %c0_412] : memref<64x128xf32, #tpu.memory_space<vmem>>, vector<64x128xf32>
    tpu.vector_store %arg5[%c0_411, %c0_412], %918 {strides = array<i32>} : memref<64x128xf32, #tpu.memory_space<vmem>>, vector<64x128xf32>,
    return
  }
  func.func @transform_0(%arg0: i32) -> (i32, i32) {
    %c0_i32 = arith.constant 0 : i32
    %c0_i32_0 = arith.constant 0 : i32
    return %arg0, %c0_i32 : i32, i32
  }
  func.func @transform_1(%arg0: i32) -> (i32, i32) {
    %c0_i32 = arith.constant 0 : i32
    %c0_i32_0 = arith.constant 0 : i32
    %c0_i32_1 = arith.constant 0 : i32
    return %c0_i32, %c0_i32_0 : i32, i32
  }
  func.func @transform_2(%arg0: i32) -> (i32, i32) {
    %c0_i32 = arith.constant 0 : i32
    %c0_i32_0 = arith.constant 0 : i32
    %c0_i32_1 = arith.constant 0 : i32
    return %c0_i32, %c0_i32_0 : i32, i32
  }
  func.func @transform_3(%arg0: i32) -> (i32, i32) {
    %c0_i32 = arith.constant 0 : i32
    %c0_i32_0 = arith.constant 0 : i32
    %c0_i32_1 = arith.constant 0 : i32
    return %c0_i32, %c0_i32_0 : i32, i32
  }
  func.func @transform_4(%arg0: i32) -> (i32, i32) {
    %c0_i32 = arith.constant 0 : i32
    %c0_i32_0 = arith.constant 0 : i32
    return %arg0, %c0_i32 : i32, i32
  }
}

</mosaic_0001>

<llo_original>
// kernel: tpu_custom_call.1
$region0: #{tpu_custom_call.1}
  #allocation0 [shape = 'u32[]', space=smem, size = 0x4, offset = 0x4, fixed_abs, tag = 'smem constant byte address 0x4 - core index']
  #allocation1 [shape = 'u32[144,128]{1,0:T(1,128)}', space=vmem, size = 0x12000, scoped, tag = 'internal scratch']
  %s0 = inlined_call_operand.hbm [shape: f32[128,128], index: 0, kind: input, shape index: {}]
  %s1 = inlined_call_operand.hbm [shape: f32[104,128], index: 1, kind: input, shape index: {}]
  %s2 = inlined_call_operand.hbm [shape: f32[104,128], index: 2, kind: input, shape index: {}]
  %s3 = inlined_call_operand.vmem [shape: f32[8,128], index: 3, kind: input, shape index: {}]
  %s4 = inlined_call_operand.hbm [shape: f32[128,128], index: 4, kind: output, shape index: {}]
  %s5 = sld [smem:[#allocation0]]
  $region61: #{tpu_custom_call.1} parent=0
    _
  %s7 = ssub.s32 1, %s5
  %s8 = scalar_select 0, %s7, %s5
  $region1: #{tpu_custom_call.1} parent=0
    #allocation2 [shape = 'u8[65536]{0}', space=vmem, size = 0x10000, scoped, tag = 'input window, operand 0']
    #allocation3 [shape = 's32[2]{0}', space=sflag, size = 0x8, scoped, tag = 'scoped memory for tpu_custom_call.1']
    #allocation4 [shape = 's32[2]{0}', space=sflag, size = 0x8, scoped, tag = 'scoped memory for tpu_custom_call.1']
    #allocation5 [shape = 'u8[53248]{0}', space=vmem, size = 0xd000, scoped, tag = 'input window, operand 1, single buffered']
    #allocation6 [shape = 's32[1]{0}', space=sflag, size = 0x4, scoped, tag = 'scoped memory for tpu_custom_call.1']
    #allocation7 [shape = 'u8[53248]{0}', space=vmem, size = 0xd000, scoped, tag = 'input window, operand 2, single buffered']
    #allocation8 [shape = 'u8[65536]{0}', space=vmem, size = 0x10000, scoped, tag = 'output window, operand 0']
    %9 = vsyncpa [#allocation3], 0
    %s10 = scalar_lea.sflag [#allocation3], 1
    %11 = vsyncpa %s10, 0
    %12 = vsyncpa [#allocation6], 0
    %13 = vsyncpa [#allocation4], 0
    %s14 = scalar_lea.sflag [#allocation4], 1
    %15 = vsyncpa %s14, 0
    loop: start=0, step=1, limit=4
    $region2: #{tpu_custom_call.1} parent=1 // loop_pre_header
      _
    $region3: #{tpu_custom_call.1} parent=1 // loop_header
      %s17 = sphi 0, %s21
      %p18 = scmp.ge.s32.totalorder %s17, 4
      %s27 = sphi 0, %s29
      %s30 = sphi 0, %s27
      %s31 = sphi 0, %s30
      %s47 = sphi 0, %s31
      %s51 = sphi 0, %s51
      %s53 = sphi 0, %s51
      %s54 = sphi 0, %s53
      %s68 = sphi 0, %s54
      %s72 = sphi 0, %s72
      %s74 = sphi 0, %s72
      %s75 = sphi 0, %s74
      %s89 = sphi 0, %s75
      %s93 = sphi 0, %s93
      %s95 = sphi 0, %s93
      %s96 = sphi 0, %s95
      %s110 = sphi 0, %s96
      %s116 = sphi 0, %s118
      %s119 = sphi 0, %s116
      %s120 = sphi 0, %s119
      %s136 = sphi 0, %s120
    $region4: #{tpu_custom_call.1} parent=1 // loop_header_branch
      %20 = sbr.rel (%p18) target = $region8
    $region5: #{tpu_custom_call.1} parent=1 // loop_body
      %s22 = ssub.s32 %s17, 1
      %s23 = ssub.s32 %s17, 2
      %s24 = sadd.s32 %s17, 1
      %s25 = ssub.s32 %s17, %s24
      %p26 = scmp.eq.s32.totalorder %s25, 0
      %s28 = sadd.s32 %s27, 1
      %s29 = scalar_select %p26, %s27, %s28
      %p32 = pneg %p26
      %p33 = scmp.eq.s32.totalorder %s17, 1
      %p34 = por %p32, %p33
      %p35 = scmp.ne.s32.totalorder %s27, %s30
      %p36 = scmp.eq.s32.totalorder %s17, 0
      %p37 = por %p35, %p36
      %p38 = scmp.ne.s32.totalorder %s27, %s30
      %p39 = scmp.eq.s32.totalorder %s22, 1
      %p40 = por %p38, %p39
      %p41 = scmp.ne.s32.totalorder %s30, %s31
      %p42 = scmp.eq.s32.totalorder %s22, 0
      %p43 = por %p41, %p42
      %p44 = scmp.ne.s32.totalorder %s30, %s31
      %p45 = scmp.eq.s32.totalorder %s23, 1
      %p46 = por %p44, %p45
      %p48 = scmp.ne.s32.totalorder %s31, %s47
      %p49 = scmp.eq.s32.totalorder %s23, 0
      %p50 = por %p48, %p49
      %s52 = sadd.s32 %s51, 1
      %p55 = scmp.eq.s32.totalorder %s17, 1
      %p56 = scmp.ne.s32.totalorder %s51, %s53
      %p57 = scmp.eq.s32.totalorder %s17, 0
      %p58 = por %p56, %p57
      %p59 = scmp.ne.s32.totalorder %s51, %s53
      %p60 = scmp.eq.s32.totalorder %s22, 1
      %p61 = por %p59, %p60
      %p62 = scmp.ne.s32.totalorder %s53, %s54
      %p63 = scmp.eq.s32.totalorder %s22, 0
      %p64 = por %p62, %p63
      %p65 = scmp.ne.s32.totalorder %s53, %s54
      %p66 = scmp.eq.s32.totalorder %s23, 1
      %p67 = por %p65, %p66
      %p69 = scmp.ne.s32.totalorder %s54, %s68
      %p70 = scmp.eq.s32.totalorder %s23, 0
      %p71 = por %p69, %p70
      %s73 = sadd.s32 %s72, 1
      %p76 = scmp.eq.s32.totalorder %s17, 1
      %p77 = scmp.ne.s32.totalorder %s72, %s74
      %p78 = scmp.eq.s32.totalorder %s17, 0
      %p79 = por %p77, %p78
      %p80 = scmp.ne.s32.totalorder %s72, %s74
      %p81 = scmp.eq.s32.totalorder %s22, 1
      %p82 = por %p80, %p81
      %p83 = scmp.ne.s32.totalorder %s74, %s75
      %p84 = scmp.eq.s32.totalorder %s22, 0
      %p85 = por %p83, %p84
      %p86 = scmp.ne.s32.totalorder %s74, %s75
      %p87 = scmp.eq.s32.totalorder %s23, 1
      %p88 = por %p86, %p87
      %p90 = scmp.ne.s32.totalorder %s75, %s89
      %p91 = scmp.eq.s32.totalorder %s23, 0
      %p92 = por %p90, %p91
      %s94 = sadd.s32 %s93, 1
      %p97 = scmp.eq.s32.totalorder %s17, 1
      %p98 = scmp.ne.s32.totalorder %s93, %s95
      %p99 = scmp.eq.s32.totalorder %s17, 0
      %p100 = por %p98, %p99
      %p101 = scmp.ne.s32.totalorder %s93, %s95
      %p102 = scmp.eq.s32.totalorder %s22, 1
      %p103 = por %p101, %p102
      %p104 = scmp.ne.s32.totalorder %s95, %s96
      %p105 = scmp.eq.s32.totalorder %s22, 0
      %p106 = por %p104, %p105
      %p107 = scmp.ne.s32.totalorder %s95, %s96
      %p108 = scmp.eq.s32.totalorder %s23, 1
      %p109 = por %p107, %p108
      %p111 = scmp.ne.s32.totalorder %s96, %s110
      %p112 = scmp.eq.s32.totalorder %s23, 0
      %p113 = por %p111, %p112
      %s114 = ssub.s32 %s17, %s24
      %p115 = scmp.eq.s32.totalorder %s114, 0
      %s117 = sadd.s32 %s116, 1
      %s118 = scalar_select %p115, %s116, %s117
      %p121 = pneg %p115
      %p122 = scmp.eq.s32.totalorder %s17, 1
      %p123 = por %p121, %p122
      %p124 = scmp.ne.s32.totalorder %s116, %s119
      %p125 = scmp.eq.s32.totalorder %s17, 0
      %p126 = por %p124, %p125
      %p127 = scmp.ne.s32.totalorder %s116, %s119
      %p128 = scmp.eq.s32.totalorder %s22, 1
      %p129 = por %p127, %p128
      %p130 = scmp.ne.s32.totalorder %s119, %s120
      %p131 = scmp.eq.s32.totalorder %s22, 0
      %p132 = por %p130, %p131
      %p133 = scmp.ne.s32.totalorder %s119, %s120
      %p134 = scmp.eq.s32.totalorder %s23, 1
      %p135 = por %p133, %p134
      %p137 = scmp.ne.s32.totalorder %s120, %s136
      %p138 = scmp.eq.s32.totalorder %s23, 0
      %p139 = por %p137, %p138
      %p140 = scmp.le.s32.totalorder 1, %s17
      %p141 = scmp.lt.s32.totalorder %s17, 3
      %p142 = pnand %p140, %p141
      %p143 = pneg %p142
      // Predicated region
      $region9: #{tpu_custom_call.1} parent=5 // pred_check
        _
      $region10: #{tpu_custom_call.1} parent=5 // pred_check_branch
        %145 = sbr.rel (%p142) target = $region12
      $region11: #{tpu_custom_call.1} parent=5 // pred_region
        %s146 = ssub.s32 %s17, 1
        // Predicated region
        $region13: #{tpu_custom_call.1} parent=11 // pred_check
          %p147 = pneg %p64
        $region14: #{tpu_custom_call.1} parent=11 // pred_check_branch
          %149 = sbr.rel (%p147) target = $region16
        $region15: #{tpu_custom_call.1} parent=11 // pred_region
          %s151 = ssub.s32 1664, 1664
          %152 = vsyncadd [#allocation6], %s151
          %s153 = sshll.u32 [#allocation5], 4
          %s154 = int_to_ptr.vmem [resolvable:$true] %s153
          %159 = dma.hbm_to_vmem [thread:$0]  %s1, 1664, %s154, [#allocation6], 128, 128, 8
        $region16: #{tpu_custom_call.1} parent=11 // pred_fallthru
          _
        // Predicated region
        $region17: #{tpu_custom_call.1} parent=11 // pred_check
          %p160 = pneg %p85
        $region18: #{tpu_custom_call.1} parent=11 // pred_check_branch
          %162 = sbr.rel (%p160) target = $region20
        $region19: #{tpu_custom_call.1} parent=11 // pred_region
          %s164 = ssub.s32 1664, 1664
          %165 = vsyncadd [#allocation6], %s164
          %s166 = sshll.u32 [#allocation7], 4
          %s167 = int_to_ptr.vmem [resolvable:$true] %s166
          %172 = dma.hbm_to_vmem [thread:$0]  %s2, 1664, %s167, [#allocation6], 128, 128, 8
        $region20: #{tpu_custom_call.1} parent=11 // pred_fallthru
          _
        // Predicated region
        $region21: #{tpu_custom_call.1} parent=11 // pred_check
          %p173 = pneg %p106
        $region22: #{tpu_custom_call.1} parent=11 // pred_check_branch
          %175 = sbr.rel (%p173) target = $region24
        $region23: #{tpu_custom_call.1} parent=11 // pred_region
          _
        $region24: #{tpu_custom_call.1} parent=11 // pred_fallthru
          _
      $region12: #{tpu_custom_call.1} parent=5 // pred_fallthru
        _
      %p176 = scmp.lt.s32.totalorder %s17, 2
      // Predicated region
      $region25: #{tpu_custom_call.1} parent=5 // pred_check
        %p177 = pneg %p176
      $region26: #{tpu_custom_call.1} parent=5 // pred_check_branch
        %179 = sbr.rel (%p177) target = $region28
      $region27: #{tpu_custom_call.1} parent=5 // pred_region
        // Predicated region
        $region29: #{tpu_custom_call.1} parent=27 // pred_check
          %p180 = pneg %p37
        $region30: #{tpu_custom_call.1} parent=27 // pred_check_branch
          %182 = sbr.rel (%p180) target = $region32
        $region31: #{tpu_custom_call.1} parent=27 // pred_region
          %s183 = sand.u32 %s27, 1
          %s184 = scalar_lea.sflag [#allocation3], %s183
          %s185 = sand.u32 %s27, 1
          %s186 = smul.addr %s185, 64
          %s187 = scalar_lea.vmem [#allocation2], %s186
          %s188 = smul.u32 8, %s17
          %s190 = ssub.s32 1024, 1024
          %191 = vsyncadd %s184, %s190
          %s192 = smul.addr %s188, 128
          %s193 = scalar_lea.hbm %s0, %s192
          %s194 = sshll.u32 %s187, 4
          %s195 = int_to_ptr.vmem [resolvable:$true] %s194
          %200 = dma.hbm_to_vmem [thread:$0]  %s193, 1024, %s195, %s184, 128, 128, 8
        $region32: #{tpu_custom_call.1} parent=27 // pred_fallthru
          _
      $region28: #{tpu_custom_call.1} parent=5 // pred_fallthru
        _
      %p201 = scmp.le.s32.totalorder 1, %s17
      %p202 = scmp.lt.s32.totalorder %s17, 3
      %p203 = pnand %p201, %p202
      %p204 = pneg %p203
      // Predicated region
      $region33: #{tpu_custom_call.1} parent=5 // pred_check
        _
      $region34: #{tpu_custom_call.1} parent=5 // pred_check_branch
        %206 = sbr.rel (%p203) target = $region36
      $region35: #{tpu_custom_call.1} parent=5 // pred_region
        %s207 = ssub.s32 %s17, 1
        %s208 = sand.u32 %s30, 1
        %s209 = scalar_lea.sflag [#allocation3], %s208
        %s210 = sand.u32 %s30, 1
        %s211 = smul.addr %s210, 64
        %s212 = scalar_lea.vmem [#allocation2], %s211
        // Predicated region
        $region37: #{tpu_custom_call.1} parent=35 // pred_check
          %p213 = pneg %p43
        $region38: #{tpu_custom_call.1} parent=35 // pred_check_branch
          %215 = sbr.rel (%p213) target = $region40
        $region39: #{tpu_custom_call.1} parent=35 // pred_region
          %216 = dma.done %s209, 1024
        $region40: #{tpu_custom_call.1} parent=35 // pred_fallthru
          _
        // Predicated region
        $region41: #{tpu_custom_call.1} parent=35 // pred_check
          %p217 = pneg %p64
        $region42: #{tpu_custom_call.1} parent=35 // pred_check_branch
          %219 = sbr.rel (%p217) target = $region44
        $region43: #{tpu_custom_call.1} parent=35 // pred_region
          %220 = dma.done [#allocation6], 1664
        $region44: #{tpu_custom_call.1} parent=35 // pred_fallthru
          _
        // Predicated region
        $region45: #{tpu_custom_call.1} parent=35 // pred_check
          %p221 = pneg %p85
        $region46: #{tpu_custom_call.1} parent=35 // pred_check_branch
          %223 = sbr.rel (%p221) target = $region48
        $region47: #{tpu_custom_call.1} parent=35 // pred_region
          %224 = dma.done [#allocation6], 1664
        $region48: #{tpu_custom_call.1} parent=35 // pred_fallthru
          _
        %s225 = sand.u32 %s30, 1
        %s226 = scalar_lea.sflag [#allocation3], %s225
        %s227 = sand.u32 %s30, 1
        %s228 = smul.addr %s227, 64
        %s229 = scalar_lea.vmem [#allocation2], %s228
        %p230 = pneg %p43
        %p231 = pneg %p40
        %p232 = pneg %p64
        %p233 = pneg %p61
        %p234 = pneg %p85
        %p235 = pneg %p82
        %p236 = pneg %p106
        %p237 = pneg %p103
        %p238 = pneg %p132
        %p239 = pneg %p129
        %s240 = sand.u32 %s119, 1
        %s241 = scalar_lea.sflag [#allocation4], %s240
        %s242 = sand.u32 %s119, 1
        %s243 = smul.addr %s242, 64
        %s244 = scalar_lea.vmem [#allocation8], %s243
        %s245 = smul.u32 8, %s22
        %s246 = smul.u32 8, %s22
        %v247 = vld [vmem:[%s3] sm:$0x1]
        %v248 = vld [vmem:[%s3 + $0x1] sm:$0x1]
        %v249 = vld [vmem:[%s3 + $0x2] sm:$0x1]
        %v250 = vld [vmem:[%s212] sm:$0xff]
        %v251 = vld [vmem:[%s212 + $0x8] sm:$0xff]
        %v252 = vld [vmem:[%s212 + $0x10] sm:$0xff]
        %v253 = vld [vmem:[%s212 + $0x18] sm:$0xff]
        %v254 = vld [vmem:[%s212 + $0x20] sm:$0xff]
        %v255 = vld [vmem:[%s212 + $0x28] sm:$0xff]
        %v256 = vld [vmem:[%s212 + $0x30] sm:$0xff]
        %v257 = vld [vmem:[%s212 + $0x38] sm:$0xff]
        %v258 = vlaneseq
        %v259 = vshrl.u32 %v258, 7
        %v260 = vsub.s32 0, %v259
        %v261 = vrot.slane %v247, %v260
        %v262 = vsub.f32 %v250, %v261
        %v263 = vsub.f32 %v251, %v261
        %v264 = vsub.f32 %v252, %v261
        %v265 = vsub.f32 %v253, %v261
        %v266 = vsub.f32 %v254, %v261
        %v267 = vsub.f32 %v255, %v261
        %v268 = vsub.f32 %v256, %v261
        %v269 = vsub.f32 %v257, %v261
        %v270 = vlaneseq
        %v271 = vshrl.u32 %v270, 7
        %v272 = vsub.s32 0, %v271
        %v273 = vrot.slane %v248, %v272
        %v274 = vmul.f32 %v273, %v262
        %v275 = vmul.f32 %v273, %v263
        %v276 = vmul.f32 %v273, %v264
        %v277 = vmul.f32 %v273, %v265
        %v278 = vmul.f32 %v273, %v266
        %v279 = vmul.f32 %v273, %v267
        %v280 = vmul.f32 %v273, %v268
        %v281 = vmul.f32 %v273, %v269
        %v282 = vlaneseq
        %v283 = vshrl.u32 %v282, 7
        %v284 = vsub.s32 0, %v283
        %v285 = vrot.slane %v249, %v284
        %v286 = vadd.f32 %v285, %v274
        %v287 = vadd.f32 %v285, %v275
        %v288 = vadd.f32 %v285, %v276
        %v289 = vadd.f32 %v285, %v277
        %v290 = vadd.f32 %v285, %v278
        %v291 = vadd.f32 %v285, %v279
        %v292 = vadd.f32 %v285, %v280
        %v293 = vadd.f32 %v285, %v281
        %v294 = vld [vmem:[#allocation5] sm:$0x1]
        %v295 = vld [vmem:[#allocation7] sm:$0x1]
        %v296 = vlaneseq
        %v297 = vshrl.u32 %v296, 7
        %v298 = vsub.s32 0, %v297
        %v299 = vrot.slane %v294, %v298
        %v300 = vsub.f32 %v250, %v299
        %v301 = vsub.f32 %v251, %v299
        %v302 = vsub.f32 %v252, %v299
        %v303 = vsub.f32 %v253, %v299
        %v304 = vsub.f32 %v254, %v299
        %v305 = vsub.f32 %v255, %v299
        %v306 = vsub.f32 %v256, %v299
        %v307 = vsub.f32 %v257, %v299
        %v308 = vmax.f32 %v300, 0.0
        %v309 = vmax.f32 %v301, 0.0
        %v310 = vmax.f32 %v302, 0.0
        %v311 = vmax.f32 %v303, 0.0
        %v312 = vmax.f32 %v304, 0.0
        %v313 = vmax.f32 %v305, 0.0
        %v314 = vmax.f32 %v306, 0.0
        %v315 = vmax.f32 %v307, 0.0
        %v316 = vlaneseq
        %v317 = vshrl.u32 %v316, 7
        %v318 = vsub.s32 0, %v317
        %v319 = vrot.slane %v295, %v318
        %v320 = vmul.f32 %v319, %v308
        %v321 = vmul.f32 %v319, %v309
        %v322 = vmul.f32 %v319, %v310
        %v323 = vmul.f32 %v319, %v311
        %v324 = vmul.f32 %v319, %v312
        %v325 = vmul.f32 %v319, %v313
        %v326 = vmul.f32 %v319, %v314
        %v327 = vmul.f32 %v319, %v315
        %v328 = vadd.f32 %v286, %v320
        %v329 = vadd.f32 %v287, %v321
        %v330 = vadd.f32 %v288, %v322
        %v331 = vadd.f32 %v289, %v323
        %v332 = vadd.f32 %v290, %v324
        %v333 = vadd.f32 %v291, %v325
        %v334 = vadd.f32 %v292, %v326
        %v335 = vadd.f32 %v293, %v327
        %v336 = vld [vmem:[#allocation5 + $0x1] sm:$0x1]
        %v337 = vld [vmem:[#allocation7 + $0x1] sm:$0x1]
        %v338 = vlaneseq
        %v339 = vshrl.u32 %v338, 7
        %v340 = vsub.s32 0, %v339
        %v341 = vrot.slane %v336, %v340
        %v342 = vsub.f32 %v250, %v341
        %v343 = vsub.f32 %v251, %v341
        %v344 = vsub.f32 %v252, %v341
        %v345 = vsub.f32 %v253, %v341
        %v346 = vsub.f32 %v254, %v341
        %v347 = vsub.f32 %v255, %v341
        %v348 = vsub.f32 %v256, %v341
        %v349 = vsub.f32 %v257, %v341
        %v350 = vmax.f32 %v342, 0.0
        %v351 = vmax.f32 %v343, 0.0
        %v352 = vmax.f32 %v344, 0.0
        %v353 = vmax.f32 %v345, 0.0
        %v354 = vmax.f32 %v346, 0.0
        %v355 = vmax.f32 %v347, 0.0
        %v356 = vmax.f32 %v348, 0.0
        %v357 = vmax.f32 %v349, 0.0
        %v358 = vlaneseq
        %v359 = vshrl.u32 %v358, 7
        %v360 = vsub.s32 0, %v359
        %v361 = vrot.slane %v337, %v360
        %v362 = vmul.f32 %v361, %v350
        %v363 = vmul.f32 %v361, %v351
        %v364 = vmul.f32 %v361, %v352
        %v365 = vmul.f32 %v361, %v353
        %v366 = vmul.f32 %v361, %v354
        %v367 = vmul.f32 %v361, %v355
        %v368 = vmul.f32 %v361, %v356
        %v369 = vmul.f32 %v361, %v357
        %v370 = vadd.f32 %v328, %v362
        %v371 = vadd.f32 %v329, %v363
        %v372 = vadd.f32 %v330, %v364
        %v373 = vadd.f32 %v331, %v365
        %v374 = vadd.f32 %v332, %v366
        %v375 = vadd.f32 %v333, %v367
        %v376 = vadd.f32 %v334, %v368
        %v377 = vadd.f32 %v335, %v369
        %v378 = vld [vmem:[#allocation5 + $0x2] sm:$0x1]
        %v379 = vld [vmem:[#allocation7 + $0x2] sm:$0x1]
        %v380 = vlaneseq
        %v381 = vshrl.u32 %v380, 7
        %v382 = vsub.s32 0, %v381
        %v383 = vrot.slane %v378, %v382
        %v384 = vsub.f32 %v250, %v383
        %v385 = vsub.f32 %v251, %v383
        %v386 = vsub.f32 %v252, %v383
        %v387 = vsub.f32 %v253, %v383
        %v388 = vsub.f32 %v254, %v383
        %v389 = vsub.f32 %v255, %v383
        %v390 = vsub.f32 %v256, %v383
        %v391 = vsub.f32 %v257, %v383
        %v392 = vmax.f32 %v384, 0.0
        %v393 = vmax.f32 %v385, 0.0
        %v394 = vmax.f32 %v386, 0.0
        %v395 = vmax.f32 %v387, 0.0
        %v396 = vmax.f32 %v388, 0.0
        %v397 = vmax.f32 %v389, 0.0
        %v398 = vmax.f32 %v390, 0.0
        %v399 = vmax.f32 %v391, 0.0
        %v400 = vlaneseq
        %v401 = vshrl.u32 %v400, 7
        %v402 = vsub.s32 0, %v401
        %v403 = vrot.slane %v379, %v402
        %v404 = vmul.f32 %v403, %v392
        %v405 = vmul.f32 %v403, %v393
        %v406 = vmul.f32 %v403, %v394
        %v407 = vmul.f32 %v403, %v395
        %v408 = vmul.f32 %v403, %v396
        %v409 = vmul.f32 %v403, %v397
        %v410 = vmul.f32 %v403, %v398
        %v411 = vmul.f32 %v403, %v399
        %v412 = vadd.f32 %v370, %v404
        %v413 = vadd.f32 %v371, %v405
        %v414 = vadd.f32 %v372, %v406
        %v415 = vadd.f32 %v373, %v407
        %v416 = vadd.f32 %v374, %v408
        %v417 = vadd.f32 %v375, %v409
        %v418 = vadd.f32 %v376, %v410
        %v419 = vadd.f32 %v377, %v411
        %v420 = vld [vmem:[#allocation5 + $0x3] sm:$0x1]
        %v421 = vld [vmem:[#allocation7 + $0x3] sm:$0x1]
        %v422 = vlaneseq
        %v423 = vshrl.u32 %v422, 7
        %v424 = vsub.s32 0, %v423
        %v425 = vrot.slane %v420, %v424
        %v426 = vsub.f32 %v250, %v425
        %v427 = vsub.f32 %v251, %v425
        %v428 = vsub.f32 %v252, %v425
        %v429 = vsub.f32 %v253, %v425
        %v430 = vsub.f32 %v254, %v425
        %v431 = vsub.f32 %v255, %v425
        %v432 = vsub.f32 %v256, %v425
        %v433 = vsub.f32 %v257, %v425
        %v434 = vmax.f32 %v426, 0.0
        %v435 = vmax.f32 %v427, 0.0
        %v436 = vmax.f32 %v428, 0.0
        %v437 = vmax.f32 %v429, 0.0
        %v438 = vmax.f32 %v430, 0.0
        %v439 = vmax.f32 %v431, 0.0
        %v440 = vmax.f32 %v432, 0.0
        %v441 = vmax.f32 %v433, 0.0
        %v442 = vlaneseq
        %v443 = vshrl.u32 %v442, 7
        %v444 = vsub.s32 0, %v443
        %v445 = vrot.slane %v421, %v444
        %v446 = vmul.f32 %v445, %v434
        %v447 = vmul.f32 %v445, %v435
        %v448 = vmul.f32 %v445, %v436
        %v449 = vmul.f32 %v445, %v437
        %v450 = vmul.f32 %v445, %v438
        %v451 = vmul.f32 %v445, %v439
        %v452 = vmul.f32 %v445, %v440
        %v453 = vmul.f32 %v445, %v441
        %v454 = vadd.f32 %v412, %v446
        %v455 = vadd.f32 %v413, %v447
        %v456 = vadd.f32 %v414, %v448
        %v457 = vadd.f32 %v415, %v449
        %v458 = vadd.f32 %v416, %v450
        %v459 = vadd.f32 %v417, %v451
        %v460 = vadd.f32 %v418, %v452
        %v461 = vadd.f32 %v419, %v453
        %v462 = vld [vmem:[#allocation5 + $0x4] sm:$0x1]
        %v463 = vld [vmem:[#allocation7 + $0x4] sm:$0x1]
        %v464 = vlaneseq
        %v465 = vshrl.u32 %v464, 7
        %v466 = vsub.s32 0, %v465
        %v467 = vrot.slane %v462, %v466
        %v468 = vsub.f32 %v250, %v467
        %v469 = vsub.f32 %v251, %v467
        %v470 = vsub.f32 %v252, %v467
        %v471 = vsub.f32 %v253, %v467
        %v472 = vsub.f32 %v254, %v467
        %v473 = vsub.f32 %v255, %v467
        %v474 = vsub.f32 %v256, %v467
        %v475 = vsub.f32 %v257, %v467
        %v476 = vmax.f32 %v468, 0.0
        %v477 = vmax.f32 %v469, 0.0
        %v478 = vmax.f32 %v470, 0.0
        %v479 = vmax.f32 %v471, 0.0
        %v480 = vmax.f32 %v472, 0.0
        %v481 = vmax.f32 %v473, 0.0
        %v482 = vmax.f32 %v474, 0.0
        %v483 = vmax.f32 %v475, 0.0
        %v484 = vlaneseq
        %v485 = vshrl.u32 %v484, 7
        %v486 = vsub.s32 0, %v485
        %v487 = vrot.slane %v463, %v486
        %v488 = vmul.f32 %v487, %v476
        %v489 = vmul.f32 %v487, %v477
        %v490 = vmul.f32 %v487, %v478
        %v491 = vmul.f32 %v487, %v479
        %v492 = vmul.f32 %v487, %v480
        %v493 = vmul.f32 %v487, %v481
        %v494 = vmul.f32 %v487, %v482
        %v495 = vmul.f32 %v487, %v483
        %v496 = vadd.f32 %v454, %v488
        %v497 = vadd.f32 %v455, %v489
        %v498 = vadd.f32 %v456, %v490
        %v499 = vadd.f32 %v457, %v491
        %v500 = vadd.f32 %v458, %v492
        %v501 = vadd.f32 %v459, %v493
        %v502 = vadd.f32 %v460, %v494
        %v503 = vadd.f32 %v461, %v495
        %v504 = vld [vmem:[#allocation5 + $0x5] sm:$0x1]
        %v505 = vld [vmem:[#allocation7 + $0x5] sm:$0x1]
        %v506 = vlaneseq
        %v507 = vshrl.u32 %v506, 7
        %v508 = vsub.s32 0, %v507
        %v509 = vrot.slane %v504, %v508
        %v510 = vsub.f32 %v250, %v509
        %v511 = vsub.f32 %v251, %v509
        %v512 = vsub.f32 %v252, %v509
        %v513 = vsub.f32 %v253, %v509
        %v514 = vsub.f32 %v254, %v509
        %v515 = vsub.f32 %v255, %v509
        %v516 = vsub.f32 %v256, %v509
        %v517 = vsub.f32 %v257, %v509
        %v518 = vmax.f32 %v510, 0.0
        %v519 = vmax.f32 %v511, 0.0
        %v520 = vmax.f32 %v512, 0.0
        %v521 = vmax.f32 %v513, 0.0
        %v522 = vmax.f32 %v514, 0.0
        %v523 = vmax.f32 %v515, 0.0
        %v524 = vmax.f32 %v516, 0.0
        %v525 = vmax.f32 %v517, 0.0
        %v526 = vlaneseq
        %v527 = vshrl.u32 %v526, 7
        %v528 = vsub.s32 0, %v527
        %v529 = vrot.slane %v505, %v528
        %v530 = vmul.f32 %v529, %v518
        %v531 = vmul.f32 %v529, %v519
        %v532 = vmul.f32 %v529, %v520
        %v533 = vmul.f32 %v529, %v521
        %v534 = vmul.f32 %v529, %v522
        %v535 = vmul.f32 %v529, %v523
        %v536 = vmul.f32 %v529, %v524
        %v537 = vmul.f32 %v529, %v525
        %v538 = vadd.f32 %v496, %v530
        %v539 = vadd.f32 %v497, %v531
        %v540 = vadd.f32 %v498, %v532
        %v541 = vadd.f32 %v499, %v533
        %v542 = vadd.f32 %v500, %v534
        %v543 = vadd.f32 %v501, %v535
        %v544 = vadd.f32 %v502, %v536
        %v545 = vadd.f32 %v503, %v537
        %v546 = vld [vmem:[#allocation5 + $0x6] sm:$0x1]
        %v547 = vld [vmem:[#allocation7 + $0x6] sm:$0x1]
        %v548 = vlaneseq
        %v549 = vshrl.u32 %v548, 7
        %v550 = vsub.s32 0, %v549
        %v551 = vrot.slane %v546, %v550
        %v552 = vsub.f32 %v250, %v551
        %v553 = vsub.f32 %v251, %v551
        %v554 = vsub.f32 %v252, %v551
        %v555 = vsub.f32 %v253, %v551
        %v556 = vsub.f32 %v254, %v551
        %v557 = vsub.f32 %v255, %v551
        %v558 = vsub.f32 %v256, %v551
        %v559 = vsub.f32 %v257, %v551
        %v560 = vmax.f32 %v552, 0.0
        %v561 = vmax.f32 %v553, 0.0
        %v562 = vmax.f32 %v554, 0.0
        %v563 = vmax.f32 %v555, 0.0
        %v564 = vmax.f32 %v556, 0.0
        %v565 = vmax.f32 %v557, 0.0
        %v566 = vmax.f32 %v558, 0.0
        %v567 = vmax.f32 %v559, 0.0
        %v568 = vlaneseq
        %v569 = vshrl.u32 %v568, 7
        %v570 = vsub.s32 0, %v569
        %v571 = vrot.slane %v547, %v570
        %v572 = vmul.f32 %v571, %v560
        %v573 = vmul.f32 %v571, %v561
        %v574 = vmul.f32 %v571, %v562
        %v575 = vmul.f32 %v571, %v563
        %v576 = vmul.f32 %v571, %v564
        %v577 = vmul.f32 %v571, %v565
        %v578 = vmul.f32 %v571, %v566
        %v579 = vmul.f32 %v571, %v567
        %v580 = vadd.f32 %v538, %v572
        %v581 = vadd.f32 %v539, %v573
        %v582 = vadd.f32 %v540, %v574
        %v583 = vadd.f32 %v541, %v575
        %v584 = vadd.f32 %v542, %v576
        %v585 = vadd.f32 %v543, %v577
        %v586 = vadd.f32 %v544, %v578
        %v587 = vadd.f32 %v545, %v579
        %v588 = vld [vmem:[#allocation5 + $0x7] sm:$0x1]
        %v589 = vld [vmem:[#allocation7 + $0x7] sm:$0x1]
        %v590 = vlaneseq
        %v591 = vshrl.u32 %v590, 7
        %v592 = vsub.s32 0, %v591
        %v593 = vrot.slane %v588, %v592
        %v594 = vsub.f32 %v250, %v593
        %v595 = vsub.f32 %v251, %v593
        %v596 = vsub.f32 %v252, %v593
        %v597 = vsub.f32 %v253, %v593
        %v598 = vsub.f32 %v254, %v593
        %v599 = vsub.f32 %v255, %v593
        %v600 = vsub.f32 %v256, %v593
        %v601 = vsub.f32 %v257, %v593
        %v602 = vmax.f32 %v594, 0.0
        %v603 = vmax.f32 %v595, 0.0
        %v604 = vmax.f32 %v596, 0.0
        %v605 = vmax.f32 %v597, 0.0
        %v606 = vmax.f32 %v598, 0.0
        %v607 = vmax.f32 %v599, 0.0
        %v608 = vmax.f32 %v600, 0.0
        %v609 = vmax.f32 %v601, 0.0
        %v610 = vlaneseq
        %v611 = vshrl.u32 %v610, 7
        %v612 = vsub.s32 0, %v611
        %v613 = vrot.slane %v589, %v612
        %v614 = vmul.f32 %v613, %v602
        %v615 = vmul.f32 %v613, %v603
        %v616 = vmul.f32 %v613, %v604
        %v617 = vmul.f32 %v613, %v605
        %v618 = vmul.f32 %v613, %v606
        %v619 = vmul.f32 %v613, %v607
        %v620 = vmul.f32 %v613, %v608
        %v621 = vmul.f32 %v613, %v609
        %v622 = vadd.f32 %v580, %v614
        %v623 = vadd.f32 %v581, %v615
        %v624 = vadd.f32 %v582, %v616
        %v625 = vadd.f32 %v583, %v617
        %v626 = vadd.f32 %v584, %v618
        %v627 = vadd.f32 %v585, %v619
        %v628 = vadd.f32 %v586, %v620
        %v629 = vadd.f32 %v587, %v621
        %v630 = vld [vmem:[#allocation5 + $0x8] sm:$0x1]
        %v631 = vld [vmem:[#allocation7 + $0x8] sm:$0x1]
        %v632 = vlaneseq
        %v633 = vshrl.u32 %v632, 7
        %v634 = vsub.s32 0, %v633
        %v635 = vrot.slane %v630, %v634
        %v636 = vsub.f32 %v250, %v635
        %v637 = vsub.f32 %v251, %v635
        %v638 = vsub.f32 %v252, %v635
        %v639 = vsub.f32 %v253, %v635
        %v640 = vsub.f32 %v254, %v635
        %v641 = vsub.f32 %v255, %v635
        %v642 = vsub.f32 %v256, %v635
        %v643 = vsub.f32 %v257, %v635
        %v644 = vmax.f32 %v636, 0.0
        %v645 = vmax.f32 %v637, 0.0
        %v646 = vmax.f32 %v638, 0.0
        %v647 = vmax.f32 %v639, 0.0
        %v648 = vmax.f32 %v640, 0.0
        %v649 = vmax.f32 %v641, 0.0
        %v650 = vmax.f32 %v642, 0.0
        %v651 = vmax.f32 %v643, 0.0
        %v652 = vlaneseq
        %v653 = vshrl.u32 %v652, 7
        %v654 = vsub.s32 0, %v653
        %v655 = vrot.slane %v631, %v654
        %v656 = vmul.f32 %v655, %v644
        %v657 = vmul.f32 %v655, %v645
        %v658 = vmul.f32 %v655, %v646
        %v659 = vmul.f32 %v655, %v647
        %v660 = vmul.f32 %v655, %v648
        %v661 = vmul.f32 %v655, %v649
        %v662 = vmul.f32 %v655, %v650
        %v663 = vmul.f32 %v655, %v651
        %v664 = vadd.f32 %v622, %v656
        %v665 = vadd.f32 %v623, %v657
        %v666 = vadd.f32 %v624, %v658
        %v667 = vadd.f32 %v625, %v659
        %v668 = vadd.f32 %v626, %v660
        %v669 = vadd.f32 %v627, %v661
        %v670 = vadd.f32 %v628, %v662
        %v671 = vadd.f32 %v629, %v663
        %v672 = vld [vmem:[#allocation5 + $0x9] sm:$0x1]
        %v673 = vld [vmem:[#allocation7 + $0x9] sm:$0x1]
        %v674 = vlaneseq
        %v675 = vshrl.u32 %v674, 7
        %v676 = vsub.s32 0, %v675
        %v677 = vrot.slane %v672, %v676
        %v678 = vsub.f32 %v250, %v677
        %v679 = vsub.f32 %v251, %v677
        %v680 = vsub.f32 %v252, %v677
        %v681 = vsub.f32 %v253, %v677
        %v682 = vsub.f32 %v254, %v677
        %v683 = vsub.f32 %v255, %v677
        %v684 = vsub.f32 %v256, %v677
        %v685 = vsub.f32 %v257, %v677
        %v686 = vmax.f32 %v678, 0.0
        %v687 = vmax.f32 %v679, 0.0
        %v688 = vmax.f32 %v680, 0.0
        %v689 = vmax.f32 %v681, 0.0
        %v690 = vmax.f32 %v682, 0.0
        %v691 = vmax.f32 %v683, 0.0
        %v692 = vmax.f32 %v684, 0.0
        %v693 = vmax.f32 %v685, 0.0
        %v694 = vlaneseq
        %v695 = vshrl.u32 %v694, 7
        %v696 = vsub.s32 0, %v695
        %v697 = vrot.slane %v673, %v696
        %v698 = vmul.f32 %v697, %v686
        %v699 = vmul.f32 %v697, %v687
        %v700 = vmul.f32 %v697, %v688
        %v701 = vmul.f32 %v697, %v689
        %v702 = vmul.f32 %v697, %v690
        %v703 = vmul.f32 %v697, %v691
        %v704 = vmul.f32 %v697, %v692
        %v705 = vmul.f32 %v697, %v693
        %v706 = vadd.f32 %v664, %v698
        %v707 = vadd.f32 %v665, %v699
        %v708 = vadd.f32 %v666, %v700
        %v709 = vadd.f32 %v667, %v701
        %v710 = vadd.f32 %v668, %v702
        %v711 = vadd.f32 %v669, %v703
        %v712 = vadd.f32 %v670, %v704
        %v713 = vadd.f32 %v671, %v705
        %v714 = vld [vmem:[#allocation5 + $0xa] sm:$0x1]
        %v715 = vld [vmem:[#allocation7 + $0xa] sm:$0x1]
        %v716 = vlaneseq
        %v717 = vshrl.u32 %v716, 7
        %v718 = vsub.s32 0, %v717
        %v719 = vrot.slane %v714, %v718
        %v720 = vsub.f32 %v250, %v719
        %v721 = vsub.f32 %v251, %v719
        %v722 = vsub.f32 %v252, %v719
        %v723 = vsub.f32 %v253, %v719
        %v724 = vsub.f32 %v254, %v719
        %v725 = vsub.f32 %v255, %v719
        %v726 = vsub.f32 %v256, %v719
        %v727 = vsub.f32 %v257, %v719
        %v728 = vmax.f32 %v720, 0.0
        %v729 = vmax.f32 %v721, 0.0
        %v730 = vmax.f32 %v722, 0.0
        %v731 = vmax.f32 %v723, 0.0
        %v732 = vmax.f32 %v724, 0.0
        %v733 = vmax.f32 %v725, 0.0
        %v734 = vmax.f32 %v726, 0.0
        %v735 = vmax.f32 %v727, 0.0
        %v736 = vlaneseq
        %v737 = vshrl.u32 %v736, 7
        %v738 = vsub.s32 0, %v737
        %v739 = vrot.slane %v715, %v738
        %v740 = vmul.f32 %v739, %v728
        %v741 = vmul.f32 %v739, %v729
        %v742 = vmul.f32 %v739, %v730
        %v743 = vmul.f32 %v739, %v731
        %v744 = vmul.f32 %v739, %v732
        %v745 = vmul.f32 %v739, %v733
        %v746 = vmul.f32 %v739, %v734
        %v747 = vmul.f32 %v739, %v735
        %v748 = vadd.f32 %v706, %v740
        %v749 = vadd.f32 %v707, %v741
        %v750 = vadd.f32 %v708, %v742
        %v751 = vadd.f32 %v709, %v743
        %v752 = vadd.f32 %v710, %v744
        %v753 = vadd.f32 %v711, %v745
        %v754 = vadd.f32 %v712, %v746
        %v755 = vadd.f32 %v713, %v747
        %v756 = vld [vmem:[#allocation5 + $0xb] sm:$0x1]
        %v757 = vld [vmem:[#allocation7 + $0xb] sm:$0x1]
        %v758 = vlaneseq
        %v759 = vshrl.u32 %v758, 7
        %v760 = vsub.s32 0, %v759
        %v761 = vrot.slane %v756, %v760
        %v762 = vsub.f32 %v250, %v761
        %v763 = vsub.f32 %v251, %v761
        %v764 = vsub.f32 %v252, %v761
        %v765 = vsub.f32 %v253, %v761
        %v766 = vsub.f32 %v254, %v761
        %v767 = vsub.f32 %v255, %v761
        %v768 = vsub.f32 %v256, %v761
        %v769 = vsub.f32 %v257, %v761
        %v770 = vmax.f32 %v762, 0.0
        %v771 = vmax.f32 %v763, 0.0
        %v772 = vmax.f32 %v764, 0.0
        %v773 = vmax.f32 %v765, 0.0
        %v774 = vmax.f32 %v766, 0.0
        %v775 = vmax.f32 %v767, 0.0
        %v776 = vmax.f32 %v768, 0.0
        %v777 = vmax.f32 %v769, 0.0
        %v778 = vlaneseq
        %v779 = vshrl.u32 %v778, 7
        %v780 = vsub.s32 0, %v779
        %v781 = vrot.slane %v757, %v780
        %v782 = vmul.f32 %v781, %v770
        %v783 = vmul.f32 %v781, %v771
        %v784 = vmul.f32 %v781, %v772
        %v785 = vmul.f32 %v781, %v773
        %v786 = vmul.f32 %v781, %v774
        %v787 = vmul.f32 %v781, %v775
        %v788 = vmul.f32 %v781, %v776
        %v789 = vmul.f32 %v781, %v777
        %v790 = vadd.f32 %v748, %v782
        %v791 = vadd.f32 %v749, %v783
        %v792 = vadd.f32 %v750, %v784
        %v793 = vadd.f32 %v751, %v785
        %v794 = vadd.f32 %v752, %v786
        %v795 = vadd.f32 %v753, %v787
        %v796 = vadd.f32 %v754, %v788
        %v797 = vadd.f32 %v755, %v789
        %v798 = vld [vmem:[#allocation5 + $0xc] sm:$0x1]
        %v799 = vld [vmem:[#allocation7 + $0xc] sm:$0x1]
        %v800 = vlaneseq
        %v801 = vshrl.u32 %v800, 7
        %v802 = vsub.s32 0, %v801
        %v803 = vrot.slane %v798, %v802
        %v804 = vsub.f32 %v250, %v803
        %v805 = vsub.f32 %v251, %v803
        %v806 = vsub.f32 %v252, %v803
        %v807 = vsub.f32 %v253, %v803
        %v808 = vsub.f32 %v254, %v803
        %v809 = vsub.f32 %v255, %v803
        %v810 = vsub.f32 %v256, %v803
        %v811 = vsub.f32 %v257, %v803
        %v812 = vmax.f32 %v804, 0.0
        %v813 = vmax.f32 %v805, 0.0
        %v814 = vmax.f32 %v806, 0.0
        %v815 = vmax.f32 %v807, 0.0
        %v816 = vmax.f32 %v808, 0.0
        %v817 = vmax.f32 %v809, 0.0
        %v818 = vmax.f32 %v810, 0.0
        %v819 = vmax.f32 %v811, 0.0
        %v820 = vlaneseq
        %v821 = vshrl.u32 %v820, 7
        %v822 = vsub.s32 0, %v821
        %v823 = vrot.slane %v799, %v822
        %v824 = vmul.f32 %v823, %v812
        %v825 = vmul.f32 %v823, %v813
        %v826 = vmul.f32 %v823, %v814
        %v827 = vmul.f32 %v823, %v815
        %v828 = vmul.f32 %v823, %v816
        %v829 = vmul.f32 %v823, %v817
        %v830 = vmul.f32 %v823, %v818
        %v831 = vmul.f32 %v823, %v819
        %v832 = vadd.f32 %v790, %v824
        %v833 = vadd.f32 %v791, %v825
        %v834 = vadd.f32 %v792, %v826
        %v835 = vadd.f32 %v793, %v827
        %v836 = vadd.f32 %v794, %v828
        %v837 = vadd.f32 %v795, %v829
        %v838 = vadd.f32 %v796, %v830
        %v839 = vadd.f32 %v797, %v831
        %v840 = vld [vmem:[#allocation5 + $0xd] sm:$0x1]
        %v841 = vld [vmem:[#allocation7 + $0xd] sm:$0x1]
        %v842 = vlaneseq
        %v843 = vshrl.u32 %v842, 7
        %v844 = vsub.s32 0, %v843
        %v845 = vrot.slane %v840, %v844
        %v846 = vsub.f32 %v250, %v845
        %v847 = vsub.f32 %v251, %v845
        %v848 = vsub.f32 %v252, %v845
        %v849 = vsub.f32 %v253, %v845
        %v850 = vsub.f32 %v254, %v845
        %v851 = vsub.f32 %v255, %v845
        %v852 = vsub.f32 %v256, %v845
        %v853 = vsub.f32 %v257, %v845
        %v854 = vmax.f32 %v846, 0.0
        %v855 = vmax.f32 %v847, 0.0
        %v856 = vmax.f32 %v848, 0.0
        %v857 = vmax.f32 %v849, 0.0
        %v858 = vmax.f32 %v850, 0.0
        %v859 = vmax.f32 %v851, 0.0
        %v860 = vmax.f32 %v852, 0.0
        %v861 = vmax.f32 %v853, 0.0
        %v862 = vlaneseq
        %v863 = vshrl.u32 %v862, 7
        %v864 = vsub.s32 0, %v863
        %v865 = vrot.slane %v841, %v864
        %v866 = vmul.f32 %v865, %v854
        %v867 = vmul.f32 %v865, %v855
        %v868 = vmul.f32 %v865, %v856
        %v869 = vmul.f32 %v865, %v857
        %v870 = vmul.f32 %v865, %v858
        %v871 = vmul.f32 %v865, %v859
        %v872 = vmul.f32 %v865, %v860
        %v873 = vmul.f32 %v865, %v861
        %v874 = vadd.f32 %v832, %v866
        %v875 = vadd.f32 %v833, %v867
        %v876 = vadd.f32 %v834, %v868
        %v877 = vadd.f32 %v835, %v869
        %v878 = vadd.f32 %v836, %v870
        %v879 = vadd.f32 %v837, %v871
        %v880 = vadd.f32 %v838, %v872
        %v881 = vadd.f32 %v839, %v873
        %v882 = vld [vmem:[#allocation5 + $0xe] sm:$0x1]
        %v883 = vld [vmem:[#allocation7 + $0xe] sm:$0x1]
        %v884 = vlaneseq
        %v885 = vshrl.u32 %v884, 7
        %v886 = vsub.s32 0, %v885
        %v887 = vrot.slane %v882, %v886
        %v888 = vsub.f32 %v250, %v887
        %v889 = vsub.f32 %v251, %v887
        %v890 = vsub.f32 %v252, %v887
        %v891 = vsub.f32 %v253, %v887
        %v892 = vsub.f32 %v254, %v887
        %v893 = vsub.f32 %v255, %v887
        %v894 = vsub.f32 %v256, %v887
        %v895 = vsub.f32 %v257, %v887
        %v896 = vmax.f32 %v888, 0.0
        %v897 = vmax.f32 %v889, 0.0
        %v898 = vmax.f32 %v890, 0.0
        %v899 = vmax.f32 %v891, 0.0
        %v900 = vmax.f32 %v892, 0.0
        %v901 = vmax.f32 %v893, 0.0
        %v902 = vmax.f32 %v894, 0.0
        %v903 = vmax.f32 %v895, 0.0
        %v904 = vlaneseq
        %v905 = vshrl.u32 %v904, 7
        %v906 = vsub.s32 0, %v905
        %v907 = vrot.slane %v883, %v906
        %v908 = vmul.f32 %v907, %v896
        %v909 = vmul.f32 %v907, %v897
        %v910 = vmul.f32 %v907, %v898
        %v911 = vmul.f32 %v907, %v899
        %v912 = vmul.f32 %v907, %v900
        %v913 = vmul.f32 %v907, %v901
        %v914 = vmul.f32 %v907, %v902
        %v915 = vmul.f32 %v907, %v903
        %v916 = vadd.f32 %v874, %v908
        %v917 = vadd.f32 %v875, %v909
        %v918 = vadd.f32 %v876, %v910
        %v919 = vadd.f32 %v877, %v911
        %v920 = vadd.f32 %v878, %v912
        %v921 = vadd.f32 %v879, %v913
        %v922 = vadd.f32 %v880, %v914
        %v923 = vadd.f32 %v881, %v915
        %v924 = vld [vmem:[#allocation5 + $0xf] sm:$0x1]
        %v925 = vld [vmem:[#allocation7 + $0xf] sm:$0x1]
        %v926 = vlaneseq
        %v927 = vshrl.u32 %v926, 7
        %v928 = vsub.s32 0, %v927
        %v929 = vrot.slane %v924, %v928
        %v930 = vsub.f32 %v250, %v929
        %v931 = vsub.f32 %v251, %v929
        %v932 = vsub.f32 %v252, %v929
        %v933 = vsub.f32 %v253, %v929
        %v934 = vsub.f32 %v254, %v929
        %v935 = vsub.f32 %v255, %v929
        %v936 = vsub.f32 %v256, %v929
        %v937 = vsub.f32 %v257, %v929
        %v938 = vmax.f32 %v930, 0.0
        %v939 = vmax.f32 %v931, 0.0
        %v940 = vmax.f32 %v932, 0.0
        %v941 = vmax.f32 %v933, 0.0
        %v942 = vmax.f32 %v934, 0.0
        %v943 = vmax.f32 %v935, 0.0
        %v944 = vmax.f32 %v936, 0.0
        %v945 = vmax.f32 %v937, 0.0
        %v946 = vlaneseq
        %v947 = vshrl.u32 %v946, 7
        %v948 = vsub.s32 0, %v947
        %v949 = vrot.slane %v925, %v948
        %v950 = vmul.f32 %v949, %v938
        %v951 = vmul.f32 %v949, %v939
        %v952 = vmul.f32 %v949, %v940
        %v953 = vmul.f32 %v949, %v941
        %v954 = vmul.f32 %v949, %v942
        %v955 = vmul.f32 %v949, %v943
        %v956 = vmul.f32 %v949, %v944
        %v957 = vmul.f32 %v949, %v945
        %v958 = vadd.f32 %v916, %v950
        %v959 = vadd.f32 %v917, %v951
        %v960 = vadd.f32 %v918, %v952
        %v961 = vadd.f32 %v919, %v953
        %v962 = vadd.f32 %v920, %v954
        %v963 = vadd.f32 %v921, %v955
        %v964 = vadd.f32 %v922, %v956
        %v965 = vadd.f32 %v923, %v957
        %v966 = vld [vmem:[#allocation5 + $0x10] sm:$0x1]
        %v967 = vld [vmem:[#allocation7 + $0x10] sm:$0x1]
        %v968 = vlaneseq
        %v969 = vshrl.u32 %v968, 7
        %v970 = vsub.s32 0, %v969
        %v971 = vrot.slane %v966, %v970
        %v972 = vsub.f32 %v250, %v971
        %v973 = vsub.f32 %v251, %v971
        %v974 = vsub.f32 %v252, %v971
        %v975 = vsub.f32 %v253, %v971
        %v976 = vsub.f32 %v254, %v971
        %v977 = vsub.f32 %v255, %v971
        %v978 = vsub.f32 %v256, %v971
        %v979 = vsub.f32 %v257, %v971
        %v980 = vmax.f32 %v972, 0.0
        %v981 = vmax.f32 %v973, 0.0
        %v982 = vmax.f32 %v974, 0.0
        %v983 = vmax.f32 %v975, 0.0
        %v984 = vmax.f32 %v976, 0.0
        %v985 = vmax.f32 %v977, 0.0
        %v986 = vmax.f32 %v978, 0.0
        %v987 = vmax.f32 %v979, 0.0
        %v988 = vlaneseq
        %v989 = vshrl.u32 %v988, 7
        %v990 = vsub.s32 0, %v989
        %v991 = vrot.slane %v967, %v990
        %v992 = vmul.f32 %v991, %v980
        %v993 = vmul.f32 %v991, %v981
        %v994 = vmul.f32 %v991, %v982
        %v995 = vmul.f32 %v991, %v983
        %v996 = vmul.f32 %v991, %v984
        %v997 = vmul.f32 %v991, %v985
        %v998 = vmul.f32 %v991, %v986
        %v999 = vmul.f32 %v991, %v987
        %v1000 = vadd.f32 %v958, %v992
        %v1001 = vadd.f32 %v959, %v993
        %v1002 = vadd.f32 %v960, %v994
        %v1003 = vadd.f32 %v961, %v995
        %v1004 = vadd.f32 %v962, %v996
        %v1005 = vadd.f32 %v963, %v997
        %v1006 = vadd.f32 %v964, %v998
        %v1007 = vadd.f32 %v965, %v999
        %v1008 = vld [vmem:[#allocation5 + $0x11] sm:$0x1]
        %v1009 = vld [vmem:[#allocation7 + $0x11] sm:$0x1]
        %v1010 = vlaneseq
        %v1011 = vshrl.u32 %v1010, 7
        %v1012 = vsub.s32 0, %v1011
        %v1013 = vrot.slane %v1008, %v1012
        %v1014 = vsub.f32 %v250, %v1013
        %v1015 = vsub.f32 %v251, %v1013
        %v1016 = vsub.f32 %v252, %v1013
        %v1017 = vsub.f32 %v253, %v1013
        %v1018 = vsub.f32 %v254, %v1013
        %v1019 = vsub.f32 %v255, %v1013
        %v1020 = vsub.f32 %v256, %v1013
        %v1021 = vsub.f32 %v257, %v1013
        %v1022 = vmax.f32 %v1014, 0.0
        %v1023 = vmax.f32 %v1015, 0.0
        %v1024 = vmax.f32 %v1016, 0.0
        %v1025 = vmax.f32 %v1017, 0.0
        %v1026 = vmax.f32 %v1018, 0.0
        %v1027 = vmax.f32 %v1019, 0.0
        %v1028 = vmax.f32 %v1020, 0.0
        %v1029 = vmax.f32 %v1021, 0.0
        %v1030 = vlaneseq
        %v1031 = vshrl.u32 %v1030, 7
        %v1032 = vsub.s32 0, %v1031
        %v1033 = vrot.slane %v1009, %v1032
        %v1034 = vmul.f32 %v1033, %v1022
        %v1035 = vmul.f32 %v1033, %v1023
        %v1036 = vmul.f32 %v1033, %v1024
        %v1037 = vmul.f32 %v1033, %v1025
        %v1038 = vmul.f32 %v1033, %v1026
        %v1039 = vmul.f32 %v1033, %v1027
        %v1040 = vmul.f32 %v1033, %v1028
        %v1041 = vmul.f32 %v1033, %v1029
        %v1042 = vadd.f32 %v1000, %v1034
        %v1043 = vadd.f32 %v1001, %v1035
        %v1044 = vadd.f32 %v1002, %v1036
        %v1045 = vadd.f32 %v1003, %v1037
        %v1046 = vadd.f32 %v1004, %v1038
        %v1047 = vadd.f32 %v1005, %v1039
        %v1048 = vadd.f32 %v1006, %v1040
        %v1049 = vadd.f32 %v1007, %v1041
        %v1050 = vld [vmem:[#allocation5 + $0x12] sm:$0x1]
        %v1051 = vld [vmem:[#allocation7 + $0x12] sm:$0x1]
        %v1052 = vlaneseq
        %v1053 = vshrl.u32 %v1052, 7
        %v1054 = vsub.s32 0, %v1053
        %v1055 = vrot.slane %v1050, %v1054
        %v1056 = vsub.f32 %v250, %v1055
        %v1057 = vsub.f32 %v251, %v1055
        %v1058 = vsub.f32 %v252, %v1055
        %v1059 = vsub.f32 %v253, %v1055
        %v1060 = vsub.f32 %v254, %v1055
        %v1061 = vsub.f32 %v255, %v1055
        %v1062 = vsub.f32 %v256, %v1055
        %v1063 = vsub.f32 %v257, %v1055
        %v1064 = vmax.f32 %v1056, 0.0
        %v1065 = vmax.f32 %v1057, 0.0
        %v1066 = vmax.f32 %v1058, 0.0
        %v1067 = vmax.f32 %v1059, 0.0
        %v1068 = vmax.f32 %v1060, 0.0
        %v1069 = vmax.f32 %v1061, 0.0
        %v1070 = vmax.f32 %v1062, 0.0
        %v1071 = vmax.f32 %v1063, 0.0
        %v1072 = vlaneseq
        %v1073 = vshrl.u32 %v1072, 7
        %v1074 = vsub.s32 0, %v1073
        %v1075 = vrot.slane %v1051, %v1074
        %v1076 = vmul.f32 %v1075, %v1064
        %v1077 = vmul.f32 %v1075, %v1065
        %v1078 = vmul.f32 %v1075, %v1066
        %v1079 = vmul.f32 %v1075, %v1067
        %v1080 = vmul.f32 %v1075, %v1068
        %v1081 = vmul.f32 %v1075, %v1069
        %v1082 = vmul.f32 %v1075, %v1070
        %v1083 = vmul.f32 %v1075, %v1071
        %v1084 = vadd.f32 %v1042, %v1076
        %v1085 = vadd.f32 %v1043, %v1077
        %v1086 = vadd.f32 %v1044, %v1078
        %v1087 = vadd.f32 %v1045, %v1079
        %v1088 = vadd.f32 %v1046, %v1080
        %v1089 = vadd.f32 %v1047, %v1081
        %v1090 = vadd.f32 %v1048, %v1082
        %v1091 = vadd.f32 %v1049, %v1083
        %v1092 = vld [vmem:[#allocation5 + $0x13] sm:$0x1]
        %v1093 = vld [vmem:[#allocation7 + $0x13] sm:$0x1]
        %v1094 = vlaneseq
        %v1095 = vshrl.u32 %v1094, 7
        %v1096 = vsub.s32 0, %v1095
        %v1097 = vrot.slane %v1092, %v1096
        %v1098 = vsub.f32 %v250, %v1097
        %v1099 = vsub.f32 %v251, %v1097
        %v1100 = vsub.f32 %v252, %v1097
        %v1101 = vsub.f32 %v253, %v1097
        %v1102 = vsub.f32 %v254, %v1097
        %v1103 = vsub.f32 %v255, %v1097
        %v1104 = vsub.f32 %v256, %v1097
        %v1105 = vsub.f32 %v257, %v1097
        %v1106 = vmax.f32 %v1098, 0.0
        %v1107 = vmax.f32 %v1099, 0.0
        %v1108 = vmax.f32 %v1100, 0.0
        %v1109 = vmax.f32 %v1101, 0.0
        %v1110 = vmax.f32 %v1102, 0.0
        %v1111 = vmax.f32 %v1103, 0.0
        %v1112 = vmax.f32 %v1104, 0.0
        %v1113 = vmax.f32 %v1105, 0.0
        %v1114 = vlaneseq
        %v1115 = vshrl.u32 %v1114, 7
        %v1116 = vsub.s32 0, %v1115
        %v1117 = vrot.slane %v1093, %v1116
        %v1118 = vmul.f32 %v1117, %v1106
        %v1119 = vmul.f32 %v1117, %v1107
        %v1120 = vmul.f32 %v1117, %v1108
        %v1121 = vmul.f32 %v1117, %v1109
        %v1122 = vmul.f32 %v1117, %v1110
        %v1123 = vmul.f32 %v1117, %v1111
        %v1124 = vmul.f32 %v1117, %v1112
        %v1125 = vmul.f32 %v1117, %v1113
        %v1126 = vadd.f32 %v1084, %v1118
        %v1127 = vadd.f32 %v1085, %v1119
        %v1128 = vadd.f32 %v1086, %v1120
        %v1129 = vadd.f32 %v1087, %v1121
        %v1130 = vadd.f32 %v1088, %v1122
        %v1131 = vadd.f32 %v1089, %v1123
        %v1132 = vadd.f32 %v1090, %v1124
        %v1133 = vadd.f32 %v1091, %v1125
        %v1134 = vld [vmem:[#allocation5 + $0x14] sm:$0x1]
        %v1135 = vld [vmem:[#allocation7 + $0x14] sm:$0x1]
        %v1136 = vlaneseq
        %v1137 = vshrl.u32 %v1136, 7
        %v1138 = vsub.s32 0, %v1137
        %v1139 = vrot.slane %v1134, %v1138
        %v1140 = vsub.f32 %v250, %v1139
        %v1141 = vsub.f32 %v251, %v1139
        %v1142 = vsub.f32 %v252, %v1139
        %v1143 = vsub.f32 %v253, %v1139
        %v1144 = vsub.f32 %v254, %v1139
        %v1145 = vsub.f32 %v255, %v1139
        %v1146 = vsub.f32 %v256, %v1139
        %v1147 = vsub.f32 %v257, %v1139
        %v1148 = vmax.f32 %v1140, 0.0
        %v1149 = vmax.f32 %v1141, 0.0
        %v1150 = vmax.f32 %v1142, 0.0
        %v1151 = vmax.f32 %v1143, 0.0
        %v1152 = vmax.f32 %v1144, 0.0
        %v1153 = vmax.f32 %v1145, 0.0
        %v1154 = vmax.f32 %v1146, 0.0
        %v1155 = vmax.f32 %v1147, 0.0
        %v1156 = vlaneseq
        %v1157 = vshrl.u32 %v1156, 7
        %v1158 = vsub.s32 0, %v1157
        %v1159 = vrot.slane %v1135, %v1158
        %v1160 = vmul.f32 %v1159, %v1148
        %v1161 = vmul.f32 %v1159, %v1149
        %v1162 = vmul.f32 %v1159, %v1150
        %v1163 = vmul.f32 %v1159, %v1151
        %v1164 = vmul.f32 %v1159, %v1152
        %v1165 = vmul.f32 %v1159, %v1153
        %v1166 = vmul.f32 %v1159, %v1154
        %v1167 = vmul.f32 %v1159, %v1155
        %v1168 = vadd.f32 %v1126, %v1160
        %v1169 = vadd.f32 %v1127, %v1161
        %v1170 = vadd.f32 %v1128, %v1162
        %v1171 = vadd.f32 %v1129, %v1163
        %v1172 = vadd.f32 %v1130, %v1164
        %v1173 = vadd.f32 %v1131, %v1165
        %v1174 = vadd.f32 %v1132, %v1166
        %v1175 = vadd.f32 %v1133, %v1167
        %v1176 = vld [vmem:[#allocation5 + $0x15] sm:$0x1]
        %v1177 = vld [vmem:[#allocation7 + $0x15] sm:$0x1]
        %v1178 = vlaneseq
        %v1179 = vshrl.u32 %v1178, 7
        %v1180 = vsub.s32 0, %v1179
        %v1181 = vrot.slane %v1176, %v1180
        %v1182 = vsub.f32 %v250, %v1181
        %v1183 = vsub.f32 %v251, %v1181
        %v1184 = vsub.f32 %v252, %v1181
        %v1185 = vsub.f32 %v253, %v1181
        %v1186 = vsub.f32 %v254, %v1181
        %v1187 = vsub.f32 %v255, %v1181
        %v1188 = vsub.f32 %v256, %v1181
        %v1189 = vsub.f32 %v257, %v1181
        %v1190 = vmax.f32 %v1182, 0.0
        %v1191 = vmax.f32 %v1183, 0.0
        %v1192 = vmax.f32 %v1184, 0.0
        %v1193 = vmax.f32 %v1185, 0.0
        %v1194 = vmax.f32 %v1186, 0.0
        %v1195 = vmax.f32 %v1187, 0.0
        %v1196 = vmax.f32 %v1188, 0.0
        %v1197 = vmax.f32 %v1189, 0.0
        %v1198 = vlaneseq
        %v1199 = vshrl.u32 %v1198, 7
        %v1200 = vsub.s32 0, %v1199
        %v1201 = vrot.slane %v1177, %v1200
        %v1202 = vmul.f32 %v1201, %v1190
        %v1203 = vmul.f32 %v1201, %v1191
        %v1204 = vmul.f32 %v1201, %v1192
        %v1205 = vmul.f32 %v1201, %v1193
        %v1206 = vmul.f32 %v1201, %v1194
        %v1207 = vmul.f32 %v1201, %v1195
        %v1208 = vmul.f32 %v1201, %v1196
        %v1209 = vmul.f32 %v1201, %v1197
        %v1210 = vadd.f32 %v1168, %v1202
        %v1211 = vadd.f32 %v1169, %v1203
        %v1212 = vadd.f32 %v1170, %v1204
        %v1213 = vadd.f32 %v1171, %v1205
        %v1214 = vadd.f32 %v1172, %v1206
        %v1215 = vadd.f32 %v1173, %v1207
        %v1216 = vadd.f32 %v1174, %v1208
        %v1217 = vadd.f32 %v1175, %v1209
        %v1218 = vld [vmem:[#allocation5 + $0x16] sm:$0x1]
        %v1219 = vld [vmem:[#allocation7 + $0x16] sm:$0x1]
        %v1220 = vlaneseq
        %v1221 = vshrl.u32 %v1220, 7
        %v1222 = vsub.s32 0, %v1221
        %v1223 = vrot.slane %v1218, %v1222
        %v1224 = vsub.f32 %v250, %v1223
        %v1225 = vsub.f32 %v251, %v1223
        %v1226 = vsub.f32 %v252, %v1223
        %v1227 = vsub.f32 %v253, %v1223
        %v1228 = vsub.f32 %v254, %v1223
        %v1229 = vsub.f32 %v255, %v1223
        %v1230 = vsub.f32 %v256, %v1223
        %v1231 = vsub.f32 %v257, %v1223
        %v1232 = vmax.f32 %v1224, 0.0
        %v1233 = vmax.f32 %v1225, 0.0
        %v1234 = vmax.f32 %v1226, 0.0
        %v1235 = vmax.f32 %v1227, 0.0
        %v1236 = vmax.f32 %v1228, 0.0
        %v1237 = vmax.f32 %v1229, 0.0
        %v1238 = vmax.f32 %v1230, 0.0
        %v1239 = vmax.f32 %v1231, 0.0
        %v1240 = vlaneseq
        %v1241 = vshrl.u32 %v1240, 7
        %v1242 = vsub.s32 0, %v1241
        %v1243 = vrot.slane %v1219, %v1242
        %v1244 = vmul.f32 %v1243, %v1232
        %v1245 = vmul.f32 %v1243, %v1233
        %v1246 = vmul.f32 %v1243, %v1234
        %v1247 = vmul.f32 %v1243, %v1235
        %v1248 = vmul.f32 %v1243, %v1236
        %v1249 = vmul.f32 %v1243, %v1237
        %v1250 = vmul.f32 %v1243, %v1238
        %v1251 = vmul.f32 %v1243, %v1239
        %v1252 = vadd.f32 %v1210, %v1244
        %v1253 = vadd.f32 %v1211, %v1245
        %v1254 = vadd.f32 %v1212, %v1246
        %v1255 = vadd.f32 %v1213, %v1247
        %v1256 = vadd.f32 %v1214, %v1248
        %v1257 = vadd.f32 %v1215, %v1249
        %v1258 = vadd.f32 %v1216, %v1250
        %v1259 = vadd.f32 %v1217, %v1251
        %v1260 = vld [vmem:[#allocation5 + $0x17] sm:$0x1]
        %v1261 = vld [vmem:[#allocation7 + $0x17] sm:$0x1]
        %v1262 = vlaneseq
        %v1263 = vshrl.u32 %v1262, 7
        %v1264 = vsub.s32 0, %v1263
        %v1265 = vrot.slane %v1260, %v1264
        %v1266 = vsub.f32 %v250, %v1265
        %v1267 = vsub.f32 %v251, %v1265
        %v1268 = vsub.f32 %v252, %v1265
        %v1269 = vsub.f32 %v253, %v1265
        %v1270 = vsub.f32 %v254, %v1265
        %v1271 = vsub.f32 %v255, %v1265
        %v1272 = vsub.f32 %v256, %v1265
        %v1273 = vsub.f32 %v257, %v1265
        %v1274 = vmax.f32 %v1266, 0.0
        %v1275 = vmax.f32 %v1267, 0.0
        %v1276 = vmax.f32 %v1268, 0.0
        %v1277 = vmax.f32 %v1269, 0.0
        %v1278 = vmax.f32 %v1270, 0.0
        %v1279 = vmax.f32 %v1271, 0.0
        %v1280 = vmax.f32 %v1272, 0.0
        %v1281 = vmax.f32 %v1273, 0.0
        %v1282 = vlaneseq
        %v1283 = vshrl.u32 %v1282, 7
        %v1284 = vsub.s32 0, %v1283
        %v1285 = vrot.slane %v1261, %v1284
        %v1286 = vmul.f32 %v1285, %v1274
        %v1287 = vmul.f32 %v1285, %v1275
        %v1288 = vmul.f32 %v1285, %v1276
        %v1289 = vmul.f32 %v1285, %v1277
        %v1290 = vmul.f32 %v1285, %v1278
        %v1291 = vmul.f32 %v1285, %v1279
        %v1292 = vmul.f32 %v1285, %v1280
        %v1293 = vmul.f32 %v1285, %v1281
        %v1294 = vadd.f32 %v1252, %v1286
        %v1295 = vadd.f32 %v1253, %v1287
        %v1296 = vadd.f32 %v1254, %v1288
        %v1297 = vadd.f32 %v1255, %v1289
        %v1298 = vadd.f32 %v1256, %v1290
        %v1299 = vadd.f32 %v1257, %v1291
        %v1300 = vadd.f32 %v1258, %v1292
        %v1301 = vadd.f32 %v1259, %v1293
        %v1302 = vld [vmem:[#allocation5 + $0x18] sm:$0x1]
        %v1303 = vld [vmem:[#allocation7 + $0x18] sm:$0x1]
        %v1304 = vlaneseq
        %v1305 = vshrl.u32 %v1304, 7
        %v1306 = vsub.s32 0, %v1305
        %v1307 = vrot.slane %v1302, %v1306
        %v1308 = vsub.f32 %v250, %v1307
        %v1309 = vsub.f32 %v251, %v1307
        %v1310 = vsub.f32 %v252, %v1307
        %v1311 = vsub.f32 %v253, %v1307
        %v1312 = vsub.f32 %v254, %v1307
        %v1313 = vsub.f32 %v255, %v1307
        %v1314 = vsub.f32 %v256, %v1307
        %v1315 = vsub.f32 %v257, %v1307
        %v1316 = vmax.f32 %v1308, 0.0
        %v1317 = vmax.f32 %v1309, 0.0
        %v1318 = vmax.f32 %v1310, 0.0
        %v1319 = vmax.f32 %v1311, 0.0
        %v1320 = vmax.f32 %v1312, 0.0
        %v1321 = vmax.f32 %v1313, 0.0
        %v1322 = vmax.f32 %v1314, 0.0
        %v1323 = vmax.f32 %v1315, 0.0
        %v1324 = vlaneseq
        %v1325 = vshrl.u32 %v1324, 7
        %v1326 = vsub.s32 0, %v1325
        %v1327 = vrot.slane %v1303, %v1326
        %v1328 = vmul.f32 %v1327, %v1316
        %v1329 = vmul.f32 %v1327, %v1317
        %v1330 = vmul.f32 %v1327, %v1318
        %v1331 = vmul.f32 %v1327, %v1319
        %v1332 = vmul.f32 %v1327, %v1320
        %v1333 = vmul.f32 %v1327, %v1321
        %v1334 = vmul.f32 %v1327, %v1322
        %v1335 = vmul.f32 %v1327, %v1323
        %v1336 = vadd.f32 %v1294, %v1328
        %v1337 = vadd.f32 %v1295, %v1329
        %v1338 = vadd.f32 %v1296, %v1330
        %v1339 = vadd.f32 %v1297, %v1331
        %v1340 = vadd.f32 %v1298, %v1332
        %v1341 = vadd.f32 %v1299, %v1333
        %v1342 = vadd.f32 %v1300, %v1334
        %v1343 = vadd.f32 %v1301, %v1335
        %v1344 = vld [vmem:[#allocation5 + $0x19] sm:$0x1]
        %v1345 = vld [vmem:[#allocation7 + $0x19] sm:$0x1]
        %v1346 = vlaneseq
        %v1347 = vshrl.u32 %v1346, 7
        %v1348 = vsub.s32 0, %v1347
        %v1349 = vrot.slane %v1344, %v1348
        %v1350 = vsub.f32 %v250, %v1349
        %v1351 = vsub.f32 %v251, %v1349
        %v1352 = vsub.f32 %v252, %v1349
        %v1353 = vsub.f32 %v253, %v1349
        %v1354 = vsub.f32 %v254, %v1349
        %v1355 = vsub.f32 %v255, %v1349
        %v1356 = vsub.f32 %v256, %v1349
        %v1357 = vsub.f32 %v257, %v1349
        %v1358 = vmax.f32 %v1350, 0.0
        %v1359 = vmax.f32 %v1351, 0.0
        %v1360 = vmax.f32 %v1352, 0.0
        %v1361 = vmax.f32 %v1353, 0.0
        %v1362 = vmax.f32 %v1354, 0.0
        %v1363 = vmax.f32 %v1355, 0.0
        %v1364 = vmax.f32 %v1356, 0.0
        %v1365 = vmax.f32 %v1357, 0.0
        %v1366 = vlaneseq
        %v1367 = vshrl.u32 %v1366, 7
        %v1368 = vsub.s32 0, %v1367
        %v1369 = vrot.slane %v1345, %v1368
        %v1370 = vmul.f32 %v1369, %v1358
        %v1371 = vmul.f32 %v1369, %v1359
        %v1372 = vmul.f32 %v1369, %v1360
        %v1373 = vmul.f32 %v1369, %v1361
        %v1374 = vmul.f32 %v1369, %v1362
        %v1375 = vmul.f32 %v1369, %v1363
        %v1376 = vmul.f32 %v1369, %v1364
        %v1377 = vmul.f32 %v1369, %v1365
        %v1378 = vadd.f32 %v1336, %v1370
        %v1379 = vadd.f32 %v1337, %v1371
        %v1380 = vadd.f32 %v1338, %v1372
        %v1381 = vadd.f32 %v1339, %v1373
        %v1382 = vadd.f32 %v1340, %v1374
        %v1383 = vadd.f32 %v1341, %v1375
        %v1384 = vadd.f32 %v1342, %v1376
        %v1385 = vadd.f32 %v1343, %v1377
        %v1386 = vld [vmem:[#allocation5 + $0x1a] sm:$0x1]
        %v1387 = vld [vmem:[#allocation7 + $0x1a] sm:$0x1]
        %v1388 = vlaneseq
        %v1389 = vshrl.u32 %v1388, 7
        %v1390 = vsub.s32 0, %v1389
        %v1391 = vrot.slane %v1386, %v1390
        %v1392 = vsub.f32 %v250, %v1391
        %v1393 = vsub.f32 %v251, %v1391
        %v1394 = vsub.f32 %v252, %v1391
        %v1395 = vsub.f32 %v253, %v1391
        %v1396 = vsub.f32 %v254, %v1391
        %v1397 = vsub.f32 %v255, %v1391
        %v1398 = vsub.f32 %v256, %v1391
        %v1399 = vsub.f32 %v257, %v1391
        %v1400 = vmax.f32 %v1392, 0.0
        %v1401 = vmax.f32 %v1393, 0.0
        %v1402 = vmax.f32 %v1394, 0.0
        %v1403 = vmax.f32 %v1395, 0.0
        %v1404 = vmax.f32 %v1396, 0.0
        %v1405 = vmax.f32 %v1397, 0.0
        %v1406 = vmax.f32 %v1398, 0.0
        %v1407 = vmax.f32 %v1399, 0.0
        %v1408 = vlaneseq
        %v1409 = vshrl.u32 %v1408, 7
        %v1410 = vsub.s32 0, %v1409
        %v1411 = vrot.slane %v1387, %v1410
        %v1412 = vmul.f32 %v1411, %v1400
        %v1413 = vmul.f32 %v1411, %v1401
        %v1414 = vmul.f32 %v1411, %v1402
        %v1415 = vmul.f32 %v1411, %v1403
        %v1416 = vmul.f32 %v1411, %v1404
        %v1417 = vmul.f32 %v1411, %v1405
        %v1418 = vmul.f32 %v1411, %v1406
        %v1419 = vmul.f32 %v1411, %v1407
        %v1420 = vadd.f32 %v1378, %v1412
        %v1421 = vadd.f32 %v1379, %v1413
        %v1422 = vadd.f32 %v1380, %v1414
        %v1423 = vadd.f32 %v1381, %v1415
        %v1424 = vadd.f32 %v1382, %v1416
        %v1425 = vadd.f32 %v1383, %v1417
        %v1426 = vadd.f32 %v1384, %v1418
        %v1427 = vadd.f32 %v1385, %v1419
        %v1428 = vld [vmem:[#allocation5 + $0x1b] sm:$0x1]
        %v1429 = vld [vmem:[#allocation7 + $0x1b] sm:$0x1]
        %v1430 = vlaneseq
        %v1431 = vshrl.u32 %v1430, 7
        %v1432 = vsub.s32 0, %v1431
        %v1433 = vrot.slane %v1428, %v1432
        %v1434 = vsub.f32 %v250, %v1433
        %v1435 = vsub.f32 %v251, %v1433
        %v1436 = vsub.f32 %v252, %v1433
        %v1437 = vsub.f32 %v253, %v1433
        %v1438 = vsub.f32 %v254, %v1433
        %v1439 = vsub.f32 %v255, %v1433
        %v1440 = vsub.f32 %v256, %v1433
        %v1441 = vsub.f32 %v257, %v1433
        %v1442 = vmax.f32 %v1434, 0.0
        %v1443 = vmax.f32 %v1435, 0.0
        %v1444 = vmax.f32 %v1436, 0.0
        %v1445 = vmax.f32 %v1437, 0.0
        %v1446 = vmax.f32 %v1438, 0.0
        %v1447 = vmax.f32 %v1439, 0.0
        %v1448 = vmax.f32 %v1440, 0.0
        %v1449 = vmax.f32 %v1441, 0.0
        %v1450 = vlaneseq
        %v1451 = vshrl.u32 %v1450, 7
        %v1452 = vsub.s32 0, %v1451
        %v1453 = vrot.slane %v1429, %v1452
        %v1454 = vmul.f32 %v1453, %v1442
        %v1455 = vmul.f32 %v1453, %v1443
        %v1456 = vmul.f32 %v1453, %v1444
        %v1457 = vmul.f32 %v1453, %v1445
        %v1458 = vmul.f32 %v1453, %v1446
        %v1459 = vmul.f32 %v1453, %v1447
        %v1460 = vmul.f32 %v1453, %v1448
        %v1461 = vmul.f32 %v1453, %v1449
        %v1462 = vadd.f32 %v1420, %v1454
        %v1463 = vadd.f32 %v1421, %v1455
        %v1464 = vadd.f32 %v1422, %v1456
        %v1465 = vadd.f32 %v1423, %v1457
        %v1466 = vadd.f32 %v1424, %v1458
        %v1467 = vadd.f32 %v1425, %v1459
        %v1468 = vadd.f32 %v1426, %v1460
        %v1469 = vadd.f32 %v1427, %v1461
        %v1470 = vld [vmem:[#allocation5 + $0x1c] sm:$0x1]
        %v1471 = vld [vmem:[#allocation7 + $0x1c] sm:$0x1]
        %v1472 = vlaneseq
        %v1473 = vshrl.u32 %v1472, 7
        %v1474 = vsub.s32 0, %v1473
        %v1475 = vrot.slane %v1470, %v1474
        %v1476 = vsub.f32 %v250, %v1475
        %v1477 = vsub.f32 %v251, %v1475
        %v1478 = vsub.f32 %v252, %v1475
        %v1479 = vsub.f32 %v253, %v1475
        %v1480 = vsub.f32 %v254, %v1475
        %v1481 = vsub.f32 %v255, %v1475
        %v1482 = vsub.f32 %v256, %v1475
        %v1483 = vsub.f32 %v257, %v1475
        %v1484 = vmax.f32 %v1476, 0.0
        %v1485 = vmax.f32 %v1477, 0.0
        %v1486 = vmax.f32 %v1478, 0.0
        %v1487 = vmax.f32 %v1479, 0.0
        %v1488 = vmax.f32 %v1480, 0.0
        %v1489 = vmax.f32 %v1481, 0.0
        %v1490 = vmax.f32 %v1482, 0.0
        %v1491 = vmax.f32 %v1483, 0.0
        %v1492 = vlaneseq
        %v1493 = vshrl.u32 %v1492, 7
        %v1494 = vsub.s32 0, %v1493
        %v1495 = vrot.slane %v1471, %v1494
        %v1496 = vmul.f32 %v1495, %v1484
        %v1497 = vmul.f32 %v1495, %v1485
        %v1498 = vmul.f32 %v1495, %v1486
        %v1499 = vmul.f32 %v1495, %v1487
        %v1500 = vmul.f32 %v1495, %v1488
        %v1501 = vmul.f32 %v1495, %v1489
        %v1502 = vmul.f32 %v1495, %v1490
        %v1503 = vmul.f32 %v1495, %v1491
        %v1504 = vadd.f32 %v1462, %v1496
        %v1505 = vadd.f32 %v1463, %v1497
        %v1506 = vadd.f32 %v1464, %v1498
        %v1507 = vadd.f32 %v1465, %v1499
        %v1508 = vadd.f32 %v1466, %v1500
        %v1509 = vadd.f32 %v1467, %v1501
        %v1510 = vadd.f32 %v1468, %v1502
        %v1511 = vadd.f32 %v1469, %v1503
        %v1512 = vld [vmem:[#allocation5 + $0x1d] sm:$0x1]
        %v1513 = vld [vmem:[#allocation7 + $0x1d] sm:$0x1]
        %v1514 = vlaneseq
        %v1515 = vshrl.u32 %v1514, 7
        %v1516 = vsub.s32 0, %v1515
        %v1517 = vrot.slane %v1512, %v1516
        %v1518 = vsub.f32 %v250, %v1517
        %v1519 = vsub.f32 %v251, %v1517
        %v1520 = vsub.f32 %v252, %v1517
        %v1521 = vsub.f32 %v253, %v1517
        %v1522 = vsub.f32 %v254, %v1517
        %v1523 = vsub.f32 %v255, %v1517
        %v1524 = vsub.f32 %v256, %v1517
        %v1525 = vsub.f32 %v257, %v1517
        %v1526 = vmax.f32 %v1518, 0.0
        %v1527 = vmax.f32 %v1519, 0.0
        %v1528 = vmax.f32 %v1520, 0.0
        %v1529 = vmax.f32 %v1521, 0.0
        %v1530 = vmax.f32 %v1522, 0.0
        %v1531 = vmax.f32 %v1523, 0.0
        %v1532 = vmax.f32 %v1524, 0.0
        %v1533 = vmax.f32 %v1525, 0.0
        %v1534 = vlaneseq
        %v1535 = vshrl.u32 %v1534, 7
        %v1536 = vsub.s32 0, %v1535
        %v1537 = vrot.slane %v1513, %v1536
        %v1538 = vmul.f32 %v1537, %v1526
        %v1539 = vmul.f32 %v1537, %v1527
        %v1540 = vmul.f32 %v1537, %v1528
        %v1541 = vmul.f32 %v1537, %v1529
        %v1542 = vmul.f32 %v1537, %v1530
        %v1543 = vmul.f32 %v1537, %v1531
        %v1544 = vmul.f32 %v1537, %v1532
        %v1545 = vmul.f32 %v1537, %v1533
        %v1546 = vadd.f32 %v1504, %v1538
        %v1547 = vadd.f32 %v1505, %v1539
        %v1548 = vadd.f32 %v1506, %v1540
        %v1549 = vadd.f32 %v1507, %v1541
        %v1550 = vadd.f32 %v1508, %v1542
        %v1551 = vadd.f32 %v1509, %v1543
        %v1552 = vadd.f32 %v1510, %v1544
        %v1553 = vadd.f32 %v1511, %v1545
        %v1554 = vld [vmem:[#allocation5 + $0x1e] sm:$0x1]
        %v1555 = vld [vmem:[#allocation7 + $0x1e] sm:$0x1]
        %v1556 = vlaneseq
        %v1557 = vshrl.u32 %v1556, 7
        %v1558 = vsub.s32 0, %v1557
        %v1559 = vrot.slane %v1554, %v1558
        %v1560 = vsub.f32 %v250, %v1559
        %v1561 = vsub.f32 %v251, %v1559
        %v1562 = vsub.f32 %v252, %v1559
        %v1563 = vsub.f32 %v253, %v1559
        %v1564 = vsub.f32 %v254, %v1559
        %v1565 = vsub.f32 %v255, %v1559
        %v1566 = vsub.f32 %v256, %v1559
        %v1567 = vsub.f32 %v257, %v1559
        %v1568 = vmax.f32 %v1560, 0.0
        %v1569 = vmax.f32 %v1561, 0.0
        %v1570 = vmax.f32 %v1562, 0.0
        %v1571 = vmax.f32 %v1563, 0.0
        %v1572 = vmax.f32 %v1564, 0.0
        %v1573 = vmax.f32 %v1565, 0.0
        %v1574 = vmax.f32 %v1566, 0.0
        %v1575 = vmax.f32 %v1567, 0.0
        %v1576 = vlaneseq
        %v1577 = vshrl.u32 %v1576, 7
        %v1578 = vsub.s32 0, %v1577
        %v1579 = vrot.slane %v1555, %v1578
        %v1580 = vmul.f32 %v1579, %v1568
        %v1581 = vmul.f32 %v1579, %v1569
        %v1582 = vmul.f32 %v1579, %v1570
        %v1583 = vmul.f32 %v1579, %v1571
        %v1584 = vmul.f32 %v1579, %v1572
        %v1585 = vmul.f32 %v1579, %v1573
        %v1586 = vmul.f32 %v1579, %v1574
        %v1587 = vmul.f32 %v1579, %v1575
        %v1588 = vadd.f32 %v1546, %v1580
        %v1589 = vadd.f32 %v1547, %v1581
        %v1590 = vadd.f32 %v1548, %v1582
        %v1591 = vadd.f32 %v1549, %v1583
        %v1592 = vadd.f32 %v1550, %v1584
        %v1593 = vadd.f32 %v1551, %v1585
        %v1594 = vadd.f32 %v1552, %v1586
        %v1595 = vadd.f32 %v1553, %v1587
        %v1596 = vld [vmem:[#allocation5 + $0x1f] sm:$0x1]
        %v1597 = vld [vmem:[#allocation7 + $0x1f] sm:$0x1]
        %v1598 = vlaneseq
        %v1599 = vshrl.u32 %v1598, 7
        %v1600 = vsub.s32 0, %v1599
        %v1601 = vrot.slane %v1596, %v1600
        %v1602 = vsub.f32 %v250, %v1601
        %v1603 = vsub.f32 %v251, %v1601
        %v1604 = vsub.f32 %v252, %v1601
        %v1605 = vsub.f32 %v253, %v1601
        %v1606 = vsub.f32 %v254, %v1601
        %v1607 = vsub.f32 %v255, %v1601
        %v1608 = vsub.f32 %v256, %v1601
        %v1609 = vsub.f32 %v257, %v1601
        %v1610 = vmax.f32 %v1602, 0.0
        %v1611 = vmax.f32 %v1603, 0.0
        %v1612 = vmax.f32 %v1604, 0.0
        %v1613 = vmax.f32 %v1605, 0.0
        %v1614 = vmax.f32 %v1606, 0.0
        %v1615 = vmax.f32 %v1607, 0.0
        %v1616 = vmax.f32 %v1608, 0.0
        %v1617 = vmax.f32 %v1609, 0.0
        %v1618 = vlaneseq
        %v1619 = vshrl.u32 %v1618, 7
        %v1620 = vsub.s32 0, %v1619
        %v1621 = vrot.slane %v1597, %v1620
        %v1622 = vmul.f32 %v1621, %v1610
        %v1623 = vmul.f32 %v1621, %v1611
        %v1624 = vmul.f32 %v1621, %v1612
        %v1625 = vmul.f32 %v1621, %v1613
        %v1626 = vmul.f32 %v1621, %v1614
        %v1627 = vmul.f32 %v1621, %v1615
        %v1628 = vmul.f32 %v1621, %v1616
        %v1629 = vmul.f32 %v1621, %v1617
        %v1630 = vadd.f32 %v1588, %v1622
        %v1631 = vadd.f32 %v1589, %v1623
        %v1632 = vadd.f32 %v1590, %v1624
        %v1633 = vadd.f32 %v1591, %v1625
        %v1634 = vadd.f32 %v1592, %v1626
        %v1635 = vadd.f32 %v1593, %v1627
        %v1636 = vadd.f32 %v1594, %v1628
        %v1637 = vadd.f32 %v1595, %v1629
        %v1638 = vld [vmem:[#allocation5 + $0x20] sm:$0x1]
        %v1639 = vld [vmem:[#allocation7 + $0x20] sm:$0x1]
        %v1640 = vlaneseq
        %v1641 = vshrl.u32 %v1640, 7
        %v1642 = vsub.s32 0, %v1641
        %v1643 = vrot.slane %v1638, %v1642
        %v1644 = vsub.f32 %v250, %v1643
        %v1645 = vsub.f32 %v251, %v1643
        %v1646 = vsub.f32 %v252, %v1643
        %v1647 = vsub.f32 %v253, %v1643
        %v1648 = vsub.f32 %v254, %v1643
        %v1649 = vsub.f32 %v255, %v1643
        %v1650 = vsub.f32 %v256, %v1643
        %v1651 = vsub.f32 %v257, %v1643
        %v1652 = vmax.f32 %v1644, 0.0
        %v1653 = vmax.f32 %v1645, 0.0
        %v1654 = vmax.f32 %v1646, 0.0
        %v1655 = vmax.f32 %v1647, 0.0
        %v1656 = vmax.f32 %v1648, 0.0
        %v1657 = vmax.f32 %v1649, 0.0
        %v1658 = vmax.f32 %v1650, 0.0
        %v1659 = vmax.f32 %v1651, 0.0
        %v1660 = vlaneseq
        %v1661 = vshrl.u32 %v1660, 7
        %v1662 = vsub.s32 0, %v1661
        %v1663 = vrot.slane %v1639, %v1662
        %v1664 = vmul.f32 %v1663, %v1652
        %v1665 = vmul.f32 %v1663, %v1653
        %v1666 = vmul.f32 %v1663, %v1654
        %v1667 = vmul.f32 %v1663, %v1655
        %v1668 = vmul.f32 %v1663, %v1656
        %v1669 = vmul.f32 %v1663, %v1657
        %v1670 = vmul.f32 %v1663, %v1658
        %v1671 = vmul.f32 %v1663, %v1659
        %v1672 = vadd.f32 %v1630, %v1664
        %v1673 = vadd.f32 %v1631, %v1665
        %v1674 = vadd.f32 %v1632, %v1666
        %v1675 = vadd.f32 %v1633, %v1667
        %v1676 = vadd.f32 %v1634, %v1668
        %v1677 = vadd.f32 %v1635, %v1669
        %v1678 = vadd.f32 %v1636, %v1670
        %v1679 = vadd.f32 %v1637, %v1671
        %v1680 = vld [vmem:[#allocation5 + $0x21] sm:$0x1]
        %v1681 = vld [vmem:[#allocation7 + $0x21] sm:$0x1]
        %v1682 = vlaneseq
        %v1683 = vshrl.u32 %v1682, 7
        %v1684 = vsub.s32 0, %v1683
        %v1685 = vrot.slane %v1680, %v1684
        %v1686 = vsub.f32 %v250, %v1685
        %v1687 = vsub.f32 %v251, %v1685
        %v1688 = vsub.f32 %v252, %v1685
        %v1689 = vsub.f32 %v253, %v1685
        %v1690 = vsub.f32 %v254, %v1685
        %v1691 = vsub.f32 %v255, %v1685
        %v1692 = vsub.f32 %v256, %v1685
        %v1693 = vsub.f32 %v257, %v1685
        %v1694 = vmax.f32 %v1686, 0.0
        %v1695 = vmax.f32 %v1687, 0.0
        %v1696 = vmax.f32 %v1688, 0.0
        %v1697 = vmax.f32 %v1689, 0.0
        %v1698 = vmax.f32 %v1690, 0.0
        %v1699 = vmax.f32 %v1691, 0.0
        %v1700 = vmax.f32 %v1692, 0.0
        %v1701 = vmax.f32 %v1693, 0.0
        %v1702 = vlaneseq
        %v1703 = vshrl.u32 %v1702, 7
        %v1704 = vsub.s32 0, %v1703
        %v1705 = vrot.slane %v1681, %v1704
        %v1706 = vmul.f32 %v1705, %v1694
        %v1707 = vmul.f32 %v1705, %v1695
        %v1708 = vmul.f32 %v1705, %v1696
        %v1709 = vmul.f32 %v1705, %v1697
        %v1710 = vmul.f32 %v1705, %v1698
        %v1711 = vmul.f32 %v1705, %v1699
        %v1712 = vmul.f32 %v1705, %v1700
        %v1713 = vmul.f32 %v1705, %v1701
        %v1714 = vadd.f32 %v1672, %v1706
        %v1715 = vadd.f32 %v1673, %v1707
        %v1716 = vadd.f32 %v1674, %v1708
        %v1717 = vadd.f32 %v1675, %v1709
        %v1718 = vadd.f32 %v1676, %v1710
        %v1719 = vadd.f32 %v1677, %v1711
        %v1720 = vadd.f32 %v1678, %v1712
        %v1721 = vadd.f32 %v1679, %v1713
        %v1722 = vld [vmem:[#allocation5 + $0x22] sm:$0x1]
        %v1723 = vld [vmem:[#allocation7 + $0x22] sm:$0x1]
        %v1724 = vlaneseq
        %v1725 = vshrl.u32 %v1724, 7
        %v1726 = vsub.s32 0, %v1725
        %v1727 = vrot.slane %v1722, %v1726
        %v1728 = vsub.f32 %v250, %v1727
        %v1729 = vsub.f32 %v251, %v1727
        %v1730 = vsub.f32 %v252, %v1727
        %v1731 = vsub.f32 %v253, %v1727
        %v1732 = vsub.f32 %v254, %v1727
        %v1733 = vsub.f32 %v255, %v1727
        %v1734 = vsub.f32 %v256, %v1727
        %v1735 = vsub.f32 %v257, %v1727
        %v1736 = vmax.f32 %v1728, 0.0
        %v1737 = vmax.f32 %v1729, 0.0
        %v1738 = vmax.f32 %v1730, 0.0
        %v1739 = vmax.f32 %v1731, 0.0
        %v1740 = vmax.f32 %v1732, 0.0
        %v1741 = vmax.f32 %v1733, 0.0
        %v1742 = vmax.f32 %v1734, 0.0
        %v1743 = vmax.f32 %v1735, 0.0
        %v1744 = vlaneseq
        %v1745 = vshrl.u32 %v1744, 7
        %v1746 = vsub.s32 0, %v1745
        %v1747 = vrot.slane %v1723, %v1746
        %v1748 = vmul.f32 %v1747, %v1736
        %v1749 = vmul.f32 %v1747, %v1737
        %v1750 = vmul.f32 %v1747, %v1738
        %v1751 = vmul.f32 %v1747, %v1739
        %v1752 = vmul.f32 %v1747, %v1740
        %v1753 = vmul.f32 %v1747, %v1741
        %v1754 = vmul.f32 %v1747, %v1742
        %v1755 = vmul.f32 %v1747, %v1743
        %v1756 = vadd.f32 %v1714, %v1748
        %v1757 = vadd.f32 %v1715, %v1749
        %v1758 = vadd.f32 %v1716, %v1750
        %v1759 = vadd.f32 %v1717, %v1751
        %v1760 = vadd.f32 %v1718, %v1752
        %v1761 = vadd.f32 %v1719, %v1753
        %v1762 = vadd.f32 %v1720, %v1754
        %v1763 = vadd.f32 %v1721, %v1755
        %v1764 = vld [vmem:[#allocation5 + $0x23] sm:$0x1]
        %v1765 = vld [vmem:[#allocation7 + $0x23] sm:$0x1]
        %v1766 = vlaneseq
        %v1767 = vshrl.u32 %v1766, 7
        %v1768 = vsub.s32 0, %v1767
        %v1769 = vrot.slane %v1764, %v1768
        %v1770 = vsub.f32 %v250, %v1769
        %v1771 = vsub.f32 %v251, %v1769
        %v1772 = vsub.f32 %v252, %v1769
        %v1773 = vsub.f32 %v253, %v1769
        %v1774 = vsub.f32 %v254, %v1769
        %v1775 = vsub.f32 %v255, %v1769
        %v1776 = vsub.f32 %v256, %v1769
        %v1777 = vsub.f32 %v257, %v1769
        %v1778 = vmax.f32 %v1770, 0.0
        %v1779 = vmax.f32 %v1771, 0.0
        %v1780 = vmax.f32 %v1772, 0.0
        %v1781 = vmax.f32 %v1773, 0.0
        %v1782 = vmax.f32 %v1774, 0.0
        %v1783 = vmax.f32 %v1775, 0.0
        %v1784 = vmax.f32 %v1776, 0.0
        %v1785 = vmax.f32 %v1777, 0.0
        %v1786 = vlaneseq
        %v1787 = vshrl.u32 %v1786, 7
        %v1788 = vsub.s32 0, %v1787
        %v1789 = vrot.slane %v1765, %v1788
        %v1790 = vmul.f32 %v1789, %v1778
        %v1791 = vmul.f32 %v1789, %v1779
        %v1792 = vmul.f32 %v1789, %v1780
        %v1793 = vmul.f32 %v1789, %v1781
        %v1794 = vmul.f32 %v1789, %v1782
        %v1795 = vmul.f32 %v1789, %v1783
        %v1796 = vmul.f32 %v1789, %v1784
        %v1797 = vmul.f32 %v1789, %v1785
        %v1798 = vadd.f32 %v1756, %v1790
        %v1799 = vadd.f32 %v1757, %v1791
        %v1800 = vadd.f32 %v1758, %v1792
        %v1801 = vadd.f32 %v1759, %v1793
        %v1802 = vadd.f32 %v1760, %v1794
        %v1803 = vadd.f32 %v1761, %v1795
        %v1804 = vadd.f32 %v1762, %v1796
        %v1805 = vadd.f32 %v1763, %v1797
        %v1806 = vld [vmem:[#allocation5 + $0x24] sm:$0x1]
        %v1807 = vld [vmem:[#allocation7 + $0x24] sm:$0x1]
        %v1808 = vlaneseq
        %v1809 = vshrl.u32 %v1808, 7
        %v1810 = vsub.s32 0, %v1809
        %v1811 = vrot.slane %v1806, %v1810
        %v1812 = vsub.f32 %v250, %v1811
        %v1813 = vsub.f32 %v251, %v1811
        %v1814 = vsub.f32 %v252, %v1811
        %v1815 = vsub.f32 %v253, %v1811
        %v1816 = vsub.f32 %v254, %v1811
        %v1817 = vsub.f32 %v255, %v1811
        %v1818 = vsub.f32 %v256, %v1811
        %v1819 = vsub.f32 %v257, %v1811
        %v1820 = vmax.f32 %v1812, 0.0
        %v1821 = vmax.f32 %v1813, 0.0
        %v1822 = vmax.f32 %v1814, 0.0
        %v1823 = vmax.f32 %v1815, 0.0
        %v1824 = vmax.f32 %v1816, 0.0
        %v1825 = vmax.f32 %v1817, 0.0
        %v1826 = vmax.f32 %v1818, 0.0
        %v1827 = vmax.f32 %v1819, 0.0
        %v1828 = vlaneseq
        %v1829 = vshrl.u32 %v1828, 7
        %v1830 = vsub.s32 0, %v1829
        %v1831 = vrot.slane %v1807, %v1830
        %v1832 = vmul.f32 %v1831, %v1820
        %v1833 = vmul.f32 %v1831, %v1821
        %v1834 = vmul.f32 %v1831, %v1822
        %v1835 = vmul.f32 %v1831, %v1823
        %v1836 = vmul.f32 %v1831, %v1824
        %v1837 = vmul.f32 %v1831, %v1825
        %v1838 = vmul.f32 %v1831, %v1826
        %v1839 = vmul.f32 %v1831, %v1827
        %v1840 = vadd.f32 %v1798, %v1832
        %v1841 = vadd.f32 %v1799, %v1833
        %v1842 = vadd.f32 %v1800, %v1834
        %v1843 = vadd.f32 %v1801, %v1835
        %v1844 = vadd.f32 %v1802, %v1836
        %v1845 = vadd.f32 %v1803, %v1837
        %v1846 = vadd.f32 %v1804, %v1838
        %v1847 = vadd.f32 %v1805, %v1839
        %v1848 = vld [vmem:[#allocation5 + $0x25] sm:$0x1]
        %v1849 = vld [vmem:[#allocation7 + $0x25] sm:$0x1]
        %v1850 = vlaneseq
        %v1851 = vshrl.u32 %v1850, 7
        %v1852 = vsub.s32 0, %v1851
        %v1853 = vrot.slane %v1848, %v1852
        %v1854 = vsub.f32 %v250, %v1853
        %v1855 = vsub.f32 %v251, %v1853
        %v1856 = vsub.f32 %v252, %v1853
        %v1857 = vsub.f32 %v253, %v1853
        %v1858 = vsub.f32 %v254, %v1853
        %v1859 = vsub.f32 %v255, %v1853
        %v1860 = vsub.f32 %v256, %v1853
        %v1861 = vsub.f32 %v257, %v1853
        %v1862 = vmax.f32 %v1854, 0.0
        %v1863 = vmax.f32 %v1855, 0.0
        %v1864 = vmax.f32 %v1856, 0.0
        %v1865 = vmax.f32 %v1857, 0.0
        %v1866 = vmax.f32 %v1858, 0.0
        %v1867 = vmax.f32 %v1859, 0.0
        %v1868 = vmax.f32 %v1860, 0.0
        %v1869 = vmax.f32 %v1861, 0.0
        %v1870 = vlaneseq
        %v1871 = vshrl.u32 %v1870, 7
        %v1872 = vsub.s32 0, %v1871
        %v1873 = vrot.slane %v1849, %v1872
        %v1874 = vmul.f32 %v1873, %v1862
        %v1875 = vmul.f32 %v1873, %v1863
        %v1876 = vmul.f32 %v1873, %v1864
        %v1877 = vmul.f32 %v1873, %v1865
        %v1878 = vmul.f32 %v1873, %v1866
        %v1879 = vmul.f32 %v1873, %v1867
        %v1880 = vmul.f32 %v1873, %v1868
        %v1881 = vmul.f32 %v1873, %v1869
        %v1882 = vadd.f32 %v1840, %v1874
        %v1883 = vadd.f32 %v1841, %v1875
        %v1884 = vadd.f32 %v1842, %v1876
        %v1885 = vadd.f32 %v1843, %v1877
        %v1886 = vadd.f32 %v1844, %v1878
        %v1887 = vadd.f32 %v1845, %v1879
        %v1888 = vadd.f32 %v1846, %v1880
        %v1889 = vadd.f32 %v1847, %v1881
        %v1890 = vld [vmem:[#allocation5 + $0x26] sm:$0x1]
        %v1891 = vld [vmem:[#allocation7 + $0x26] sm:$0x1]
        %v1892 = vlaneseq
        %v1893 = vshrl.u32 %v1892, 7
        %v1894 = vsub.s32 0, %v1893
        %v1895 = vrot.slane %v1890, %v1894
        %v1896 = vsub.f32 %v250, %v1895
        %v1897 = vsub.f32 %v251, %v1895
        %v1898 = vsub.f32 %v252, %v1895
        %v1899 = vsub.f32 %v253, %v1895
        %v1900 = vsub.f32 %v254, %v1895
        %v1901 = vsub.f32 %v255, %v1895
        %v1902 = vsub.f32 %v256, %v1895
        %v1903 = vsub.f32 %v257, %v1895
        %v1904 = vmax.f32 %v1896, 0.0
        %v1905 = vmax.f32 %v1897, 0.0
        %v1906 = vmax.f32 %v1898, 0.0
        %v1907 = vmax.f32 %v1899, 0.0
        %v1908 = vmax.f32 %v1900, 0.0
        %v1909 = vmax.f32 %v1901, 0.0
        %v1910 = vmax.f32 %v1902, 0.0
        %v1911 = vmax.f32 %v1903, 0.0
        %v1912 = vlaneseq
        %v1913 = vshrl.u32 %v1912, 7
        %v1914 = vsub.s32 0, %v1913
        %v1915 = vrot.slane %v1891, %v1914
        %v1916 = vmul.f32 %v1915, %v1904
        %v1917 = vmul.f32 %v1915, %v1905
        %v1918 = vmul.f32 %v1915, %v1906
        %v1919 = vmul.f32 %v1915, %v1907
        %v1920 = vmul.f32 %v1915, %v1908
        %v1921 = vmul.f32 %v1915, %v1909
        %v1922 = vmul.f32 %v1915, %v1910
        %v1923 = vmul.f32 %v1915, %v1911
        %v1924 = vadd.f32 %v1882, %v1916
        %v1925 = vadd.f32 %v1883, %v1917
        %v1926 = vadd.f32 %v1884, %v1918
        %v1927 = vadd.f32 %v1885, %v1919
        %v1928 = vadd.f32 %v1886, %v1920
        %v1929 = vadd.f32 %v1887, %v1921
        %v1930 = vadd.f32 %v1888, %v1922
        %v1931 = vadd.f32 %v1889, %v1923
        %v1932 = vld [vmem:[#allocation5 + $0x27] sm:$0x1]
        %v1933 = vld [vmem:[#allocation7 + $0x27] sm:$0x1]
        %v1934 = vlaneseq
        %v1935 = vshrl.u32 %v1934, 7
        %v1936 = vsub.s32 0, %v1935
        %v1937 = vrot.slane %v1932, %v1936
        %v1938 = vsub.f32 %v250, %v1937
        %v1939 = vsub.f32 %v251, %v1937
        %v1940 = vsub.f32 %v252, %v1937
        %v1941 = vsub.f32 %v253, %v1937
        %v1942 = vsub.f32 %v254, %v1937
        %v1943 = vsub.f32 %v255, %v1937
        %v1944 = vsub.f32 %v256, %v1937
        %v1945 = vsub.f32 %v257, %v1937
        %v1946 = vmax.f32 %v1938, 0.0
        %v1947 = vmax.f32 %v1939, 0.0
        %v1948 = vmax.f32 %v1940, 0.0
        %v1949 = vmax.f32 %v1941, 0.0
        %v1950 = vmax.f32 %v1942, 0.0
        %v1951 = vmax.f32 %v1943, 0.0
        %v1952 = vmax.f32 %v1944, 0.0
        %v1953 = vmax.f32 %v1945, 0.0
        %v1954 = vlaneseq
        %v1955 = vshrl.u32 %v1954, 7
        %v1956 = vsub.s32 0, %v1955
        %v1957 = vrot.slane %v1933, %v1956
        %v1958 = vmul.f32 %v1957, %v1946
        %v1959 = vmul.f32 %v1957, %v1947
        %v1960 = vmul.f32 %v1957, %v1948
        %v1961 = vmul.f32 %v1957, %v1949
        %v1962 = vmul.f32 %v1957, %v1950
        %v1963 = vmul.f32 %v1957, %v1951
        %v1964 = vmul.f32 %v1957, %v1952
        %v1965 = vmul.f32 %v1957, %v1953
        %v1966 = vadd.f32 %v1924, %v1958
        %v1967 = vadd.f32 %v1925, %v1959
        %v1968 = vadd.f32 %v1926, %v1960
        %v1969 = vadd.f32 %v1927, %v1961
        %v1970 = vadd.f32 %v1928, %v1962
        %v1971 = vadd.f32 %v1929, %v1963
        %v1972 = vadd.f32 %v1930, %v1964
        %v1973 = vadd.f32 %v1931, %v1965
        %v1974 = vld [vmem:[#allocation5 + $0x28] sm:$0x1]
        %v1975 = vld [vmem:[#allocation7 + $0x28] sm:$0x1]
        %v1976 = vlaneseq
        %v1977 = vshrl.u32 %v1976, 7
        %v1978 = vsub.s32 0, %v1977
        %v1979 = vrot.slane %v1974, %v1978
        %v1980 = vsub.f32 %v250, %v1979
        %v1981 = vsub.f32 %v251, %v1979
        %v1982 = vsub.f32 %v252, %v1979
        %v1983 = vsub.f32 %v253, %v1979
        %v1984 = vsub.f32 %v254, %v1979
        %v1985 = vsub.f32 %v255, %v1979
        %v1986 = vsub.f32 %v256, %v1979
        %v1987 = vsub.f32 %v257, %v1979
        %v1988 = vmax.f32 %v1980, 0.0
        %v1989 = vmax.f32 %v1981, 0.0
        %v1990 = vmax.f32 %v1982, 0.0
        %v1991 = vmax.f32 %v1983, 0.0
        %v1992 = vmax.f32 %v1984, 0.0
        %v1993 = vmax.f32 %v1985, 0.0
        %v1994 = vmax.f32 %v1986, 0.0
        %v1995 = vmax.f32 %v1987, 0.0
        %v1996 = vlaneseq
        %v1997 = vshrl.u32 %v1996, 7
        %v1998 = vsub.s32 0, %v1997
        %v1999 = vrot.slane %v1975, %v1998
        %v2000 = vmul.f32 %v1999, %v1988
        %v2001 = vmul.f32 %v1999, %v1989
        %v2002 = vmul.f32 %v1999, %v1990
        %v2003 = vmul.f32 %v1999, %v1991
        %v2004 = vmul.f32 %v1999, %v1992
        %v2005 = vmul.f32 %v1999, %v1993
        %v2006 = vmul.f32 %v1999, %v1994
        %v2007 = vmul.f32 %v1999, %v1995
        %v2008 = vadd.f32 %v1966, %v2000
        %v2009 = vadd.f32 %v1967, %v2001
        %v2010 = vadd.f32 %v1968, %v2002
        %v2011 = vadd.f32 %v1969, %v2003
        %v2012 = vadd.f32 %v1970, %v2004
        %v2013 = vadd.f32 %v1971, %v2005
        %v2014 = vadd.f32 %v1972, %v2006
        %v2015 = vadd.f32 %v1973, %v2007
        %v2016 = vld [vmem:[#allocation5 + $0x29] sm:$0x1]
        %v2017 = vld [vmem:[#allocation7 + $0x29] sm:$0x1]
        %v2018 = vlaneseq
        %v2019 = vshrl.u32 %v2018, 7
        %v2020 = vsub.s32 0, %v2019
        %v2021 = vrot.slane %v2016, %v2020
        %v2022 = vsub.f32 %v250, %v2021
        %v2023 = vsub.f32 %v251, %v2021
        %v2024 = vsub.f32 %v252, %v2021
        %v2025 = vsub.f32 %v253, %v2021
        %v2026 = vsub.f32 %v254, %v2021
        %v2027 = vsub.f32 %v255, %v2021
        %v2028 = vsub.f32 %v256, %v2021
        %v2029 = vsub.f32 %v257, %v2021
        %v2030 = vmax.f32 %v2022, 0.0
        %v2031 = vmax.f32 %v2023, 0.0
        %v2032 = vmax.f32 %v2024, 0.0
        %v2033 = vmax.f32 %v2025, 0.0
        %v2034 = vmax.f32 %v2026, 0.0
        %v2035 = vmax.f32 %v2027, 0.0
        %v2036 = vmax.f32 %v2028, 0.0
        %v2037 = vmax.f32 %v2029, 0.0
        %v2038 = vlaneseq
        %v2039 = vshrl.u32 %v2038, 7
        %v2040 = vsub.s32 0, %v2039
        %v2041 = vrot.slane %v2017, %v2040
        %v2042 = vmul.f32 %v2041, %v2030
        %v2043 = vmul.f32 %v2041, %v2031
        %v2044 = vmul.f32 %v2041, %v2032
        %v2045 = vmul.f32 %v2041, %v2033
        %v2046 = vmul.f32 %v2041, %v2034
        %v2047 = vmul.f32 %v2041, %v2035
        %v2048 = vmul.f32 %v2041, %v2036
        %v2049 = vmul.f32 %v2041, %v2037
        %v2050 = vadd.f32 %v2008, %v2042
        %v2051 = vadd.f32 %v2009, %v2043
        %v2052 = vadd.f32 %v2010, %v2044
        %v2053 = vadd.f32 %v2011, %v2045
        %v2054 = vadd.f32 %v2012, %v2046
        %v2055 = vadd.f32 %v2013, %v2047
        %v2056 = vadd.f32 %v2014, %v2048
        %v2057 = vadd.f32 %v2015, %v2049
        %v2058 = vld [vmem:[#allocation5 + $0x2a] sm:$0x1]
        %v2059 = vld [vmem:[#allocation7 + $0x2a] sm:$0x1]
        %v2060 = vlaneseq
        %v2061 = vshrl.u32 %v2060, 7
        %v2062 = vsub.s32 0, %v2061
        %v2063 = vrot.slane %v2058, %v2062
        %v2064 = vsub.f32 %v250, %v2063
        %v2065 = vsub.f32 %v251, %v2063
        %v2066 = vsub.f32 %v252, %v2063
        %v2067 = vsub.f32 %v253, %v2063
        %v2068 = vsub.f32 %v254, %v2063
        %v2069 = vsub.f32 %v255, %v2063
        %v2070 = vsub.f32 %v256, %v2063
        %v2071 = vsub.f32 %v257, %v2063
        %v2072 = vmax.f32 %v2064, 0.0
        %v2073 = vmax.f32 %v2065, 0.0
        %v2074 = vmax.f32 %v2066, 0.0
        %v2075 = vmax.f32 %v2067, 0.0
        %v2076 = vmax.f32 %v2068, 0.0
        %v2077 = vmax.f32 %v2069, 0.0
        %v2078 = vmax.f32 %v2070, 0.0
        %v2079 = vmax.f32 %v2071, 0.0
        %v2080 = vlaneseq
        %v2081 = vshrl.u32 %v2080, 7
        %v2082 = vsub.s32 0, %v2081
        %v2083 = vrot.slane %v2059, %v2082
        %v2084 = vmul.f32 %v2083, %v2072
        %v2085 = vmul.f32 %v2083, %v2073
        %v2086 = vmul.f32 %v2083, %v2074
        %v2087 = vmul.f32 %v2083, %v2075
        %v2088 = vmul.f32 %v2083, %v2076
        %v2089 = vmul.f32 %v2083, %v2077
        %v2090 = vmul.f32 %v2083, %v2078
        %v2091 = vmul.f32 %v2083, %v2079
        %v2092 = vadd.f32 %v2050, %v2084
        %v2093 = vadd.f32 %v2051, %v2085
        %v2094 = vadd.f32 %v2052, %v2086
        %v2095 = vadd.f32 %v2053, %v2087
        %v2096 = vadd.f32 %v2054, %v2088
        %v2097 = vadd.f32 %v2055, %v2089
        %v2098 = vadd.f32 %v2056, %v2090
        %v2099 = vadd.f32 %v2057, %v2091
        %v2100 = vld [vmem:[#allocation5 + $0x2b] sm:$0x1]
        %v2101 = vld [vmem:[#allocation7 + $0x2b] sm:$0x1]
        %v2102 = vlaneseq
        %v2103 = vshrl.u32 %v2102, 7
        %v2104 = vsub.s32 0, %v2103
        %v2105 = vrot.slane %v2100, %v2104
        %v2106 = vsub.f32 %v250, %v2105
        %v2107 = vsub.f32 %v251, %v2105
        %v2108 = vsub.f32 %v252, %v2105
        %v2109 = vsub.f32 %v253, %v2105
        %v2110 = vsub.f32 %v254, %v2105
        %v2111 = vsub.f32 %v255, %v2105
        %v2112 = vsub.f32 %v256, %v2105
        %v2113 = vsub.f32 %v257, %v2105
        %v2114 = vmax.f32 %v2106, 0.0
        %v2115 = vmax.f32 %v2107, 0.0
        %v2116 = vmax.f32 %v2108, 0.0
        %v2117 = vmax.f32 %v2109, 0.0
        %v2118 = vmax.f32 %v2110, 0.0
        %v2119 = vmax.f32 %v2111, 0.0
        %v2120 = vmax.f32 %v2112, 0.0
        %v2121 = vmax.f32 %v2113, 0.0
        %v2122 = vlaneseq
        %v2123 = vshrl.u32 %v2122, 7
        %v2124 = vsub.s32 0, %v2123
        %v2125 = vrot.slane %v2101, %v2124
        %v2126 = vmul.f32 %v2125, %v2114
        %v2127 = vmul.f32 %v2125, %v2115
        %v2128 = vmul.f32 %v2125, %v2116
        %v2129 = vmul.f32 %v2125, %v2117
        %v2130 = vmul.f32 %v2125, %v2118
        %v2131 = vmul.f32 %v2125, %v2119
        %v2132 = vmul.f32 %v2125, %v2120
        %v2133 = vmul.f32 %v2125, %v2121
        %v2134 = vadd.f32 %v2092, %v2126
        %v2135 = vadd.f32 %v2093, %v2127
        %v2136 = vadd.f32 %v2094, %v2128
        %v2137 = vadd.f32 %v2095, %v2129
        %v2138 = vadd.f32 %v2096, %v2130
        %v2139 = vadd.f32 %v2097, %v2131
        %v2140 = vadd.f32 %v2098, %v2132
        %v2141 = vadd.f32 %v2099, %v2133
        %v2142 = vld [vmem:[#allocation5 + $0x2c] sm:$0x1]
        %v2143 = vld [vmem:[#allocation7 + $0x2c] sm:$0x1]
        %v2144 = vlaneseq
        %v2145 = vshrl.u32 %v2144, 7
        %v2146 = vsub.s32 0, %v2145
        %v2147 = vrot.slane %v2142, %v2146
        %v2148 = vsub.f32 %v250, %v2147
        %v2149 = vsub.f32 %v251, %v2147
        %v2150 = vsub.f32 %v252, %v2147
        %v2151 = vsub.f32 %v253, %v2147
        %v2152 = vsub.f32 %v254, %v2147
        %v2153 = vsub.f32 %v255, %v2147
        %v2154 = vsub.f32 %v256, %v2147
        %v2155 = vsub.f32 %v257, %v2147
        %v2156 = vmax.f32 %v2148, 0.0
        %v2157 = vmax.f32 %v2149, 0.0
        %v2158 = vmax.f32 %v2150, 0.0
        %v2159 = vmax.f32 %v2151, 0.0
        %v2160 = vmax.f32 %v2152, 0.0
        %v2161 = vmax.f32 %v2153, 0.0
        %v2162 = vmax.f32 %v2154, 0.0
        %v2163 = vmax.f32 %v2155, 0.0
        %v2164 = vlaneseq
        %v2165 = vshrl.u32 %v2164, 7
        %v2166 = vsub.s32 0, %v2165
        %v2167 = vrot.slane %v2143, %v2166
        %v2168 = vmul.f32 %v2167, %v2156
        %v2169 = vmul.f32 %v2167, %v2157
        %v2170 = vmul.f32 %v2167, %v2158
        %v2171 = vmul.f32 %v2167, %v2159
        %v2172 = vmul.f32 %v2167, %v2160
        %v2173 = vmul.f32 %v2167, %v2161
        %v2174 = vmul.f32 %v2167, %v2162
        %v2175 = vmul.f32 %v2167, %v2163
        %v2176 = vadd.f32 %v2134, %v2168
        %v2177 = vadd.f32 %v2135, %v2169
        %v2178 = vadd.f32 %v2136, %v2170
        %v2179 = vadd.f32 %v2137, %v2171
        %v2180 = vadd.f32 %v2138, %v2172
        %v2181 = vadd.f32 %v2139, %v2173
        %v2182 = vadd.f32 %v2140, %v2174
        %v2183 = vadd.f32 %v2141, %v2175
        %v2184 = vld [vmem:[#allocation5 + $0x2d] sm:$0x1]
        %v2185 = vld [vmem:[#allocation7 + $0x2d] sm:$0x1]
        %v2186 = vlaneseq
        %v2187 = vshrl.u32 %v2186, 7
        %v2188 = vsub.s32 0, %v2187
        %v2189 = vrot.slane %v2184, %v2188
        %v2190 = vsub.f32 %v250, %v2189
        %v2191 = vsub.f32 %v251, %v2189
        %v2192 = vsub.f32 %v252, %v2189
        %v2193 = vsub.f32 %v253, %v2189
        %v2194 = vsub.f32 %v254, %v2189
        %v2195 = vsub.f32 %v255, %v2189
        %v2196 = vsub.f32 %v256, %v2189
        %v2197 = vsub.f32 %v257, %v2189
        %v2198 = vmax.f32 %v2190, 0.0
        %v2199 = vmax.f32 %v2191, 0.0
        %v2200 = vmax.f32 %v2192, 0.0
        %v2201 = vmax.f32 %v2193, 0.0
        %v2202 = vmax.f32 %v2194, 0.0
        %v2203 = vmax.f32 %v2195, 0.0
        %v2204 = vmax.f32 %v2196, 0.0
        %v2205 = vmax.f32 %v2197, 0.0
        %v2206 = vlaneseq
        %v2207 = vshrl.u32 %v2206, 7
        %v2208 = vsub.s32 0, %v2207
        %v2209 = vrot.slane %v2185, %v2208
        %v2210 = vmul.f32 %v2209, %v2198
        %v2211 = vmul.f32 %v2209, %v2199
        %v2212 = vmul.f32 %v2209, %v2200
        %v2213 = vmul.f32 %v2209, %v2201
        %v2214 = vmul.f32 %v2209, %v2202
        %v2215 = vmul.f32 %v2209, %v2203
        %v2216 = vmul.f32 %v2209, %v2204
        %v2217 = vmul.f32 %v2209, %v2205
        %v2218 = vadd.f32 %v2176, %v2210
        %v2219 = vadd.f32 %v2177, %v2211
        %v2220 = vadd.f32 %v2178, %v2212
        %v2221 = vadd.f32 %v2179, %v2213
        %v2222 = vadd.f32 %v2180, %v2214
        %v2223 = vadd.f32 %v2181, %v2215
        %v2224 = vadd.f32 %v2182, %v2216
        %v2225 = vadd.f32 %v2183, %v2217
        %v2226 = vld [vmem:[#allocation5 + $0x2e] sm:$0x1]
        %v2227 = vld [vmem:[#allocation7 + $0x2e] sm:$0x1]
        %v2228 = vlaneseq
        %v2229 = vshrl.u32 %v2228, 7
        %v2230 = vsub.s32 0, %v2229
        %v2231 = vrot.slane %v2226, %v2230
        %v2232 = vsub.f32 %v250, %v2231
        %v2233 = vsub.f32 %v251, %v2231
        %v2234 = vsub.f32 %v252, %v2231
        %v2235 = vsub.f32 %v253, %v2231
        %v2236 = vsub.f32 %v254, %v2231
        %v2237 = vsub.f32 %v255, %v2231
        %v2238 = vsub.f32 %v256, %v2231
        %v2239 = vsub.f32 %v257, %v2231
        %v2240 = vmax.f32 %v2232, 0.0
        %v2241 = vmax.f32 %v2233, 0.0
        %v2242 = vmax.f32 %v2234, 0.0
        %v2243 = vmax.f32 %v2235, 0.0
        %v2244 = vmax.f32 %v2236, 0.0
        %v2245 = vmax.f32 %v2237, 0.0
        %v2246 = vmax.f32 %v2238, 0.0
        %v2247 = vmax.f32 %v2239, 0.0
        %v2248 = vlaneseq
        %v2249 = vshrl.u32 %v2248, 7
        %v2250 = vsub.s32 0, %v2249
        %v2251 = vrot.slane %v2227, %v2250
        %v2252 = vmul.f32 %v2251, %v2240
        %v2253 = vmul.f32 %v2251, %v2241
        %v2254 = vmul.f32 %v2251, %v2242
        %v2255 = vmul.f32 %v2251, %v2243
        %v2256 = vmul.f32 %v2251, %v2244
        %v2257 = vmul.f32 %v2251, %v2245
        %v2258 = vmul.f32 %v2251, %v2246
        %v2259 = vmul.f32 %v2251, %v2247
        %v2260 = vadd.f32 %v2218, %v2252
        %v2261 = vadd.f32 %v2219, %v2253
        %v2262 = vadd.f32 %v2220, %v2254
        %v2263 = vadd.f32 %v2221, %v2255
        %v2264 = vadd.f32 %v2222, %v2256
        %v2265 = vadd.f32 %v2223, %v2257
        %v2266 = vadd.f32 %v2224, %v2258
        %v2267 = vadd.f32 %v2225, %v2259
        %v2268 = vld [vmem:[#allocation5 + $0x2f] sm:$0x1]
        %v2269 = vld [vmem:[#allocation7 + $0x2f] sm:$0x1]
        %v2270 = vlaneseq
        %v2271 = vshrl.u32 %v2270, 7
        %v2272 = vsub.s32 0, %v2271
        %v2273 = vrot.slane %v2268, %v2272
        %v2274 = vsub.f32 %v250, %v2273
        %v2275 = vsub.f32 %v251, %v2273
        %v2276 = vsub.f32 %v252, %v2273
        %v2277 = vsub.f32 %v253, %v2273
        %v2278 = vsub.f32 %v254, %v2273
        %v2279 = vsub.f32 %v255, %v2273
        %v2280 = vsub.f32 %v256, %v2273
        %v2281 = vsub.f32 %v257, %v2273
        %v2282 = vmax.f32 %v2274, 0.0
        %v2283 = vmax.f32 %v2275, 0.0
        %v2284 = vmax.f32 %v2276, 0.0
        %v2285 = vmax.f32 %v2277, 0.0
        %v2286 = vmax.f32 %v2278, 0.0
        %v2287 = vmax.f32 %v2279, 0.0
        %v2288 = vmax.f32 %v2280, 0.0
        %v2289 = vmax.f32 %v2281, 0.0
        %v2290 = vlaneseq
        %v2291 = vshrl.u32 %v2290, 7
        %v2292 = vsub.s32 0, %v2291
        %v2293 = vrot.slane %v2269, %v2292
        %v2294 = vmul.f32 %v2293, %v2282
        %v2295 = vmul.f32 %v2293, %v2283
        %v2296 = vmul.f32 %v2293, %v2284
        %v2297 = vmul.f32 %v2293, %v2285
        %v2298 = vmul.f32 %v2293, %v2286
        %v2299 = vmul.f32 %v2293, %v2287
        %v2300 = vmul.f32 %v2293, %v2288
        %v2301 = vmul.f32 %v2293, %v2289
        %v2302 = vadd.f32 %v2260, %v2294
        %v2303 = vadd.f32 %v2261, %v2295
        %v2304 = vadd.f32 %v2262, %v2296
        %v2305 = vadd.f32 %v2263, %v2297
        %v2306 = vadd.f32 %v2264, %v2298
        %v2307 = vadd.f32 %v2265, %v2299
        %v2308 = vadd.f32 %v2266, %v2300
        %v2309 = vadd.f32 %v2267, %v2301
        %v2310 = vld [vmem:[#allocation5 + $0x30] sm:$0x1]
        %v2311 = vld [vmem:[#allocation7 + $0x30] sm:$0x1]
        %v2312 = vlaneseq
        %v2313 = vshrl.u32 %v2312, 7
        %v2314 = vsub.s32 0, %v2313
        %v2315 = vrot.slane %v2310, %v2314
        %v2316 = vsub.f32 %v250, %v2315
        %v2317 = vsub.f32 %v251, %v2315
        %v2318 = vsub.f32 %v252, %v2315
        %v2319 = vsub.f32 %v253, %v2315
        %v2320 = vsub.f32 %v254, %v2315
        %v2321 = vsub.f32 %v255, %v2315
        %v2322 = vsub.f32 %v256, %v2315
        %v2323 = vsub.f32 %v257, %v2315
        %v2324 = vmax.f32 %v2316, 0.0
        %v2325 = vmax.f32 %v2317, 0.0
        %v2326 = vmax.f32 %v2318, 0.0
        %v2327 = vmax.f32 %v2319, 0.0
        %v2328 = vmax.f32 %v2320, 0.0
        %v2329 = vmax.f32 %v2321, 0.0
        %v2330 = vmax.f32 %v2322, 0.0
        %v2331 = vmax.f32 %v2323, 0.0
        %v2332 = vlaneseq
        %v2333 = vshrl.u32 %v2332, 7
        %v2334 = vsub.s32 0, %v2333
        %v2335 = vrot.slane %v2311, %v2334
        %v2336 = vmul.f32 %v2335, %v2324
        %v2337 = vmul.f32 %v2335, %v2325
        %v2338 = vmul.f32 %v2335, %v2326
        %v2339 = vmul.f32 %v2335, %v2327
        %v2340 = vmul.f32 %v2335, %v2328
        %v2341 = vmul.f32 %v2335, %v2329
        %v2342 = vmul.f32 %v2335, %v2330
        %v2343 = vmul.f32 %v2335, %v2331
        %v2344 = vadd.f32 %v2302, %v2336
        %v2345 = vadd.f32 %v2303, %v2337
        %v2346 = vadd.f32 %v2304, %v2338
        %v2347 = vadd.f32 %v2305, %v2339
        %v2348 = vadd.f32 %v2306, %v2340
        %v2349 = vadd.f32 %v2307, %v2341
        %v2350 = vadd.f32 %v2308, %v2342
        %v2351 = vadd.f32 %v2309, %v2343
        %v2352 = vld [vmem:[#allocation5 + $0x31] sm:$0x1]
        %v2353 = vld [vmem:[#allocation7 + $0x31] sm:$0x1]
        %v2354 = vlaneseq
        %v2355 = vshrl.u32 %v2354, 7
        %v2356 = vsub.s32 0, %v2355
        %v2357 = vrot.slane %v2352, %v2356
        %v2358 = vsub.f32 %v250, %v2357
        %v2359 = vsub.f32 %v251, %v2357
        %v2360 = vsub.f32 %v252, %v2357
        %v2361 = vsub.f32 %v253, %v2357
        %v2362 = vsub.f32 %v254, %v2357
        %v2363 = vsub.f32 %v255, %v2357
        %v2364 = vsub.f32 %v256, %v2357
        %v2365 = vsub.f32 %v257, %v2357
        %v2366 = vmax.f32 %v2358, 0.0
        %v2367 = vmax.f32 %v2359, 0.0
        %v2368 = vmax.f32 %v2360, 0.0
        %v2369 = vmax.f32 %v2361, 0.0
        %v2370 = vmax.f32 %v2362, 0.0
        %v2371 = vmax.f32 %v2363, 0.0
        %v2372 = vmax.f32 %v2364, 0.0
        %v2373 = vmax.f32 %v2365, 0.0
        %v2374 = vlaneseq
        %v2375 = vshrl.u32 %v2374, 7
        %v2376 = vsub.s32 0, %v2375
        %v2377 = vrot.slane %v2353, %v2376
        %v2378 = vmul.f32 %v2377, %v2366
        %v2379 = vmul.f32 %v2377, %v2367
        %v2380 = vmul.f32 %v2377, %v2368
        %v2381 = vmul.f32 %v2377, %v2369
        %v2382 = vmul.f32 %v2377, %v2370
        %v2383 = vmul.f32 %v2377, %v2371
        %v2384 = vmul.f32 %v2377, %v2372
        %v2385 = vmul.f32 %v2377, %v2373
        %v2386 = vadd.f32 %v2344, %v2378
        %v2387 = vadd.f32 %v2345, %v2379
        %v2388 = vadd.f32 %v2346, %v2380
        %v2389 = vadd.f32 %v2347, %v2381
        %v2390 = vadd.f32 %v2348, %v2382
        %v2391 = vadd.f32 %v2349, %v2383
        %v2392 = vadd.f32 %v2350, %v2384
        %v2393 = vadd.f32 %v2351, %v2385
        %v2394 = vld [vmem:[#allocation5 + $0x32] sm:$0x1]
        %v2395 = vld [vmem:[#allocation7 + $0x32] sm:$0x1]
        %v2396 = vlaneseq
        %v2397 = vshrl.u32 %v2396, 7
        %v2398 = vsub.s32 0, %v2397
        %v2399 = vrot.slane %v2394, %v2398
        %v2400 = vsub.f32 %v250, %v2399
        %v2401 = vsub.f32 %v251, %v2399
        %v2402 = vsub.f32 %v252, %v2399
        %v2403 = vsub.f32 %v253, %v2399
        %v2404 = vsub.f32 %v254, %v2399
        %v2405 = vsub.f32 %v255, %v2399
        %v2406 = vsub.f32 %v256, %v2399
        %v2407 = vsub.f32 %v257, %v2399
        %v2408 = vmax.f32 %v2400, 0.0
        %v2409 = vmax.f32 %v2401, 0.0
        %v2410 = vmax.f32 %v2402, 0.0
        %v2411 = vmax.f32 %v2403, 0.0
        %v2412 = vmax.f32 %v2404, 0.0
        %v2413 = vmax.f32 %v2405, 0.0
        %v2414 = vmax.f32 %v2406, 0.0
        %v2415 = vmax.f32 %v2407, 0.0
        %v2416 = vlaneseq
        %v2417 = vshrl.u32 %v2416, 7
        %v2418 = vsub.s32 0, %v2417
        %v2419 = vrot.slane %v2395, %v2418
        %v2420 = vmul.f32 %v2419, %v2408
        %v2421 = vmul.f32 %v2419, %v2409
        %v2422 = vmul.f32 %v2419, %v2410
        %v2423 = vmul.f32 %v2419, %v2411
        %v2424 = vmul.f32 %v2419, %v2412
        %v2425 = vmul.f32 %v2419, %v2413
        %v2426 = vmul.f32 %v2419, %v2414
        %v2427 = vmul.f32 %v2419, %v2415
        %v2428 = vadd.f32 %v2386, %v2420
        %v2429 = vadd.f32 %v2387, %v2421
        %v2430 = vadd.f32 %v2388, %v2422
        %v2431 = vadd.f32 %v2389, %v2423
        %v2432 = vadd.f32 %v2390, %v2424
        %v2433 = vadd.f32 %v2391, %v2425
        %v2434 = vadd.f32 %v2392, %v2426
        %v2435 = vadd.f32 %v2393, %v2427
        %v2436 = vld [vmem:[#allocation5 + $0x33] sm:$0x1]
        %v2437 = vld [vmem:[#allocation7 + $0x33] sm:$0x1]
        %v2438 = vlaneseq
        %v2439 = vshrl.u32 %v2438, 7
        %v2440 = vsub.s32 0, %v2439
        %v2441 = vrot.slane %v2436, %v2440
        %v2442 = vsub.f32 %v250, %v2441
        %v2443 = vsub.f32 %v251, %v2441
        %v2444 = vsub.f32 %v252, %v2441
        %v2445 = vsub.f32 %v253, %v2441
        %v2446 = vsub.f32 %v254, %v2441
        %v2447 = vsub.f32 %v255, %v2441
        %v2448 = vsub.f32 %v256, %v2441
        %v2449 = vsub.f32 %v257, %v2441
        %v2450 = vmax.f32 %v2442, 0.0
        %v2451 = vmax.f32 %v2443, 0.0
        %v2452 = vmax.f32 %v2444, 0.0
        %v2453 = vmax.f32 %v2445, 0.0
        %v2454 = vmax.f32 %v2446, 0.0
        %v2455 = vmax.f32 %v2447, 0.0
        %v2456 = vmax.f32 %v2448, 0.0
        %v2457 = vmax.f32 %v2449, 0.0
        %v2458 = vlaneseq
        %v2459 = vshrl.u32 %v2458, 7
        %v2460 = vsub.s32 0, %v2459
        %v2461 = vrot.slane %v2437, %v2460
        %v2462 = vmul.f32 %v2461, %v2450
        %v2463 = vmul.f32 %v2461, %v2451
        %v2464 = vmul.f32 %v2461, %v2452
        %v2465 = vmul.f32 %v2461, %v2453
        %v2466 = vmul.f32 %v2461, %v2454
        %v2467 = vmul.f32 %v2461, %v2455
        %v2468 = vmul.f32 %v2461, %v2456
        %v2469 = vmul.f32 %v2461, %v2457
        %v2470 = vadd.f32 %v2428, %v2462
        %v2471 = vadd.f32 %v2429, %v2463
        %v2472 = vadd.f32 %v2430, %v2464
        %v2473 = vadd.f32 %v2431, %v2465
        %v2474 = vadd.f32 %v2432, %v2466
        %v2475 = vadd.f32 %v2433, %v2467
        %v2476 = vadd.f32 %v2434, %v2468
        %v2477 = vadd.f32 %v2435, %v2469
        %v2478 = vld [vmem:[#allocation5 + $0x34] sm:$0x1]
        %v2479 = vld [vmem:[#allocation7 + $0x34] sm:$0x1]
        %v2480 = vlaneseq
        %v2481 = vshrl.u32 %v2480, 7
        %v2482 = vsub.s32 0, %v2481
        %v2483 = vrot.slane %v2478, %v2482
        %v2484 = vsub.f32 %v250, %v2483
        %v2485 = vsub.f32 %v251, %v2483
        %v2486 = vsub.f32 %v252, %v2483
        %v2487 = vsub.f32 %v253, %v2483
        %v2488 = vsub.f32 %v254, %v2483
        %v2489 = vsub.f32 %v255, %v2483
        %v2490 = vsub.f32 %v256, %v2483
        %v2491 = vsub.f32 %v257, %v2483
        %v2492 = vmax.f32 %v2484, 0.0
        %v2493 = vmax.f32 %v2485, 0.0
        %v2494 = vmax.f32 %v2486, 0.0
        %v2495 = vmax.f32 %v2487, 0.0
        %v2496 = vmax.f32 %v2488, 0.0
        %v2497 = vmax.f32 %v2489, 0.0
        %v2498 = vmax.f32 %v2490, 0.0
        %v2499 = vmax.f32 %v2491, 0.0
        %v2500 = vlaneseq
        %v2501 = vshrl.u32 %v2500, 7
        %v2502 = vsub.s32 0, %v2501
        %v2503 = vrot.slane %v2479, %v2502
        %v2504 = vmul.f32 %v2503, %v2492
        %v2505 = vmul.f32 %v2503, %v2493
        %v2506 = vmul.f32 %v2503, %v2494
        %v2507 = vmul.f32 %v2503, %v2495
        %v2508 = vmul.f32 %v2503, %v2496
        %v2509 = vmul.f32 %v2503, %v2497
        %v2510 = vmul.f32 %v2503, %v2498
        %v2511 = vmul.f32 %v2503, %v2499
        %v2512 = vadd.f32 %v2470, %v2504
        %v2513 = vadd.f32 %v2471, %v2505
        %v2514 = vadd.f32 %v2472, %v2506
        %v2515 = vadd.f32 %v2473, %v2507
        %v2516 = vadd.f32 %v2474, %v2508
        %v2517 = vadd.f32 %v2475, %v2509
        %v2518 = vadd.f32 %v2476, %v2510
        %v2519 = vadd.f32 %v2477, %v2511
        %v2520 = vld [vmem:[#allocation5 + $0x35] sm:$0x1]
        %v2521 = vld [vmem:[#allocation7 + $0x35] sm:$0x1]
        %v2522 = vlaneseq
        %v2523 = vshrl.u32 %v2522, 7
        %v2524 = vsub.s32 0, %v2523
        %v2525 = vrot.slane %v2520, %v2524
        %v2526 = vsub.f32 %v250, %v2525
        %v2527 = vsub.f32 %v251, %v2525
        %v2528 = vsub.f32 %v252, %v2525
        %v2529 = vsub.f32 %v253, %v2525
        %v2530 = vsub.f32 %v254, %v2525
        %v2531 = vsub.f32 %v255, %v2525
        %v2532 = vsub.f32 %v256, %v2525
        %v2533 = vsub.f32 %v257, %v2525
        %v2534 = vmax.f32 %v2526, 0.0
        %v2535 = vmax.f32 %v2527, 0.0
        %v2536 = vmax.f32 %v2528, 0.0
        %v2537 = vmax.f32 %v2529, 0.0
        %v2538 = vmax.f32 %v2530, 0.0
        %v2539 = vmax.f32 %v2531, 0.0
        %v2540 = vmax.f32 %v2532, 0.0
        %v2541 = vmax.f32 %v2533, 0.0
        %v2542 = vlaneseq
        %v2543 = vshrl.u32 %v2542, 7
        %v2544 = vsub.s32 0, %v2543
        %v2545 = vrot.slane %v2521, %v2544
        %v2546 = vmul.f32 %v2545, %v2534
        %v2547 = vmul.f32 %v2545, %v2535
        %v2548 = vmul.f32 %v2545, %v2536
        %v2549 = vmul.f32 %v2545, %v2537
        %v2550 = vmul.f32 %v2545, %v2538
        %v2551 = vmul.f32 %v2545, %v2539
        %v2552 = vmul.f32 %v2545, %v2540
        %v2553 = vmul.f32 %v2545, %v2541
        %v2554 = vadd.f32 %v2512, %v2546
        %v2555 = vadd.f32 %v2513, %v2547
        %v2556 = vadd.f32 %v2514, %v2548
        %v2557 = vadd.f32 %v2515, %v2549
        %v2558 = vadd.f32 %v2516, %v2550
        %v2559 = vadd.f32 %v2517, %v2551
        %v2560 = vadd.f32 %v2518, %v2552
        %v2561 = vadd.f32 %v2519, %v2553
        %v2562 = vld [vmem:[#allocation5 + $0x36] sm:$0x1]
        %v2563 = vld [vmem:[#allocation7 + $0x36] sm:$0x1]
        %v2564 = vlaneseq
        %v2565 = vshrl.u32 %v2564, 7
        %v2566 = vsub.s32 0, %v2565
        %v2567 = vrot.slane %v2562, %v2566
        %v2568 = vsub.f32 %v250, %v2567
        %v2569 = vsub.f32 %v251, %v2567
        %v2570 = vsub.f32 %v252, %v2567
        %v2571 = vsub.f32 %v253, %v2567
        %v2572 = vsub.f32 %v254, %v2567
        %v2573 = vsub.f32 %v255, %v2567
        %v2574 = vsub.f32 %v256, %v2567
        %v2575 = vsub.f32 %v257, %v2567
        %v2576 = vmax.f32 %v2568, 0.0
        %v2577 = vmax.f32 %v2569, 0.0
        %v2578 = vmax.f32 %v2570, 0.0
        %v2579 = vmax.f32 %v2571, 0.0
        %v2580 = vmax.f32 %v2572, 0.0
        %v2581 = vmax.f32 %v2573, 0.0
        %v2582 = vmax.f32 %v2574, 0.0
        %v2583 = vmax.f32 %v2575, 0.0
        %v2584 = vlaneseq
        %v2585 = vshrl.u32 %v2584, 7
        %v2586 = vsub.s32 0, %v2585
        %v2587 = vrot.slane %v2563, %v2586
        %v2588 = vmul.f32 %v2587, %v2576
        %v2589 = vmul.f32 %v2587, %v2577
        %v2590 = vmul.f32 %v2587, %v2578
        %v2591 = vmul.f32 %v2587, %v2579
        %v2592 = vmul.f32 %v2587, %v2580
        %v2593 = vmul.f32 %v2587, %v2581
        %v2594 = vmul.f32 %v2587, %v2582
        %v2595 = vmul.f32 %v2587, %v2583
        %v2596 = vadd.f32 %v2554, %v2588
        %v2597 = vadd.f32 %v2555, %v2589
        %v2598 = vadd.f32 %v2556, %v2590
        %v2599 = vadd.f32 %v2557, %v2591
        %v2600 = vadd.f32 %v2558, %v2592
        %v2601 = vadd.f32 %v2559, %v2593
        %v2602 = vadd.f32 %v2560, %v2594
        %v2603 = vadd.f32 %v2561, %v2595
        %v2604 = vld [vmem:[#allocation5 + $0x37] sm:$0x1]
        %v2605 = vld [vmem:[#allocation7 + $0x37] sm:$0x1]
        %v2606 = vlaneseq
        %v2607 = vshrl.u32 %v2606, 7
        %v2608 = vsub.s32 0, %v2607
        %v2609 = vrot.slane %v2604, %v2608
        %v2610 = vsub.f32 %v250, %v2609
        %v2611 = vsub.f32 %v251, %v2609
        %v2612 = vsub.f32 %v252, %v2609
        %v2613 = vsub.f32 %v253, %v2609
        %v2614 = vsub.f32 %v254, %v2609
        %v2615 = vsub.f32 %v255, %v2609
        %v2616 = vsub.f32 %v256, %v2609
        %v2617 = vsub.f32 %v257, %v2609
        %v2618 = vmax.f32 %v2610, 0.0
        %v2619 = vmax.f32 %v2611, 0.0
        %v2620 = vmax.f32 %v2612, 0.0
        %v2621 = vmax.f32 %v2613, 0.0
        %v2622 = vmax.f32 %v2614, 0.0
        %v2623 = vmax.f32 %v2615, 0.0
        %v2624 = vmax.f32 %v2616, 0.0
        %v2625 = vmax.f32 %v2617, 0.0
        %v2626 = vlaneseq
        %v2627 = vshrl.u32 %v2626, 7
        %v2628 = vsub.s32 0, %v2627
        %v2629 = vrot.slane %v2605, %v2628
        %v2630 = vmul.f32 %v2629, %v2618
        %v2631 = vmul.f32 %v2629, %v2619
        %v2632 = vmul.f32 %v2629, %v2620
        %v2633 = vmul.f32 %v2629, %v2621
        %v2634 = vmul.f32 %v2629, %v2622
        %v2635 = vmul.f32 %v2629, %v2623
        %v2636 = vmul.f32 %v2629, %v2624
        %v2637 = vmul.f32 %v2629, %v2625
        %v2638 = vadd.f32 %v2596, %v2630
        %v2639 = vadd.f32 %v2597, %v2631
        %v2640 = vadd.f32 %v2598, %v2632
        %v2641 = vadd.f32 %v2599, %v2633
        %v2642 = vadd.f32 %v2600, %v2634
        %v2643 = vadd.f32 %v2601, %v2635
        %v2644 = vadd.f32 %v2602, %v2636
        %v2645 = vadd.f32 %v2603, %v2637
        %v2646 = vld [vmem:[#allocation5 + $0x38] sm:$0x1]
        %v2647 = vld [vmem:[#allocation7 + $0x38] sm:$0x1]
        %v2648 = vlaneseq
        %v2649 = vshrl.u32 %v2648, 7
        %v2650 = vsub.s32 0, %v2649
        %v2651 = vrot.slane %v2646, %v2650
        %v2652 = vsub.f32 %v250, %v2651
        %v2653 = vsub.f32 %v251, %v2651
        %v2654 = vsub.f32 %v252, %v2651
        %v2655 = vsub.f32 %v253, %v2651
        %v2656 = vsub.f32 %v254, %v2651
        %v2657 = vsub.f32 %v255, %v2651
        %v2658 = vsub.f32 %v256, %v2651
        %v2659 = vsub.f32 %v257, %v2651
        %v2660 = vmax.f32 %v2652, 0.0
        %v2661 = vmax.f32 %v2653, 0.0
        %v2662 = vmax.f32 %v2654, 0.0
        %v2663 = vmax.f32 %v2655, 0.0
        %v2664 = vmax.f32 %v2656, 0.0
        %v2665 = vmax.f32 %v2657, 0.0
        %v2666 = vmax.f32 %v2658, 0.0
        %v2667 = vmax.f32 %v2659, 0.0
        %v2668 = vlaneseq
        %v2669 = vshrl.u32 %v2668, 7
        %v2670 = vsub.s32 0, %v2669
        %v2671 = vrot.slane %v2647, %v2670
        %v2672 = vmul.f32 %v2671, %v2660
        %v2673 = vmul.f32 %v2671, %v2661
        %v2674 = vmul.f32 %v2671, %v2662
        %v2675 = vmul.f32 %v2671, %v2663
        %v2676 = vmul.f32 %v2671, %v2664
        %v2677 = vmul.f32 %v2671, %v2665
        %v2678 = vmul.f32 %v2671, %v2666
        %v2679 = vmul.f32 %v2671, %v2667
        %v2680 = vadd.f32 %v2638, %v2672
        %v2681 = vadd.f32 %v2639, %v2673
        %v2682 = vadd.f32 %v2640, %v2674
        %v2683 = vadd.f32 %v2641, %v2675
        %v2684 = vadd.f32 %v2642, %v2676
        %v2685 = vadd.f32 %v2643, %v2677
        %v2686 = vadd.f32 %v2644, %v2678
        %v2687 = vadd.f32 %v2645, %v2679
        %v2688 = vld [vmem:[#allocation5 + $0x39] sm:$0x1]
        %v2689 = vld [vmem:[#allocation7 + $0x39] sm:$0x1]
        %v2690 = vlaneseq
        %v2691 = vshrl.u32 %v2690, 7
        %v2692 = vsub.s32 0, %v2691
        %v2693 = vrot.slane %v2688, %v2692
        %v2694 = vsub.f32 %v250, %v2693
        %v2695 = vsub.f32 %v251, %v2693
        %v2696 = vsub.f32 %v252, %v2693
        %v2697 = vsub.f32 %v253, %v2693
        %v2698 = vsub.f32 %v254, %v2693
        %v2699 = vsub.f32 %v255, %v2693
        %v2700 = vsub.f32 %v256, %v2693
        %v2701 = vsub.f32 %v257, %v2693
        %v2702 = vmax.f32 %v2694, 0.0
        %v2703 = vmax.f32 %v2695, 0.0
        %v2704 = vmax.f32 %v2696, 0.0
        %v2705 = vmax.f32 %v2697, 0.0
        %v2706 = vmax.f32 %v2698, 0.0
        %v2707 = vmax.f32 %v2699, 0.0
        %v2708 = vmax.f32 %v2700, 0.0
        %v2709 = vmax.f32 %v2701, 0.0
        %v2710 = vlaneseq
        %v2711 = vshrl.u32 %v2710, 7
        %v2712 = vsub.s32 0, %v2711
        %v2713 = vrot.slane %v2689, %v2712
        %v2714 = vmul.f32 %v2713, %v2702
        %v2715 = vmul.f32 %v2713, %v2703
        %v2716 = vmul.f32 %v2713, %v2704
        %v2717 = vmul.f32 %v2713, %v2705
        %v2718 = vmul.f32 %v2713, %v2706
        %v2719 = vmul.f32 %v2713, %v2707
        %v2720 = vmul.f32 %v2713, %v2708
        %v2721 = vmul.f32 %v2713, %v2709
        %v2722 = vadd.f32 %v2680, %v2714
        %v2723 = vadd.f32 %v2681, %v2715
        %v2724 = vadd.f32 %v2682, %v2716
        %v2725 = vadd.f32 %v2683, %v2717
        %v2726 = vadd.f32 %v2684, %v2718
        %v2727 = vadd.f32 %v2685, %v2719
        %v2728 = vadd.f32 %v2686, %v2720
        %v2729 = vadd.f32 %v2687, %v2721
        %v2730 = vld [vmem:[#allocation5 + $0x3a] sm:$0x1]
        %v2731 = vld [vmem:[#allocation7 + $0x3a] sm:$0x1]
        %v2732 = vlaneseq
        %v2733 = vshrl.u32 %v2732, 7
        %v2734 = vsub.s32 0, %v2733
        %v2735 = vrot.slane %v2730, %v2734
        %v2736 = vsub.f32 %v250, %v2735
        %v2737 = vsub.f32 %v251, %v2735
        %v2738 = vsub.f32 %v252, %v2735
        %v2739 = vsub.f32 %v253, %v2735
        %v2740 = vsub.f32 %v254, %v2735
        %v2741 = vsub.f32 %v255, %v2735
        %v2742 = vsub.f32 %v256, %v2735
        %v2743 = vsub.f32 %v257, %v2735
        %v2744 = vmax.f32 %v2736, 0.0
        %v2745 = vmax.f32 %v2737, 0.0
        %v2746 = vmax.f32 %v2738, 0.0
        %v2747 = vmax.f32 %v2739, 0.0
        %v2748 = vmax.f32 %v2740, 0.0
        %v2749 = vmax.f32 %v2741, 0.0
        %v2750 = vmax.f32 %v2742, 0.0
        %v2751 = vmax.f32 %v2743, 0.0
        %v2752 = vlaneseq
        %v2753 = vshrl.u32 %v2752, 7
        %v2754 = vsub.s32 0, %v2753
        %v2755 = vrot.slane %v2731, %v2754
        %v2756 = vmul.f32 %v2755, %v2744
        %v2757 = vmul.f32 %v2755, %v2745
        %v2758 = vmul.f32 %v2755, %v2746
        %v2759 = vmul.f32 %v2755, %v2747
        %v2760 = vmul.f32 %v2755, %v2748
        %v2761 = vmul.f32 %v2755, %v2749
        %v2762 = vmul.f32 %v2755, %v2750
        %v2763 = vmul.f32 %v2755, %v2751
        %v2764 = vadd.f32 %v2722, %v2756
        %v2765 = vadd.f32 %v2723, %v2757
        %v2766 = vadd.f32 %v2724, %v2758
        %v2767 = vadd.f32 %v2725, %v2759
        %v2768 = vadd.f32 %v2726, %v2760
        %v2769 = vadd.f32 %v2727, %v2761
        %v2770 = vadd.f32 %v2728, %v2762
        %v2771 = vadd.f32 %v2729, %v2763
        %v2772 = vld [vmem:[#allocation5 + $0x3b] sm:$0x1]
        %v2773 = vld [vmem:[#allocation7 + $0x3b] sm:$0x1]
        %v2774 = vlaneseq
        %v2775 = vshrl.u32 %v2774, 7
        %v2776 = vsub.s32 0, %v2775
        %v2777 = vrot.slane %v2772, %v2776
        %v2778 = vsub.f32 %v250, %v2777
        %v2779 = vsub.f32 %v251, %v2777
        %v2780 = vsub.f32 %v252, %v2777
        %v2781 = vsub.f32 %v253, %v2777
        %v2782 = vsub.f32 %v254, %v2777
        %v2783 = vsub.f32 %v255, %v2777
        %v2784 = vsub.f32 %v256, %v2777
        %v2785 = vsub.f32 %v257, %v2777
        %v2786 = vmax.f32 %v2778, 0.0
        %v2787 = vmax.f32 %v2779, 0.0
        %v2788 = vmax.f32 %v2780, 0.0
        %v2789 = vmax.f32 %v2781, 0.0
        %v2790 = vmax.f32 %v2782, 0.0
        %v2791 = vmax.f32 %v2783, 0.0
        %v2792 = vmax.f32 %v2784, 0.0
        %v2793 = vmax.f32 %v2785, 0.0
        %v2794 = vlaneseq
        %v2795 = vshrl.u32 %v2794, 7
        %v2796 = vsub.s32 0, %v2795
        %v2797 = vrot.slane %v2773, %v2796
        %v2798 = vmul.f32 %v2797, %v2786
        %v2799 = vmul.f32 %v2797, %v2787
        %v2800 = vmul.f32 %v2797, %v2788
        %v2801 = vmul.f32 %v2797, %v2789
        %v2802 = vmul.f32 %v2797, %v2790
        %v2803 = vmul.f32 %v2797, %v2791
        %v2804 = vmul.f32 %v2797, %v2792
        %v2805 = vmul.f32 %v2797, %v2793
        %v2806 = vadd.f32 %v2764, %v2798
        %v2807 = vadd.f32 %v2765, %v2799
        %v2808 = vadd.f32 %v2766, %v2800
        %v2809 = vadd.f32 %v2767, %v2801
        %v2810 = vadd.f32 %v2768, %v2802
        %v2811 = vadd.f32 %v2769, %v2803
        %v2812 = vadd.f32 %v2770, %v2804
        %v2813 = vadd.f32 %v2771, %v2805
        %v2814 = vld [vmem:[#allocation5 + $0x3c] sm:$0x1]
        %v2815 = vld [vmem:[#allocation7 + $0x3c] sm:$0x1]
        %v2816 = vlaneseq
        %v2817 = vshrl.u32 %v2816, 7
        %v2818 = vsub.s32 0, %v2817
        %v2819 = vrot.slane %v2814, %v2818
        %v2820 = vsub.f32 %v250, %v2819
        %v2821 = vsub.f32 %v251, %v2819
        %v2822 = vsub.f32 %v252, %v2819
        %v2823 = vsub.f32 %v253, %v2819
        %v2824 = vsub.f32 %v254, %v2819
        %v2825 = vsub.f32 %v255, %v2819
        %v2826 = vsub.f32 %v256, %v2819
        %v2827 = vsub.f32 %v257, %v2819
        %v2828 = vmax.f32 %v2820, 0.0
        %v2829 = vmax.f32 %v2821, 0.0
        %v2830 = vmax.f32 %v2822, 0.0
        %v2831 = vmax.f32 %v2823, 0.0
        %v2832 = vmax.f32 %v2824, 0.0
        %v2833 = vmax.f32 %v2825, 0.0
        %v2834 = vmax.f32 %v2826, 0.0
        %v2835 = vmax.f32 %v2827, 0.0
        %v2836 = vlaneseq
        %v2837 = vshrl.u32 %v2836, 7
        %v2838 = vsub.s32 0, %v2837
        %v2839 = vrot.slane %v2815, %v2838
        %v2840 = vmul.f32 %v2839, %v2828
        %v2841 = vmul.f32 %v2839, %v2829
        %v2842 = vmul.f32 %v2839, %v2830
        %v2843 = vmul.f32 %v2839, %v2831
        %v2844 = vmul.f32 %v2839, %v2832
        %v2845 = vmul.f32 %v2839, %v2833
        %v2846 = vmul.f32 %v2839, %v2834
        %v2847 = vmul.f32 %v2839, %v2835
        %v2848 = vadd.f32 %v2806, %v2840
        %v2849 = vadd.f32 %v2807, %v2841
        %v2850 = vadd.f32 %v2808, %v2842
        %v2851 = vadd.f32 %v2809, %v2843
        %v2852 = vadd.f32 %v2810, %v2844
        %v2853 = vadd.f32 %v2811, %v2845
        %v2854 = vadd.f32 %v2812, %v2846
        %v2855 = vadd.f32 %v2813, %v2847
        %v2856 = vld [vmem:[#allocation5 + $0x3d] sm:$0x1]
        %v2857 = vld [vmem:[#allocation7 + $0x3d] sm:$0x1]
        %v2858 = vlaneseq
        %v2859 = vshrl.u32 %v2858, 7
        %v2860 = vsub.s32 0, %v2859
        %v2861 = vrot.slane %v2856, %v2860
        %v2862 = vsub.f32 %v250, %v2861
        %v2863 = vsub.f32 %v251, %v2861
        %v2864 = vsub.f32 %v252, %v2861
        %v2865 = vsub.f32 %v253, %v2861
        %v2866 = vsub.f32 %v254, %v2861
        %v2867 = vsub.f32 %v255, %v2861
        %v2868 = vsub.f32 %v256, %v2861
        %v2869 = vsub.f32 %v257, %v2861
        %v2870 = vmax.f32 %v2862, 0.0
        %v2871 = vmax.f32 %v2863, 0.0
        %v2872 = vmax.f32 %v2864, 0.0
        %v2873 = vmax.f32 %v2865, 0.0
        %v2874 = vmax.f32 %v2866, 0.0
        %v2875 = vmax.f32 %v2867, 0.0
        %v2876 = vmax.f32 %v2868, 0.0
        %v2877 = vmax.f32 %v2869, 0.0
        %v2878 = vlaneseq
        %v2879 = vshrl.u32 %v2878, 7
        %v2880 = vsub.s32 0, %v2879
        %v2881 = vrot.slane %v2857, %v2880
        %v2882 = vmul.f32 %v2881, %v2870
        %v2883 = vmul.f32 %v2881, %v2871
        %v2884 = vmul.f32 %v2881, %v2872
        %v2885 = vmul.f32 %v2881, %v2873
        %v2886 = vmul.f32 %v2881, %v2874
        %v2887 = vmul.f32 %v2881, %v2875
        %v2888 = vmul.f32 %v2881, %v2876
        %v2889 = vmul.f32 %v2881, %v2877
        %v2890 = vadd.f32 %v2848, %v2882
        %v2891 = vadd.f32 %v2849, %v2883
        %v2892 = vadd.f32 %v2850, %v2884
        %v2893 = vadd.f32 %v2851, %v2885
        %v2894 = vadd.f32 %v2852, %v2886
        %v2895 = vadd.f32 %v2853, %v2887
        %v2896 = vadd.f32 %v2854, %v2888
        %v2897 = vadd.f32 %v2855, %v2889
        %v2898 = vld [vmem:[#allocation5 + $0x3e] sm:$0x1]
        %v2899 = vld [vmem:[#allocation7 + $0x3e] sm:$0x1]
        %v2900 = vlaneseq
        %v2901 = vshrl.u32 %v2900, 7
        %v2902 = vsub.s32 0, %v2901
        %v2903 = vrot.slane %v2898, %v2902
        %v2904 = vsub.f32 %v250, %v2903
        %v2905 = vsub.f32 %v251, %v2903
        %v2906 = vsub.f32 %v252, %v2903
        %v2907 = vsub.f32 %v253, %v2903
        %v2908 = vsub.f32 %v254, %v2903
        %v2909 = vsub.f32 %v255, %v2903
        %v2910 = vsub.f32 %v256, %v2903
        %v2911 = vsub.f32 %v257, %v2903
        %v2912 = vmax.f32 %v2904, 0.0
        %v2913 = vmax.f32 %v2905, 0.0
        %v2914 = vmax.f32 %v2906, 0.0
        %v2915 = vmax.f32 %v2907, 0.0
        %v2916 = vmax.f32 %v2908, 0.0
        %v2917 = vmax.f32 %v2909, 0.0
        %v2918 = vmax.f32 %v2910, 0.0
        %v2919 = vmax.f32 %v2911, 0.0
        %v2920 = vlaneseq
        %v2921 = vshrl.u32 %v2920, 7
        %v2922 = vsub.s32 0, %v2921
        %v2923 = vrot.slane %v2899, %v2922
        %v2924 = vmul.f32 %v2923, %v2912
        %v2925 = vmul.f32 %v2923, %v2913
        %v2926 = vmul.f32 %v2923, %v2914
        %v2927 = vmul.f32 %v2923, %v2915
        %v2928 = vmul.f32 %v2923, %v2916
        %v2929 = vmul.f32 %v2923, %v2917
        %v2930 = vmul.f32 %v2923, %v2918
        %v2931 = vmul.f32 %v2923, %v2919
        %v2932 = vadd.f32 %v2890, %v2924
        %v2933 = vadd.f32 %v2891, %v2925
        %v2934 = vadd.f32 %v2892, %v2926
        %v2935 = vadd.f32 %v2893, %v2927
        %v2936 = vadd.f32 %v2894, %v2928
        %v2937 = vadd.f32 %v2895, %v2929
        %v2938 = vadd.f32 %v2896, %v2930
        %v2939 = vadd.f32 %v2897, %v2931
        %v2940 = vld [vmem:[#allocation5 + $0x3f] sm:$0x1]
        %v2941 = vld [vmem:[#allocation7 + $0x3f] sm:$0x1]
        %v2942 = vlaneseq
        %v2943 = vshrl.u32 %v2942, 7
        %v2944 = vsub.s32 0, %v2943
        %v2945 = vrot.slane %v2940, %v2944
        %v2946 = vsub.f32 %v250, %v2945
        %v2947 = vsub.f32 %v251, %v2945
        %v2948 = vsub.f32 %v252, %v2945
        %v2949 = vsub.f32 %v253, %v2945
        %v2950 = vsub.f32 %v254, %v2945
        %v2951 = vsub.f32 %v255, %v2945
        %v2952 = vsub.f32 %v256, %v2945
        %v2953 = vsub.f32 %v257, %v2945
        %v2954 = vmax.f32 %v2946, 0.0
        %v2955 = vmax.f32 %v2947, 0.0
        %v2956 = vmax.f32 %v2948, 0.0
        %v2957 = vmax.f32 %v2949, 0.0
        %v2958 = vmax.f32 %v2950, 0.0
        %v2959 = vmax.f32 %v2951, 0.0
        %v2960 = vmax.f32 %v2952, 0.0
        %v2961 = vmax.f32 %v2953, 0.0
        %v2962 = vlaneseq
        %v2963 = vshrl.u32 %v2962, 7
        %v2964 = vsub.s32 0, %v2963
        %v2965 = vrot.slane %v2941, %v2964
        %v2966 = vmul.f32 %v2965, %v2954
        %v2967 = vmul.f32 %v2965, %v2955
        %v2968 = vmul.f32 %v2965, %v2956
        %v2969 = vmul.f32 %v2965, %v2957
        %v2970 = vmul.f32 %v2965, %v2958
        %v2971 = vmul.f32 %v2965, %v2959
        %v2972 = vmul.f32 %v2965, %v2960
        %v2973 = vmul.f32 %v2965, %v2961
        %v2974 = vadd.f32 %v2932, %v2966
        %v2975 = vadd.f32 %v2933, %v2967
        %v2976 = vadd.f32 %v2934, %v2968
        %v2977 = vadd.f32 %v2935, %v2969
        %v2978 = vadd.f32 %v2936, %v2970
        %v2979 = vadd.f32 %v2937, %v2971
        %v2980 = vadd.f32 %v2938, %v2972
        %v2981 = vadd.f32 %v2939, %v2973
        %v2982 = vld [vmem:[#allocation5 + $0x40] sm:$0x1]
        %v2983 = vld [vmem:[#allocation7 + $0x40] sm:$0x1]
        %v2984 = vlaneseq
        %v2985 = vshrl.u32 %v2984, 7
        %v2986 = vsub.s32 0, %v2985
        %v2987 = vrot.slane %v2982, %v2986
        %v2988 = vsub.f32 %v250, %v2987
        %v2989 = vsub.f32 %v251, %v2987
        %v2990 = vsub.f32 %v252, %v2987
        %v2991 = vsub.f32 %v253, %v2987
        %v2992 = vsub.f32 %v254, %v2987
        %v2993 = vsub.f32 %v255, %v2987
        %v2994 = vsub.f32 %v256, %v2987
        %v2995 = vsub.f32 %v257, %v2987
        %v2996 = vmax.f32 %v2988, 0.0
        %v2997 = vmax.f32 %v2989, 0.0
        %v2998 = vmax.f32 %v2990, 0.0
        %v2999 = vmax.f32 %v2991, 0.0
        %v3000 = vmax.f32 %v2992, 0.0
        %v3001 = vmax.f32 %v2993, 0.0
        %v3002 = vmax.f32 %v2994, 0.0
        %v3003 = vmax.f32 %v2995, 0.0
        %v3004 = vlaneseq
        %v3005 = vshrl.u32 %v3004, 7
        %v3006 = vsub.s32 0, %v3005
        %v3007 = vrot.slane %v2983, %v3006
        %v3008 = vmul.f32 %v3007, %v2996
        %v3009 = vmul.f32 %v3007, %v2997
        %v3010 = vmul.f32 %v3007, %v2998
        %v3011 = vmul.f32 %v3007, %v2999
        %v3012 = vmul.f32 %v3007, %v3000
        %v3013 = vmul.f32 %v3007, %v3001
        %v3014 = vmul.f32 %v3007, %v3002
        %v3015 = vmul.f32 %v3007, %v3003
        %v3016 = vadd.f32 %v2974, %v3008
        %v3017 = vadd.f32 %v2975, %v3009
        %v3018 = vadd.f32 %v2976, %v3010
        %v3019 = vadd.f32 %v2977, %v3011
        %v3020 = vadd.f32 %v2978, %v3012
        %v3021 = vadd.f32 %v2979, %v3013
        %v3022 = vadd.f32 %v2980, %v3014
        %v3023 = vadd.f32 %v2981, %v3015
        %v3024 = vld [vmem:[#allocation5 + $0x41] sm:$0x1]
        %v3025 = vld [vmem:[#allocation7 + $0x41] sm:$0x1]
        %v3026 = vlaneseq
        %v3027 = vshrl.u32 %v3026, 7
        %v3028 = vsub.s32 0, %v3027
        %v3029 = vrot.slane %v3024, %v3028
        %v3030 = vsub.f32 %v250, %v3029
        %v3031 = vsub.f32 %v251, %v3029
        %v3032 = vsub.f32 %v252, %v3029
        %v3033 = vsub.f32 %v253, %v3029
        %v3034 = vsub.f32 %v254, %v3029
        %v3035 = vsub.f32 %v255, %v3029
        %v3036 = vsub.f32 %v256, %v3029
        %v3037 = vsub.f32 %v257, %v3029
        %v3038 = vmax.f32 %v3030, 0.0
        %v3039 = vmax.f32 %v3031, 0.0
        %v3040 = vmax.f32 %v3032, 0.0
        %v3041 = vmax.f32 %v3033, 0.0
        %v3042 = vmax.f32 %v3034, 0.0
        %v3043 = vmax.f32 %v3035, 0.0
        %v3044 = vmax.f32 %v3036, 0.0
        %v3045 = vmax.f32 %v3037, 0.0
        %v3046 = vlaneseq
        %v3047 = vshrl.u32 %v3046, 7
        %v3048 = vsub.s32 0, %v3047
        %v3049 = vrot.slane %v3025, %v3048
        %v3050 = vmul.f32 %v3049, %v3038
        %v3051 = vmul.f32 %v3049, %v3039
        %v3052 = vmul.f32 %v3049, %v3040
        %v3053 = vmul.f32 %v3049, %v3041
        %v3054 = vmul.f32 %v3049, %v3042
        %v3055 = vmul.f32 %v3049, %v3043
        %v3056 = vmul.f32 %v3049, %v3044
        %v3057 = vmul.f32 %v3049, %v3045
        %v3058 = vadd.f32 %v3016, %v3050
        %v3059 = vadd.f32 %v3017, %v3051
        %v3060 = vadd.f32 %v3018, %v3052
        %v3061 = vadd.f32 %v3019, %v3053
        %v3062 = vadd.f32 %v3020, %v3054
        %v3063 = vadd.f32 %v3021, %v3055
        %v3064 = vadd.f32 %v3022, %v3056
        %v3065 = vadd.f32 %v3023, %v3057
        %v3066 = vld [vmem:[#allocation5 + $0x42] sm:$0x1]
        %v3067 = vld [vmem:[#allocation7 + $0x42] sm:$0x1]
        %v3068 = vlaneseq
        %v3069 = vshrl.u32 %v3068, 7
        %v3070 = vsub.s32 0, %v3069
        %v3071 = vrot.slane %v3066, %v3070
        %v3072 = vsub.f32 %v250, %v3071
        %v3073 = vsub.f32 %v251, %v3071
        %v3074 = vsub.f32 %v252, %v3071
        %v3075 = vsub.f32 %v253, %v3071
        %v3076 = vsub.f32 %v254, %v3071
        %v3077 = vsub.f32 %v255, %v3071
        %v3078 = vsub.f32 %v256, %v3071
        %v3079 = vsub.f32 %v257, %v3071
        %v3080 = vmax.f32 %v3072, 0.0
        %v3081 = vmax.f32 %v3073, 0.0
        %v3082 = vmax.f32 %v3074, 0.0
        %v3083 = vmax.f32 %v3075, 0.0
        %v3084 = vmax.f32 %v3076, 0.0
        %v3085 = vmax.f32 %v3077, 0.0
        %v3086 = vmax.f32 %v3078, 0.0
        %v3087 = vmax.f32 %v3079, 0.0
        %v3088 = vlaneseq
        %v3089 = vshrl.u32 %v3088, 7
        %v3090 = vsub.s32 0, %v3089
        %v3091 = vrot.slane %v3067, %v3090
        %v3092 = vmul.f32 %v3091, %v3080
        %v3093 = vmul.f32 %v3091, %v3081
        %v3094 = vmul.f32 %v3091, %v3082
        %v3095 = vmul.f32 %v3091, %v3083
        %v3096 = vmul.f32 %v3091, %v3084
        %v3097 = vmul.f32 %v3091, %v3085
        %v3098 = vmul.f32 %v3091, %v3086
        %v3099 = vmul.f32 %v3091, %v3087
        %v3100 = vadd.f32 %v3058, %v3092
        %v3101 = vadd.f32 %v3059, %v3093
        %v3102 = vadd.f32 %v3060, %v3094
        %v3103 = vadd.f32 %v3061, %v3095
        %v3104 = vadd.f32 %v3062, %v3096
        %v3105 = vadd.f32 %v3063, %v3097
        %v3106 = vadd.f32 %v3064, %v3098
        %v3107 = vadd.f32 %v3065, %v3099
        %v3108 = vld [vmem:[#allocation5 + $0x43] sm:$0x1]
        %v3109 = vld [vmem:[#allocation7 + $0x43] sm:$0x1]
        %v3110 = vlaneseq
        %v3111 = vshrl.u32 %v3110, 7
        %v3112 = vsub.s32 0, %v3111
        %v3113 = vrot.slane %v3108, %v3112
        %v3114 = vsub.f32 %v250, %v3113
        %v3115 = vsub.f32 %v251, %v3113
        %v3116 = vsub.f32 %v252, %v3113
        %v3117 = vsub.f32 %v253, %v3113
        %v3118 = vsub.f32 %v254, %v3113
        %v3119 = vsub.f32 %v255, %v3113
        %v3120 = vsub.f32 %v256, %v3113
        %v3121 = vsub.f32 %v257, %v3113
        %v3122 = vmax.f32 %v3114, 0.0
        %v3123 = vmax.f32 %v3115, 0.0
        %v3124 = vmax.f32 %v3116, 0.0
        %v3125 = vmax.f32 %v3117, 0.0
        %v3126 = vmax.f32 %v3118, 0.0
        %v3127 = vmax.f32 %v3119, 0.0
        %v3128 = vmax.f32 %v3120, 0.0
        %v3129 = vmax.f32 %v3121, 0.0
        %v3130 = vlaneseq
        %v3131 = vshrl.u32 %v3130, 7
        %v3132 = vsub.s32 0, %v3131
        %v3133 = vrot.slane %v3109, %v3132
        %v3134 = vmul.f32 %v3133, %v3122
        %v3135 = vmul.f32 %v3133, %v3123
        %v3136 = vmul.f32 %v3133, %v3124
        %v3137 = vmul.f32 %v3133, %v3125
        %v3138 = vmul.f32 %v3133, %v3126
        %v3139 = vmul.f32 %v3133, %v3127
        %v3140 = vmul.f32 %v3133, %v3128
        %v3141 = vmul.f32 %v3133, %v3129
        %v3142 = vadd.f32 %v3100, %v3134
        %v3143 = vadd.f32 %v3101, %v3135
        %v3144 = vadd.f32 %v3102, %v3136
        %v3145 = vadd.f32 %v3103, %v3137
        %v3146 = vadd.f32 %v3104, %v3138
        %v3147 = vadd.f32 %v3105, %v3139
        %v3148 = vadd.f32 %v3106, %v3140
        %v3149 = vadd.f32 %v3107, %v3141
        %v3150 = vld [vmem:[#allocation5 + $0x44] sm:$0x1]
        %v3151 = vld [vmem:[#allocation7 + $0x44] sm:$0x1]
        %v3152 = vlaneseq
        %v3153 = vshrl.u32 %v3152, 7
        %v3154 = vsub.s32 0, %v3153
        %v3155 = vrot.slane %v3150, %v3154
        %v3156 = vsub.f32 %v250, %v3155
        %v3157 = vsub.f32 %v251, %v3155
        %v3158 = vsub.f32 %v252, %v3155
        %v3159 = vsub.f32 %v253, %v3155
        %v3160 = vsub.f32 %v254, %v3155
        %v3161 = vsub.f32 %v255, %v3155
        %v3162 = vsub.f32 %v256, %v3155
        %v3163 = vsub.f32 %v257, %v3155
        %v3164 = vmax.f32 %v3156, 0.0
        %v3165 = vmax.f32 %v3157, 0.0
        %v3166 = vmax.f32 %v3158, 0.0
        %v3167 = vmax.f32 %v3159, 0.0
        %v3168 = vmax.f32 %v3160, 0.0
        %v3169 = vmax.f32 %v3161, 0.0
        %v3170 = vmax.f32 %v3162, 0.0
        %v3171 = vmax.f32 %v3163, 0.0
        %v3172 = vlaneseq
        %v3173 = vshrl.u32 %v3172, 7
        %v3174 = vsub.s32 0, %v3173
        %v3175 = vrot.slane %v3151, %v3174
        %v3176 = vmul.f32 %v3175, %v3164
        %v3177 = vmul.f32 %v3175, %v3165
        %v3178 = vmul.f32 %v3175, %v3166
        %v3179 = vmul.f32 %v3175, %v3167
        %v3180 = vmul.f32 %v3175, %v3168
        %v3181 = vmul.f32 %v3175, %v3169
        %v3182 = vmul.f32 %v3175, %v3170
        %v3183 = vmul.f32 %v3175, %v3171
        %v3184 = vadd.f32 %v3142, %v3176
        %v3185 = vadd.f32 %v3143, %v3177
        %v3186 = vadd.f32 %v3144, %v3178
        %v3187 = vadd.f32 %v3145, %v3179
        %v3188 = vadd.f32 %v3146, %v3180
        %v3189 = vadd.f32 %v3147, %v3181
        %v3190 = vadd.f32 %v3148, %v3182
        %v3191 = vadd.f32 %v3149, %v3183
        %v3192 = vld [vmem:[#allocation5 + $0x45] sm:$0x1]
        %v3193 = vld [vmem:[#allocation7 + $0x45] sm:$0x1]
        %v3194 = vlaneseq
        %v3195 = vshrl.u32 %v3194, 7
        %v3196 = vsub.s32 0, %v3195
        %v3197 = vrot.slane %v3192, %v3196
        %v3198 = vsub.f32 %v250, %v3197
        %v3199 = vsub.f32 %v251, %v3197
        %v3200 = vsub.f32 %v252, %v3197
        %v3201 = vsub.f32 %v253, %v3197
        %v3202 = vsub.f32 %v254, %v3197
        %v3203 = vsub.f32 %v255, %v3197
        %v3204 = vsub.f32 %v256, %v3197
        %v3205 = vsub.f32 %v257, %v3197
        %v3206 = vmax.f32 %v3198, 0.0
        %v3207 = vmax.f32 %v3199, 0.0
        %v3208 = vmax.f32 %v3200, 0.0
        %v3209 = vmax.f32 %v3201, 0.0
        %v3210 = vmax.f32 %v3202, 0.0
        %v3211 = vmax.f32 %v3203, 0.0
        %v3212 = vmax.f32 %v3204, 0.0
        %v3213 = vmax.f32 %v3205, 0.0
        %v3214 = vlaneseq
        %v3215 = vshrl.u32 %v3214, 7
        %v3216 = vsub.s32 0, %v3215
        %v3217 = vrot.slane %v3193, %v3216
        %v3218 = vmul.f32 %v3217, %v3206
        %v3219 = vmul.f32 %v3217, %v3207
        %v3220 = vmul.f32 %v3217, %v3208
        %v3221 = vmul.f32 %v3217, %v3209
        %v3222 = vmul.f32 %v3217, %v3210
        %v3223 = vmul.f32 %v3217, %v3211
        %v3224 = vmul.f32 %v3217, %v3212
        %v3225 = vmul.f32 %v3217, %v3213
        %v3226 = vadd.f32 %v3184, %v3218
        %v3227 = vadd.f32 %v3185, %v3219
        %v3228 = vadd.f32 %v3186, %v3220
        %v3229 = vadd.f32 %v3187, %v3221
        %v3230 = vadd.f32 %v3188, %v3222
        %v3231 = vadd.f32 %v3189, %v3223
        %v3232 = vadd.f32 %v3190, %v3224
        %v3233 = vadd.f32 %v3191, %v3225
        %v3234 = vld [vmem:[#allocation5 + $0x46] sm:$0x1]
        %v3235 = vld [vmem:[#allocation7 + $0x46] sm:$0x1]
        %v3236 = vlaneseq
        %v3237 = vshrl.u32 %v3236, 7
        %v3238 = vsub.s32 0, %v3237
        %v3239 = vrot.slane %v3234, %v3238
        %v3240 = vsub.f32 %v250, %v3239
        %v3241 = vsub.f32 %v251, %v3239
        %v3242 = vsub.f32 %v252, %v3239
        %v3243 = vsub.f32 %v253, %v3239
        %v3244 = vsub.f32 %v254, %v3239
        %v3245 = vsub.f32 %v255, %v3239
        %v3246 = vsub.f32 %v256, %v3239
        %v3247 = vsub.f32 %v257, %v3239
        %v3248 = vmax.f32 %v3240, 0.0
        %v3249 = vmax.f32 %v3241, 0.0
        %v3250 = vmax.f32 %v3242, 0.0
        %v3251 = vmax.f32 %v3243, 0.0
        %v3252 = vmax.f32 %v3244, 0.0
        %v3253 = vmax.f32 %v3245, 0.0
        %v3254 = vmax.f32 %v3246, 0.0
        %v3255 = vmax.f32 %v3247, 0.0
        %v3256 = vlaneseq
        %v3257 = vshrl.u32 %v3256, 7
        %v3258 = vsub.s32 0, %v3257
        %v3259 = vrot.slane %v3235, %v3258
        %v3260 = vmul.f32 %v3259, %v3248
        %v3261 = vmul.f32 %v3259, %v3249
        %v3262 = vmul.f32 %v3259, %v3250
        %v3263 = vmul.f32 %v3259, %v3251
        %v3264 = vmul.f32 %v3259, %v3252
        %v3265 = vmul.f32 %v3259, %v3253
        %v3266 = vmul.f32 %v3259, %v3254
        %v3267 = vmul.f32 %v3259, %v3255
        %v3268 = vadd.f32 %v3226, %v3260
        %v3269 = vadd.f32 %v3227, %v3261
        %v3270 = vadd.f32 %v3228, %v3262
        %v3271 = vadd.f32 %v3229, %v3263
        %v3272 = vadd.f32 %v3230, %v3264
        %v3273 = vadd.f32 %v3231, %v3265
        %v3274 = vadd.f32 %v3232, %v3266
        %v3275 = vadd.f32 %v3233, %v3267
        %v3276 = vld [vmem:[#allocation5 + $0x47] sm:$0x1]
        %v3277 = vld [vmem:[#allocation7 + $0x47] sm:$0x1]
        %v3278 = vlaneseq
        %v3279 = vshrl.u32 %v3278, 7
        %v3280 = vsub.s32 0, %v3279
        %v3281 = vrot.slane %v3276, %v3280
        %v3282 = vsub.f32 %v250, %v3281
        %v3283 = vsub.f32 %v251, %v3281
        %v3284 = vsub.f32 %v252, %v3281
        %v3285 = vsub.f32 %v253, %v3281
        %v3286 = vsub.f32 %v254, %v3281
        %v3287 = vsub.f32 %v255, %v3281
        %v3288 = vsub.f32 %v256, %v3281
        %v3289 = vsub.f32 %v257, %v3281
        %v3290 = vmax.f32 %v3282, 0.0
        %v3291 = vmax.f32 %v3283, 0.0
        %v3292 = vmax.f32 %v3284, 0.0
        %v3293 = vmax.f32 %v3285, 0.0
        %v3294 = vmax.f32 %v3286, 0.0
        %v3295 = vmax.f32 %v3287, 0.0
        %v3296 = vmax.f32 %v3288, 0.0
        %v3297 = vmax.f32 %v3289, 0.0
        %v3298 = vlaneseq
        %v3299 = vshrl.u32 %v3298, 7
        %v3300 = vsub.s32 0, %v3299
        %v3301 = vrot.slane %v3277, %v3300
        %v3302 = vmul.f32 %v3301, %v3290
        %v3303 = vmul.f32 %v3301, %v3291
        %v3304 = vmul.f32 %v3301, %v3292
        %v3305 = vmul.f32 %v3301, %v3293
        %v3306 = vmul.f32 %v3301, %v3294
        %v3307 = vmul.f32 %v3301, %v3295
        %v3308 = vmul.f32 %v3301, %v3296
        %v3309 = vmul.f32 %v3301, %v3297
        %v3310 = vadd.f32 %v3268, %v3302
        %v3311 = vadd.f32 %v3269, %v3303
        %v3312 = vadd.f32 %v3270, %v3304
        %v3313 = vadd.f32 %v3271, %v3305
        %v3314 = vadd.f32 %v3272, %v3306
        %v3315 = vadd.f32 %v3273, %v3307
        %v3316 = vadd.f32 %v3274, %v3308
        %v3317 = vadd.f32 %v3275, %v3309
        %v3318 = vld [vmem:[#allocation5 + $0x48] sm:$0x1]
        %v3319 = vld [vmem:[#allocation7 + $0x48] sm:$0x1]
        %v3320 = vlaneseq
        %v3321 = vshrl.u32 %v3320, 7
        %v3322 = vsub.s32 0, %v3321
        %v3323 = vrot.slane %v3318, %v3322
        %v3324 = vsub.f32 %v250, %v3323
        %v3325 = vsub.f32 %v251, %v3323
        %v3326 = vsub.f32 %v252, %v3323
        %v3327 = vsub.f32 %v253, %v3323
        %v3328 = vsub.f32 %v254, %v3323
        %v3329 = vsub.f32 %v255, %v3323
        %v3330 = vsub.f32 %v256, %v3323
        %v3331 = vsub.f32 %v257, %v3323
        %v3332 = vmax.f32 %v3324, 0.0
        %v3333 = vmax.f32 %v3325, 0.0
        %v3334 = vmax.f32 %v3326, 0.0
        %v3335 = vmax.f32 %v3327, 0.0
        %v3336 = vmax.f32 %v3328, 0.0
        %v3337 = vmax.f32 %v3329, 0.0
        %v3338 = vmax.f32 %v3330, 0.0
        %v3339 = vmax.f32 %v3331, 0.0
        %v3340 = vlaneseq
        %v3341 = vshrl.u32 %v3340, 7
        %v3342 = vsub.s32 0, %v3341
        %v3343 = vrot.slane %v3319, %v3342
        %v3344 = vmul.f32 %v3343, %v3332
        %v3345 = vmul.f32 %v3343, %v3333
        %v3346 = vmul.f32 %v3343, %v3334
        %v3347 = vmul.f32 %v3343, %v3335
        %v3348 = vmul.f32 %v3343, %v3336
        %v3349 = vmul.f32 %v3343, %v3337
        %v3350 = vmul.f32 %v3343, %v3338
        %v3351 = vmul.f32 %v3343, %v3339
        %v3352 = vadd.f32 %v3310, %v3344
        %v3353 = vadd.f32 %v3311, %v3345
        %v3354 = vadd.f32 %v3312, %v3346
        %v3355 = vadd.f32 %v3313, %v3347
        %v3356 = vadd.f32 %v3314, %v3348
        %v3357 = vadd.f32 %v3315, %v3349
        %v3358 = vadd.f32 %v3316, %v3350
        %v3359 = vadd.f32 %v3317, %v3351
        %v3360 = vld [vmem:[#allocation5 + $0x49] sm:$0x1]
        %v3361 = vld [vmem:[#allocation7 + $0x49] sm:$0x1]
        %v3362 = vlaneseq
        %v3363 = vshrl.u32 %v3362, 7
        %v3364 = vsub.s32 0, %v3363
        %v3365 = vrot.slane %v3360, %v3364
        %v3366 = vsub.f32 %v250, %v3365
        %v3367 = vsub.f32 %v251, %v3365
        %v3368 = vsub.f32 %v252, %v3365
        %v3369 = vsub.f32 %v253, %v3365
        %v3370 = vsub.f32 %v254, %v3365
        %v3371 = vsub.f32 %v255, %v3365
        %v3372 = vsub.f32 %v256, %v3365
        %v3373 = vsub.f32 %v257, %v3365
        %v3374 = vmax.f32 %v3366, 0.0
        %v3375 = vmax.f32 %v3367, 0.0
        %v3376 = vmax.f32 %v3368, 0.0
        %v3377 = vmax.f32 %v3369, 0.0
        %v3378 = vmax.f32 %v3370, 0.0
        %v3379 = vmax.f32 %v3371, 0.0
        %v3380 = vmax.f32 %v3372, 0.0
        %v3381 = vmax.f32 %v3373, 0.0
        %v3382 = vlaneseq
        %v3383 = vshrl.u32 %v3382, 7
        %v3384 = vsub.s32 0, %v3383
        %v3385 = vrot.slane %v3361, %v3384
        %v3386 = vmul.f32 %v3385, %v3374
        %v3387 = vmul.f32 %v3385, %v3375
        %v3388 = vmul.f32 %v3385, %v3376
        %v3389 = vmul.f32 %v3385, %v3377
        %v3390 = vmul.f32 %v3385, %v3378
        %v3391 = vmul.f32 %v3385, %v3379
        %v3392 = vmul.f32 %v3385, %v3380
        %v3393 = vmul.f32 %v3385, %v3381
        %v3394 = vadd.f32 %v3352, %v3386
        %v3395 = vadd.f32 %v3353, %v3387
        %v3396 = vadd.f32 %v3354, %v3388
        %v3397 = vadd.f32 %v3355, %v3389
        %v3398 = vadd.f32 %v3356, %v3390
        %v3399 = vadd.f32 %v3357, %v3391
        %v3400 = vadd.f32 %v3358, %v3392
        %v3401 = vadd.f32 %v3359, %v3393
        %v3402 = vld [vmem:[#allocation5 + $0x4a] sm:$0x1]
        %v3403 = vld [vmem:[#allocation7 + $0x4a] sm:$0x1]
        %v3404 = vlaneseq
        %v3405 = vshrl.u32 %v3404, 7
        %v3406 = vsub.s32 0, %v3405
        %v3407 = vrot.slane %v3402, %v3406
        %v3408 = vsub.f32 %v250, %v3407
        %v3409 = vsub.f32 %v251, %v3407
        %v3410 = vsub.f32 %v252, %v3407
        %v3411 = vsub.f32 %v253, %v3407
        %v3412 = vsub.f32 %v254, %v3407
        %v3413 = vsub.f32 %v255, %v3407
        %v3414 = vsub.f32 %v256, %v3407
        %v3415 = vsub.f32 %v257, %v3407
        %v3416 = vmax.f32 %v3408, 0.0
        %v3417 = vmax.f32 %v3409, 0.0
        %v3418 = vmax.f32 %v3410, 0.0
        %v3419 = vmax.f32 %v3411, 0.0
        %v3420 = vmax.f32 %v3412, 0.0
        %v3421 = vmax.f32 %v3413, 0.0
        %v3422 = vmax.f32 %v3414, 0.0
        %v3423 = vmax.f32 %v3415, 0.0
        %v3424 = vlaneseq
        %v3425 = vshrl.u32 %v3424, 7
        %v3426 = vsub.s32 0, %v3425
        %v3427 = vrot.slane %v3403, %v3426
        %v3428 = vmul.f32 %v3427, %v3416
        %v3429 = vmul.f32 %v3427, %v3417
        %v3430 = vmul.f32 %v3427, %v3418
        %v3431 = vmul.f32 %v3427, %v3419
        %v3432 = vmul.f32 %v3427, %v3420
        %v3433 = vmul.f32 %v3427, %v3421
        %v3434 = vmul.f32 %v3427, %v3422
        %v3435 = vmul.f32 %v3427, %v3423
        %v3436 = vadd.f32 %v3394, %v3428
        %v3437 = vadd.f32 %v3395, %v3429
        %v3438 = vadd.f32 %v3396, %v3430
        %v3439 = vadd.f32 %v3397, %v3431
        %v3440 = vadd.f32 %v3398, %v3432
        %v3441 = vadd.f32 %v3399, %v3433
        %v3442 = vadd.f32 %v3400, %v3434
        %v3443 = vadd.f32 %v3401, %v3435
        %v3444 = vld [vmem:[#allocation5 + $0x4b] sm:$0x1]
        %v3445 = vld [vmem:[#allocation7 + $0x4b] sm:$0x1]
        %v3446 = vlaneseq
        %v3447 = vshrl.u32 %v3446, 7
        %v3448 = vsub.s32 0, %v3447
        %v3449 = vrot.slane %v3444, %v3448
        %v3450 = vsub.f32 %v250, %v3449
        %v3451 = vsub.f32 %v251, %v3449
        %v3452 = vsub.f32 %v252, %v3449
        %v3453 = vsub.f32 %v253, %v3449
        %v3454 = vsub.f32 %v254, %v3449
        %v3455 = vsub.f32 %v255, %v3449
        %v3456 = vsub.f32 %v256, %v3449
        %v3457 = vsub.f32 %v257, %v3449
        %v3458 = vmax.f32 %v3450, 0.0
        %v3459 = vmax.f32 %v3451, 0.0
        %v3460 = vmax.f32 %v3452, 0.0
        %v3461 = vmax.f32 %v3453, 0.0
        %v3462 = vmax.f32 %v3454, 0.0
        %v3463 = vmax.f32 %v3455, 0.0
        %v3464 = vmax.f32 %v3456, 0.0
        %v3465 = vmax.f32 %v3457, 0.0
        %v3466 = vlaneseq
        %v3467 = vshrl.u32 %v3466, 7
        %v3468 = vsub.s32 0, %v3467
        %v3469 = vrot.slane %v3445, %v3468
        %v3470 = vmul.f32 %v3469, %v3458
        %v3471 = vmul.f32 %v3469, %v3459
        %v3472 = vmul.f32 %v3469, %v3460
        %v3473 = vmul.f32 %v3469, %v3461
        %v3474 = vmul.f32 %v3469, %v3462
        %v3475 = vmul.f32 %v3469, %v3463
        %v3476 = vmul.f32 %v3469, %v3464
        %v3477 = vmul.f32 %v3469, %v3465
        %v3478 = vadd.f32 %v3436, %v3470
        %v3479 = vadd.f32 %v3437, %v3471
        %v3480 = vadd.f32 %v3438, %v3472
        %v3481 = vadd.f32 %v3439, %v3473
        %v3482 = vadd.f32 %v3440, %v3474
        %v3483 = vadd.f32 %v3441, %v3475
        %v3484 = vadd.f32 %v3442, %v3476
        %v3485 = vadd.f32 %v3443, %v3477
        %v3486 = vld [vmem:[#allocation5 + $0x4c] sm:$0x1]
        %v3487 = vld [vmem:[#allocation7 + $0x4c] sm:$0x1]
        %v3488 = vlaneseq
        %v3489 = vshrl.u32 %v3488, 7
        %v3490 = vsub.s32 0, %v3489
        %v3491 = vrot.slane %v3486, %v3490
        %v3492 = vsub.f32 %v250, %v3491
        %v3493 = vsub.f32 %v251, %v3491
        %v3494 = vsub.f32 %v252, %v3491
        %v3495 = vsub.f32 %v253, %v3491
        %v3496 = vsub.f32 %v254, %v3491
        %v3497 = vsub.f32 %v255, %v3491
        %v3498 = vsub.f32 %v256, %v3491
        %v3499 = vsub.f32 %v257, %v3491
        %v3500 = vmax.f32 %v3492, 0.0
        %v3501 = vmax.f32 %v3493, 0.0
        %v3502 = vmax.f32 %v3494, 0.0
        %v3503 = vmax.f32 %v3495, 0.0
        %v3504 = vmax.f32 %v3496, 0.0
        %v3505 = vmax.f32 %v3497, 0.0
        %v3506 = vmax.f32 %v3498, 0.0
        %v3507 = vmax.f32 %v3499, 0.0
        %v3508 = vlaneseq
        %v3509 = vshrl.u32 %v3508, 7
        %v3510 = vsub.s32 0, %v3509
        %v3511 = vrot.slane %v3487, %v3510
        %v3512 = vmul.f32 %v3511, %v3500
        %v3513 = vmul.f32 %v3511, %v3501
        %v3514 = vmul.f32 %v3511, %v3502
        %v3515 = vmul.f32 %v3511, %v3503
        %v3516 = vmul.f32 %v3511, %v3504
        %v3517 = vmul.f32 %v3511, %v3505
        %v3518 = vmul.f32 %v3511, %v3506
        %v3519 = vmul.f32 %v3511, %v3507
        %v3520 = vadd.f32 %v3478, %v3512
        %v3521 = vadd.f32 %v3479, %v3513
        %v3522 = vadd.f32 %v3480, %v3514
        %v3523 = vadd.f32 %v3481, %v3515
        %v3524 = vadd.f32 %v3482, %v3516
        %v3525 = vadd.f32 %v3483, %v3517
        %v3526 = vadd.f32 %v3484, %v3518
        %v3527 = vadd.f32 %v3485, %v3519
        %v3528 = vld [vmem:[#allocation5 + $0x4d] sm:$0x1]
        %v3529 = vld [vmem:[#allocation7 + $0x4d] sm:$0x1]
        %v3530 = vlaneseq
        %v3531 = vshrl.u32 %v3530, 7
        %v3532 = vsub.s32 0, %v3531
        %v3533 = vrot.slane %v3528, %v3532
        %v3534 = vsub.f32 %v250, %v3533
        %v3535 = vsub.f32 %v251, %v3533
        %v3536 = vsub.f32 %v252, %v3533
        %v3537 = vsub.f32 %v253, %v3533
        %v3538 = vsub.f32 %v254, %v3533
        %v3539 = vsub.f32 %v255, %v3533
        %v3540 = vsub.f32 %v256, %v3533
        %v3541 = vsub.f32 %v257, %v3533
        %v3542 = vmax.f32 %v3534, 0.0
        %v3543 = vmax.f32 %v3535, 0.0
        %v3544 = vmax.f32 %v3536, 0.0
        %v3545 = vmax.f32 %v3537, 0.0
        %v3546 = vmax.f32 %v3538, 0.0
        %v3547 = vmax.f32 %v3539, 0.0
        %v3548 = vmax.f32 %v3540, 0.0
        %v3549 = vmax.f32 %v3541, 0.0
        %v3550 = vlaneseq
        %v3551 = vshrl.u32 %v3550, 7
        %v3552 = vsub.s32 0, %v3551
        %v3553 = vrot.slane %v3529, %v3552
        %v3554 = vmul.f32 %v3553, %v3542
        %v3555 = vmul.f32 %v3553, %v3543
        %v3556 = vmul.f32 %v3553, %v3544
        %v3557 = vmul.f32 %v3553, %v3545
        %v3558 = vmul.f32 %v3553, %v3546
        %v3559 = vmul.f32 %v3553, %v3547
        %v3560 = vmul.f32 %v3553, %v3548
        %v3561 = vmul.f32 %v3553, %v3549
        %v3562 = vadd.f32 %v3520, %v3554
        %v3563 = vadd.f32 %v3521, %v3555
        %v3564 = vadd.f32 %v3522, %v3556
        %v3565 = vadd.f32 %v3523, %v3557
        %v3566 = vadd.f32 %v3524, %v3558
        %v3567 = vadd.f32 %v3525, %v3559
        %v3568 = vadd.f32 %v3526, %v3560
        %v3569 = vadd.f32 %v3527, %v3561
        %v3570 = vld [vmem:[#allocation5 + $0x4e] sm:$0x1]
        %v3571 = vld [vmem:[#allocation7 + $0x4e] sm:$0x1]
        %v3572 = vlaneseq
        %v3573 = vshrl.u32 %v3572, 7
        %v3574 = vsub.s32 0, %v3573
        %v3575 = vrot.slane %v3570, %v3574
        %v3576 = vsub.f32 %v250, %v3575
        %v3577 = vsub.f32 %v251, %v3575
        %v3578 = vsub.f32 %v252, %v3575
        %v3579 = vsub.f32 %v253, %v3575
        %v3580 = vsub.f32 %v254, %v3575
        %v3581 = vsub.f32 %v255, %v3575
        %v3582 = vsub.f32 %v256, %v3575
        %v3583 = vsub.f32 %v257, %v3575
        %v3584 = vmax.f32 %v3576, 0.0
        %v3585 = vmax.f32 %v3577, 0.0
        %v3586 = vmax.f32 %v3578, 0.0
        %v3587 = vmax.f32 %v3579, 0.0
        %v3588 = vmax.f32 %v3580, 0.0
        %v3589 = vmax.f32 %v3581, 0.0
        %v3590 = vmax.f32 %v3582, 0.0
        %v3591 = vmax.f32 %v3583, 0.0
        %v3592 = vlaneseq
        %v3593 = vshrl.u32 %v3592, 7
        %v3594 = vsub.s32 0, %v3593
        %v3595 = vrot.slane %v3571, %v3594
        %v3596 = vmul.f32 %v3595, %v3584
        %v3597 = vmul.f32 %v3595, %v3585
        %v3598 = vmul.f32 %v3595, %v3586
        %v3599 = vmul.f32 %v3595, %v3587
        %v3600 = vmul.f32 %v3595, %v3588
        %v3601 = vmul.f32 %v3595, %v3589
        %v3602 = vmul.f32 %v3595, %v3590
        %v3603 = vmul.f32 %v3595, %v3591
        %v3604 = vadd.f32 %v3562, %v3596
        %v3605 = vadd.f32 %v3563, %v3597
        %v3606 = vadd.f32 %v3564, %v3598
        %v3607 = vadd.f32 %v3565, %v3599
        %v3608 = vadd.f32 %v3566, %v3600
        %v3609 = vadd.f32 %v3567, %v3601
        %v3610 = vadd.f32 %v3568, %v3602
        %v3611 = vadd.f32 %v3569, %v3603
        %v3612 = vld [vmem:[#allocation5 + $0x4f] sm:$0x1]
        %v3613 = vld [vmem:[#allocation7 + $0x4f] sm:$0x1]
        %v3614 = vlaneseq
        %v3615 = vshrl.u32 %v3614, 7
        %v3616 = vsub.s32 0, %v3615
        %v3617 = vrot.slane %v3612, %v3616
        %v3618 = vsub.f32 %v250, %v3617
        %v3619 = vsub.f32 %v251, %v3617
        %v3620 = vsub.f32 %v252, %v3617
        %v3621 = vsub.f32 %v253, %v3617
        %v3622 = vsub.f32 %v254, %v3617
        %v3623 = vsub.f32 %v255, %v3617
        %v3624 = vsub.f32 %v256, %v3617
        %v3625 = vsub.f32 %v257, %v3617
        %v3626 = vmax.f32 %v3618, 0.0
        %v3627 = vmax.f32 %v3619, 0.0
        %v3628 = vmax.f32 %v3620, 0.0
        %v3629 = vmax.f32 %v3621, 0.0
        %v3630 = vmax.f32 %v3622, 0.0
        %v3631 = vmax.f32 %v3623, 0.0
        %v3632 = vmax.f32 %v3624, 0.0
        %v3633 = vmax.f32 %v3625, 0.0
        %v3634 = vlaneseq
        %v3635 = vshrl.u32 %v3634, 7
        %v3636 = vsub.s32 0, %v3635
        %v3637 = vrot.slane %v3613, %v3636
        %v3638 = vmul.f32 %v3637, %v3626
        %v3639 = vmul.f32 %v3637, %v3627
        %v3640 = vmul.f32 %v3637, %v3628
        %v3641 = vmul.f32 %v3637, %v3629
        %v3642 = vmul.f32 %v3637, %v3630
        %v3643 = vmul.f32 %v3637, %v3631
        %v3644 = vmul.f32 %v3637, %v3632
        %v3645 = vmul.f32 %v3637, %v3633
        %v3646 = vadd.f32 %v3604, %v3638
        %v3647 = vadd.f32 %v3605, %v3639
        %v3648 = vadd.f32 %v3606, %v3640
        %v3649 = vadd.f32 %v3607, %v3641
        %v3650 = vadd.f32 %v3608, %v3642
        %v3651 = vadd.f32 %v3609, %v3643
        %v3652 = vadd.f32 %v3610, %v3644
        %v3653 = vadd.f32 %v3611, %v3645
        %v3654 = vld [vmem:[#allocation5 + $0x50] sm:$0x1]
        %v3655 = vld [vmem:[#allocation7 + $0x50] sm:$0x1]
        %v3656 = vlaneseq
        %v3657 = vshrl.u32 %v3656, 7
        %v3658 = vsub.s32 0, %v3657
        %v3659 = vrot.slane %v3654, %v3658
        %v3660 = vsub.f32 %v250, %v3659
        %v3661 = vsub.f32 %v251, %v3659
        %v3662 = vsub.f32 %v252, %v3659
        %v3663 = vsub.f32 %v253, %v3659
        %v3664 = vsub.f32 %v254, %v3659
        %v3665 = vsub.f32 %v255, %v3659
        %v3666 = vsub.f32 %v256, %v3659
        %v3667 = vsub.f32 %v257, %v3659
        %v3668 = vmax.f32 %v3660, 0.0
        %v3669 = vmax.f32 %v3661, 0.0
        %v3670 = vmax.f32 %v3662, 0.0
        %v3671 = vmax.f32 %v3663, 0.0
        %v3672 = vmax.f32 %v3664, 0.0
        %v3673 = vmax.f32 %v3665, 0.0
        %v3674 = vmax.f32 %v3666, 0.0
        %v3675 = vmax.f32 %v3667, 0.0
        %v3676 = vlaneseq
        %v3677 = vshrl.u32 %v3676, 7
        %v3678 = vsub.s32 0, %v3677
        %v3679 = vrot.slane %v3655, %v3678
        %v3680 = vmul.f32 %v3679, %v3668
        %v3681 = vmul.f32 %v3679, %v3669
        %v3682 = vmul.f32 %v3679, %v3670
        %v3683 = vmul.f32 %v3679, %v3671
        %v3684 = vmul.f32 %v3679, %v3672
        %v3685 = vmul.f32 %v3679, %v3673
        %v3686 = vmul.f32 %v3679, %v3674
        %v3687 = vmul.f32 %v3679, %v3675
        %v3688 = vadd.f32 %v3646, %v3680
        %v3689 = vadd.f32 %v3647, %v3681
        %v3690 = vadd.f32 %v3648, %v3682
        %v3691 = vadd.f32 %v3649, %v3683
        %v3692 = vadd.f32 %v3650, %v3684
        %v3693 = vadd.f32 %v3651, %v3685
        %v3694 = vadd.f32 %v3652, %v3686
        %v3695 = vadd.f32 %v3653, %v3687
        %v3696 = vld [vmem:[#allocation5 + $0x51] sm:$0x1]
        %v3697 = vld [vmem:[#allocation7 + $0x51] sm:$0x1]
        %v3698 = vlaneseq
        %v3699 = vshrl.u32 %v3698, 7
        %v3700 = vsub.s32 0, %v3699
        %v3701 = vrot.slane %v3696, %v3700
        %v3702 = vsub.f32 %v250, %v3701
        %v3703 = vsub.f32 %v251, %v3701
        %v3704 = vsub.f32 %v252, %v3701
        %v3705 = vsub.f32 %v253, %v3701
        %v3706 = vsub.f32 %v254, %v3701
        %v3707 = vsub.f32 %v255, %v3701
        %v3708 = vsub.f32 %v256, %v3701
        %v3709 = vsub.f32 %v257, %v3701
        %v3710 = vmax.f32 %v3702, 0.0
        %v3711 = vmax.f32 %v3703, 0.0
        %v3712 = vmax.f32 %v3704, 0.0
        %v3713 = vmax.f32 %v3705, 0.0
        %v3714 = vmax.f32 %v3706, 0.0
        %v3715 = vmax.f32 %v3707, 0.0
        %v3716 = vmax.f32 %v3708, 0.0
        %v3717 = vmax.f32 %v3709, 0.0
        %v3718 = vlaneseq
        %v3719 = vshrl.u32 %v3718, 7
        %v3720 = vsub.s32 0, %v3719
        %v3721 = vrot.slane %v3697, %v3720
        %v3722 = vmul.f32 %v3721, %v3710
        %v3723 = vmul.f32 %v3721, %v3711
        %v3724 = vmul.f32 %v3721, %v3712
        %v3725 = vmul.f32 %v3721, %v3713
        %v3726 = vmul.f32 %v3721, %v3714
        %v3727 = vmul.f32 %v3721, %v3715
        %v3728 = vmul.f32 %v3721, %v3716
        %v3729 = vmul.f32 %v3721, %v3717
        %v3730 = vadd.f32 %v3688, %v3722
        %v3731 = vadd.f32 %v3689, %v3723
        %v3732 = vadd.f32 %v3690, %v3724
        %v3733 = vadd.f32 %v3691, %v3725
        %v3734 = vadd.f32 %v3692, %v3726
        %v3735 = vadd.f32 %v3693, %v3727
        %v3736 = vadd.f32 %v3694, %v3728
        %v3737 = vadd.f32 %v3695, %v3729
        %v3738 = vld [vmem:[#allocation5 + $0x52] sm:$0x1]
        %v3739 = vld [vmem:[#allocation7 + $0x52] sm:$0x1]
        %v3740 = vlaneseq
        %v3741 = vshrl.u32 %v3740, 7
        %v3742 = vsub.s32 0, %v3741
        %v3743 = vrot.slane %v3738, %v3742
        %v3744 = vsub.f32 %v250, %v3743
        %v3745 = vsub.f32 %v251, %v3743
        %v3746 = vsub.f32 %v252, %v3743
        %v3747 = vsub.f32 %v253, %v3743
        %v3748 = vsub.f32 %v254, %v3743
        %v3749 = vsub.f32 %v255, %v3743
        %v3750 = vsub.f32 %v256, %v3743
        %v3751 = vsub.f32 %v257, %v3743
        %v3752 = vmax.f32 %v3744, 0.0
        %v3753 = vmax.f32 %v3745, 0.0
        %v3754 = vmax.f32 %v3746, 0.0
        %v3755 = vmax.f32 %v3747, 0.0
        %v3756 = vmax.f32 %v3748, 0.0
        %v3757 = vmax.f32 %v3749, 0.0
        %v3758 = vmax.f32 %v3750, 0.0
        %v3759 = vmax.f32 %v3751, 0.0
        %v3760 = vlaneseq
        %v3761 = vshrl.u32 %v3760, 7
        %v3762 = vsub.s32 0, %v3761
        %v3763 = vrot.slane %v3739, %v3762
        %v3764 = vmul.f32 %v3763, %v3752
        %v3765 = vmul.f32 %v3763, %v3753
        %v3766 = vmul.f32 %v3763, %v3754
        %v3767 = vmul.f32 %v3763, %v3755
        %v3768 = vmul.f32 %v3763, %v3756
        %v3769 = vmul.f32 %v3763, %v3757
        %v3770 = vmul.f32 %v3763, %v3758
        %v3771 = vmul.f32 %v3763, %v3759
        %v3772 = vadd.f32 %v3730, %v3764
        %v3773 = vadd.f32 %v3731, %v3765
        %v3774 = vadd.f32 %v3732, %v3766
        %v3775 = vadd.f32 %v3733, %v3767
        %v3776 = vadd.f32 %v3734, %v3768
        %v3777 = vadd.f32 %v3735, %v3769
        %v3778 = vadd.f32 %v3736, %v3770
        %v3779 = vadd.f32 %v3737, %v3771
        %v3780 = vld [vmem:[#allocation5 + $0x53] sm:$0x1]
        %v3781 = vld [vmem:[#allocation7 + $0x53] sm:$0x1]
        %v3782 = vlaneseq
        %v3783 = vshrl.u32 %v3782, 7
        %v3784 = vsub.s32 0, %v3783
        %v3785 = vrot.slane %v3780, %v3784
        %v3786 = vsub.f32 %v250, %v3785
        %v3787 = vsub.f32 %v251, %v3785
        %v3788 = vsub.f32 %v252, %v3785
        %v3789 = vsub.f32 %v253, %v3785
        %v3790 = vsub.f32 %v254, %v3785
        %v3791 = vsub.f32 %v255, %v3785
        %v3792 = vsub.f32 %v256, %v3785
        %v3793 = vsub.f32 %v257, %v3785
        %v3794 = vmax.f32 %v3786, 0.0
        %v3795 = vmax.f32 %v3787, 0.0
        %v3796 = vmax.f32 %v3788, 0.0
        %v3797 = vmax.f32 %v3789, 0.0
        %v3798 = vmax.f32 %v3790, 0.0
        %v3799 = vmax.f32 %v3791, 0.0
        %v3800 = vmax.f32 %v3792, 0.0
        %v3801 = vmax.f32 %v3793, 0.0
        %v3802 = vlaneseq
        %v3803 = vshrl.u32 %v3802, 7
        %v3804 = vsub.s32 0, %v3803
        %v3805 = vrot.slane %v3781, %v3804
        %v3806 = vmul.f32 %v3805, %v3794
        %v3807 = vmul.f32 %v3805, %v3795
        %v3808 = vmul.f32 %v3805, %v3796
        %v3809 = vmul.f32 %v3805, %v3797
        %v3810 = vmul.f32 %v3805, %v3798
        %v3811 = vmul.f32 %v3805, %v3799
        %v3812 = vmul.f32 %v3805, %v3800
        %v3813 = vmul.f32 %v3805, %v3801
        %v3814 = vadd.f32 %v3772, %v3806
        %v3815 = vadd.f32 %v3773, %v3807
        %v3816 = vadd.f32 %v3774, %v3808
        %v3817 = vadd.f32 %v3775, %v3809
        %v3818 = vadd.f32 %v3776, %v3810
        %v3819 = vadd.f32 %v3777, %v3811
        %v3820 = vadd.f32 %v3778, %v3812
        %v3821 = vadd.f32 %v3779, %v3813
        %v3822 = vld [vmem:[#allocation5 + $0x54] sm:$0x1]
        %v3823 = vld [vmem:[#allocation7 + $0x54] sm:$0x1]
        %v3824 = vlaneseq
        %v3825 = vshrl.u32 %v3824, 7
        %v3826 = vsub.s32 0, %v3825
        %v3827 = vrot.slane %v3822, %v3826
        %v3828 = vsub.f32 %v250, %v3827
        %v3829 = vsub.f32 %v251, %v3827
        %v3830 = vsub.f32 %v252, %v3827
        %v3831 = vsub.f32 %v253, %v3827
        %v3832 = vsub.f32 %v254, %v3827
        %v3833 = vsub.f32 %v255, %v3827
        %v3834 = vsub.f32 %v256, %v3827
        %v3835 = vsub.f32 %v257, %v3827
        %v3836 = vmax.f32 %v3828, 0.0
        %v3837 = vmax.f32 %v3829, 0.0
        %v3838 = vmax.f32 %v3830, 0.0
        %v3839 = vmax.f32 %v3831, 0.0
        %v3840 = vmax.f32 %v3832, 0.0
        %v3841 = vmax.f32 %v3833, 0.0
        %v3842 = vmax.f32 %v3834, 0.0
        %v3843 = vmax.f32 %v3835, 0.0
        %v3844 = vlaneseq
        %v3845 = vshrl.u32 %v3844, 7
        %v3846 = vsub.s32 0, %v3845
        %v3847 = vrot.slane %v3823, %v3846
        %v3848 = vmul.f32 %v3847, %v3836
        %v3849 = vmul.f32 %v3847, %v3837
        %v3850 = vmul.f32 %v3847, %v3838
        %v3851 = vmul.f32 %v3847, %v3839
        %v3852 = vmul.f32 %v3847, %v3840
        %v3853 = vmul.f32 %v3847, %v3841
        %v3854 = vmul.f32 %v3847, %v3842
        %v3855 = vmul.f32 %v3847, %v3843
        %v3856 = vadd.f32 %v3814, %v3848
        %v3857 = vadd.f32 %v3815, %v3849
        %v3858 = vadd.f32 %v3816, %v3850
        %v3859 = vadd.f32 %v3817, %v3851
        %v3860 = vadd.f32 %v3818, %v3852
        %v3861 = vadd.f32 %v3819, %v3853
        %v3862 = vadd.f32 %v3820, %v3854
        %v3863 = vadd.f32 %v3821, %v3855
        %v3864 = vld [vmem:[#allocation5 + $0x55] sm:$0x1]
        %v3865 = vld [vmem:[#allocation7 + $0x55] sm:$0x1]
        %v3866 = vlaneseq
        %v3867 = vshrl.u32 %v3866, 7
        %v3868 = vsub.s32 0, %v3867
        %v3869 = vrot.slane %v3864, %v3868
        %v3870 = vsub.f32 %v250, %v3869
        %v3871 = vsub.f32 %v251, %v3869
        %v3872 = vsub.f32 %v252, %v3869
        %v3873 = vsub.f32 %v253, %v3869
        %v3874 = vsub.f32 %v254, %v3869
        %v3875 = vsub.f32 %v255, %v3869
        %v3876 = vsub.f32 %v256, %v3869
        %v3877 = vsub.f32 %v257, %v3869
        %v3878 = vmax.f32 %v3870, 0.0
        %v3879 = vmax.f32 %v3871, 0.0
        %v3880 = vmax.f32 %v3872, 0.0
        %v3881 = vmax.f32 %v3873, 0.0
        %v3882 = vmax.f32 %v3874, 0.0
        %v3883 = vmax.f32 %v3875, 0.0
        %v3884 = vmax.f32 %v3876, 0.0
        %v3885 = vmax.f32 %v3877, 0.0
        %v3886 = vlaneseq
        %v3887 = vshrl.u32 %v3886, 7
        %v3888 = vsub.s32 0, %v3887
        %v3889 = vrot.slane %v3865, %v3888
        %v3890 = vmul.f32 %v3889, %v3878
        %v3891 = vmul.f32 %v3889, %v3879
        %v3892 = vmul.f32 %v3889, %v3880
        %v3893 = vmul.f32 %v3889, %v3881
        %v3894 = vmul.f32 %v3889, %v3882
        %v3895 = vmul.f32 %v3889, %v3883
        %v3896 = vmul.f32 %v3889, %v3884
        %v3897 = vmul.f32 %v3889, %v3885
        %v3898 = vadd.f32 %v3856, %v3890
        %v3899 = vadd.f32 %v3857, %v3891
        %v3900 = vadd.f32 %v3858, %v3892
        %v3901 = vadd.f32 %v3859, %v3893
        %v3902 = vadd.f32 %v3860, %v3894
        %v3903 = vadd.f32 %v3861, %v3895
        %v3904 = vadd.f32 %v3862, %v3896
        %v3905 = vadd.f32 %v3863, %v3897
        %v3906 = vld [vmem:[#allocation5 + $0x56] sm:$0x1]
        %v3907 = vld [vmem:[#allocation7 + $0x56] sm:$0x1]
        %v3908 = vlaneseq
        %v3909 = vshrl.u32 %v3908, 7
        %v3910 = vsub.s32 0, %v3909
        %v3911 = vrot.slane %v3906, %v3910
        %v3912 = vsub.f32 %v250, %v3911
        %v3913 = vsub.f32 %v251, %v3911
        %v3914 = vsub.f32 %v252, %v3911
        %v3915 = vsub.f32 %v253, %v3911
        %v3916 = vsub.f32 %v254, %v3911
        %v3917 = vsub.f32 %v255, %v3911
        %v3918 = vsub.f32 %v256, %v3911
        %v3919 = vsub.f32 %v257, %v3911
        %v3920 = vmax.f32 %v3912, 0.0
        %v3921 = vmax.f32 %v3913, 0.0
        %v3922 = vmax.f32 %v3914, 0.0
        %v3923 = vmax.f32 %v3915, 0.0
        %v3924 = vmax.f32 %v3916, 0.0
        %v3925 = vmax.f32 %v3917, 0.0
        %v3926 = vmax.f32 %v3918, 0.0
        %v3927 = vmax.f32 %v3919, 0.0
        %v3928 = vlaneseq
        %v3929 = vshrl.u32 %v3928, 7
        %v3930 = vsub.s32 0, %v3929
        %v3931 = vrot.slane %v3907, %v3930
        %v3932 = vmul.f32 %v3931, %v3920
        %v3933 = vmul.f32 %v3931, %v3921
        %v3934 = vmul.f32 %v3931, %v3922
        %v3935 = vmul.f32 %v3931, %v3923
        %v3936 = vmul.f32 %v3931, %v3924
        %v3937 = vmul.f32 %v3931, %v3925
        %v3938 = vmul.f32 %v3931, %v3926
        %v3939 = vmul.f32 %v3931, %v3927
        %v3940 = vadd.f32 %v3898, %v3932
        %v3941 = vadd.f32 %v3899, %v3933
        %v3942 = vadd.f32 %v3900, %v3934
        %v3943 = vadd.f32 %v3901, %v3935
        %v3944 = vadd.f32 %v3902, %v3936
        %v3945 = vadd.f32 %v3903, %v3937
        %v3946 = vadd.f32 %v3904, %v3938
        %v3947 = vadd.f32 %v3905, %v3939
        %v3948 = vld [vmem:[#allocation5 + $0x57] sm:$0x1]
        %v3949 = vld [vmem:[#allocation7 + $0x57] sm:$0x1]
        %v3950 = vlaneseq
        %v3951 = vshrl.u32 %v3950, 7
        %v3952 = vsub.s32 0, %v3951
        %v3953 = vrot.slane %v3948, %v3952
        %v3954 = vsub.f32 %v250, %v3953
        %v3955 = vsub.f32 %v251, %v3953
        %v3956 = vsub.f32 %v252, %v3953
        %v3957 = vsub.f32 %v253, %v3953
        %v3958 = vsub.f32 %v254, %v3953
        %v3959 = vsub.f32 %v255, %v3953
        %v3960 = vsub.f32 %v256, %v3953
        %v3961 = vsub.f32 %v257, %v3953
        %v3962 = vmax.f32 %v3954, 0.0
        %v3963 = vmax.f32 %v3955, 0.0
        %v3964 = vmax.f32 %v3956, 0.0
        %v3965 = vmax.f32 %v3957, 0.0
        %v3966 = vmax.f32 %v3958, 0.0
        %v3967 = vmax.f32 %v3959, 0.0
        %v3968 = vmax.f32 %v3960, 0.0
        %v3969 = vmax.f32 %v3961, 0.0
        %v3970 = vlaneseq
        %v3971 = vshrl.u32 %v3970, 7
        %v3972 = vsub.s32 0, %v3971
        %v3973 = vrot.slane %v3949, %v3972
        %v3974 = vmul.f32 %v3973, %v3962
        %v3975 = vmul.f32 %v3973, %v3963
        %v3976 = vmul.f32 %v3973, %v3964
        %v3977 = vmul.f32 %v3973, %v3965
        %v3978 = vmul.f32 %v3973, %v3966
        %v3979 = vmul.f32 %v3973, %v3967
        %v3980 = vmul.f32 %v3973, %v3968
        %v3981 = vmul.f32 %v3973, %v3969
        %v3982 = vadd.f32 %v3940, %v3974
        %v3983 = vadd.f32 %v3941, %v3975
        %v3984 = vadd.f32 %v3942, %v3976
        %v3985 = vadd.f32 %v3943, %v3977
        %v3986 = vadd.f32 %v3944, %v3978
        %v3987 = vadd.f32 %v3945, %v3979
        %v3988 = vadd.f32 %v3946, %v3980
        %v3989 = vadd.f32 %v3947, %v3981
        %v3990 = vld [vmem:[#allocation5 + $0x58] sm:$0x1]
        %v3991 = vld [vmem:[#allocation7 + $0x58] sm:$0x1]
        %v3992 = vlaneseq
        %v3993 = vshrl.u32 %v3992, 7
        %v3994 = vsub.s32 0, %v3993
        %v3995 = vrot.slane %v3990, %v3994
        %v3996 = vsub.f32 %v250, %v3995
        %v3997 = vsub.f32 %v251, %v3995
        %v3998 = vsub.f32 %v252, %v3995
        %v3999 = vsub.f32 %v253, %v3995
        %v4000 = vsub.f32 %v254, %v3995
        %v4001 = vsub.f32 %v255, %v3995
        %v4002 = vsub.f32 %v256, %v3995
        %v4003 = vsub.f32 %v257, %v3995
        %v4004 = vmax.f32 %v3996, 0.0
        %v4005 = vmax.f32 %v3997, 0.0
        %v4006 = vmax.f32 %v3998, 0.0
        %v4007 = vmax.f32 %v3999, 0.0
        %v4008 = vmax.f32 %v4000, 0.0
        %v4009 = vmax.f32 %v4001, 0.0
        %v4010 = vmax.f32 %v4002, 0.0
        %v4011 = vmax.f32 %v4003, 0.0
        %v4012 = vlaneseq
        %v4013 = vshrl.u32 %v4012, 7
        %v4014 = vsub.s32 0, %v4013
        %v4015 = vrot.slane %v3991, %v4014
        %v4016 = vmul.f32 %v4015, %v4004
        %v4017 = vmul.f32 %v4015, %v4005
        %v4018 = vmul.f32 %v4015, %v4006
        %v4019 = vmul.f32 %v4015, %v4007
        %v4020 = vmul.f32 %v4015, %v4008
        %v4021 = vmul.f32 %v4015, %v4009
        %v4022 = vmul.f32 %v4015, %v4010
        %v4023 = vmul.f32 %v4015, %v4011
        %v4024 = vadd.f32 %v3982, %v4016
        %v4025 = vadd.f32 %v3983, %v4017
        %v4026 = vadd.f32 %v3984, %v4018
        %v4027 = vadd.f32 %v3985, %v4019
        %v4028 = vadd.f32 %v3986, %v4020
        %v4029 = vadd.f32 %v3987, %v4021
        %v4030 = vadd.f32 %v3988, %v4022
        %v4031 = vadd.f32 %v3989, %v4023
        %v4032 = vld [vmem:[#allocation5 + $0x59] sm:$0x1]
        %v4033 = vld [vmem:[#allocation7 + $0x59] sm:$0x1]
        %v4034 = vlaneseq
        %v4035 = vshrl.u32 %v4034, 7
        %v4036 = vsub.s32 0, %v4035
        %v4037 = vrot.slane %v4032, %v4036
        %v4038 = vsub.f32 %v250, %v4037
        %v4039 = vsub.f32 %v251, %v4037
        %v4040 = vsub.f32 %v252, %v4037
        %v4041 = vsub.f32 %v253, %v4037
        %v4042 = vsub.f32 %v254, %v4037
        %v4043 = vsub.f32 %v255, %v4037
        %v4044 = vsub.f32 %v256, %v4037
        %v4045 = vsub.f32 %v257, %v4037
        %v4046 = vmax.f32 %v4038, 0.0
        %v4047 = vmax.f32 %v4039, 0.0
        %v4048 = vmax.f32 %v4040, 0.0
        %v4049 = vmax.f32 %v4041, 0.0
        %v4050 = vmax.f32 %v4042, 0.0
        %v4051 = vmax.f32 %v4043, 0.0
        %v4052 = vmax.f32 %v4044, 0.0
        %v4053 = vmax.f32 %v4045, 0.0
        %v4054 = vlaneseq
        %v4055 = vshrl.u32 %v4054, 7
        %v4056 = vsub.s32 0, %v4055
        %v4057 = vrot.slane %v4033, %v4056
        %v4058 = vmul.f32 %v4057, %v4046
        %v4059 = vmul.f32 %v4057, %v4047
        %v4060 = vmul.f32 %v4057, %v4048
        %v4061 = vmul.f32 %v4057, %v4049
        %v4062 = vmul.f32 %v4057, %v4050
        %v4063 = vmul.f32 %v4057, %v4051
        %v4064 = vmul.f32 %v4057, %v4052
        %v4065 = vmul.f32 %v4057, %v4053
        %v4066 = vadd.f32 %v4024, %v4058
        %v4067 = vadd.f32 %v4025, %v4059
        %v4068 = vadd.f32 %v4026, %v4060
        %v4069 = vadd.f32 %v4027, %v4061
        %v4070 = vadd.f32 %v4028, %v4062
        %v4071 = vadd.f32 %v4029, %v4063
        %v4072 = vadd.f32 %v4030, %v4064
        %v4073 = vadd.f32 %v4031, %v4065
        %v4074 = vld [vmem:[#allocation5 + $0x5a] sm:$0x1]
        %v4075 = vld [vmem:[#allocation7 + $0x5a] sm:$0x1]
        %v4076 = vlaneseq
        %v4077 = vshrl.u32 %v4076, 7
        %v4078 = vsub.s32 0, %v4077
        %v4079 = vrot.slane %v4074, %v4078
        %v4080 = vsub.f32 %v250, %v4079
        %v4081 = vsub.f32 %v251, %v4079
        %v4082 = vsub.f32 %v252, %v4079
        %v4083 = vsub.f32 %v253, %v4079
        %v4084 = vsub.f32 %v254, %v4079
        %v4085 = vsub.f32 %v255, %v4079
        %v4086 = vsub.f32 %v256, %v4079
        %v4087 = vsub.f32 %v257, %v4079
        %v4088 = vmax.f32 %v4080, 0.0
        %v4089 = vmax.f32 %v4081, 0.0
        %v4090 = vmax.f32 %v4082, 0.0
        %v4091 = vmax.f32 %v4083, 0.0
        %v4092 = vmax.f32 %v4084, 0.0
        %v4093 = vmax.f32 %v4085, 0.0
        %v4094 = vmax.f32 %v4086, 0.0
        %v4095 = vmax.f32 %v4087, 0.0
        %v4096 = vlaneseq
        %v4097 = vshrl.u32 %v4096, 7
        %v4098 = vsub.s32 0, %v4097
        %v4099 = vrot.slane %v4075, %v4098
        %v4100 = vmul.f32 %v4099, %v4088
        %v4101 = vmul.f32 %v4099, %v4089
        %v4102 = vmul.f32 %v4099, %v4090
        %v4103 = vmul.f32 %v4099, %v4091
        %v4104 = vmul.f32 %v4099, %v4092
        %v4105 = vmul.f32 %v4099, %v4093
        %v4106 = vmul.f32 %v4099, %v4094
        %v4107 = vmul.f32 %v4099, %v4095
        %v4108 = vadd.f32 %v4066, %v4100
        %v4109 = vadd.f32 %v4067, %v4101
        %v4110 = vadd.f32 %v4068, %v4102
        %v4111 = vadd.f32 %v4069, %v4103
        %v4112 = vadd.f32 %v4070, %v4104
        %v4113 = vadd.f32 %v4071, %v4105
        %v4114 = vadd.f32 %v4072, %v4106
        %v4115 = vadd.f32 %v4073, %v4107
        %v4116 = vld [vmem:[#allocation5 + $0x5b] sm:$0x1]
        %v4117 = vld [vmem:[#allocation7 + $0x5b] sm:$0x1]
        %v4118 = vlaneseq
        %v4119 = vshrl.u32 %v4118, 7
        %v4120 = vsub.s32 0, %v4119
        %v4121 = vrot.slane %v4116, %v4120
        %v4122 = vsub.f32 %v250, %v4121
        %v4123 = vsub.f32 %v251, %v4121
        %v4124 = vsub.f32 %v252, %v4121
        %v4125 = vsub.f32 %v253, %v4121
        %v4126 = vsub.f32 %v254, %v4121
        %v4127 = vsub.f32 %v255, %v4121
        %v4128 = vsub.f32 %v256, %v4121
        %v4129 = vsub.f32 %v257, %v4121
        %v4130 = vmax.f32 %v4122, 0.0
        %v4131 = vmax.f32 %v4123, 0.0
        %v4132 = vmax.f32 %v4124, 0.0
        %v4133 = vmax.f32 %v4125, 0.0
        %v4134 = vmax.f32 %v4126, 0.0
        %v4135 = vmax.f32 %v4127, 0.0
        %v4136 = vmax.f32 %v4128, 0.0
        %v4137 = vmax.f32 %v4129, 0.0
        %v4138 = vlaneseq
        %v4139 = vshrl.u32 %v4138, 7
        %v4140 = vsub.s32 0, %v4139
        %v4141 = vrot.slane %v4117, %v4140
        %v4142 = vmul.f32 %v4141, %v4130
        %v4143 = vmul.f32 %v4141, %v4131
        %v4144 = vmul.f32 %v4141, %v4132
        %v4145 = vmul.f32 %v4141, %v4133
        %v4146 = vmul.f32 %v4141, %v4134
        %v4147 = vmul.f32 %v4141, %v4135
        %v4148 = vmul.f32 %v4141, %v4136
        %v4149 = vmul.f32 %v4141, %v4137
        %v4150 = vadd.f32 %v4108, %v4142
        %v4151 = vadd.f32 %v4109, %v4143
        %v4152 = vadd.f32 %v4110, %v4144
        %v4153 = vadd.f32 %v4111, %v4145
        %v4154 = vadd.f32 %v4112, %v4146
        %v4155 = vadd.f32 %v4113, %v4147
        %v4156 = vadd.f32 %v4114, %v4148
        %v4157 = vadd.f32 %v4115, %v4149
        %v4158 = vld [vmem:[#allocation5 + $0x5c] sm:$0x1]
        %v4159 = vld [vmem:[#allocation7 + $0x5c] sm:$0x1]
        %v4160 = vlaneseq
        %v4161 = vshrl.u32 %v4160, 7
        %v4162 = vsub.s32 0, %v4161
        %v4163 = vrot.slane %v4158, %v4162
        %v4164 = vsub.f32 %v250, %v4163
        %v4165 = vsub.f32 %v251, %v4163
        %v4166 = vsub.f32 %v252, %v4163
        %v4167 = vsub.f32 %v253, %v4163
        %v4168 = vsub.f32 %v254, %v4163
        %v4169 = vsub.f32 %v255, %v4163
        %v4170 = vsub.f32 %v256, %v4163
        %v4171 = vsub.f32 %v257, %v4163
        %v4172 = vmax.f32 %v4164, 0.0
        %v4173 = vmax.f32 %v4165, 0.0
        %v4174 = vmax.f32 %v4166, 0.0
        %v4175 = vmax.f32 %v4167, 0.0
        %v4176 = vmax.f32 %v4168, 0.0
        %v4177 = vmax.f32 %v4169, 0.0
        %v4178 = vmax.f32 %v4170, 0.0
        %v4179 = vmax.f32 %v4171, 0.0
        %v4180 = vlaneseq
        %v4181 = vshrl.u32 %v4180, 7
        %v4182 = vsub.s32 0, %v4181
        %v4183 = vrot.slane %v4159, %v4182
        %v4184 = vmul.f32 %v4183, %v4172
        %v4185 = vmul.f32 %v4183, %v4173
        %v4186 = vmul.f32 %v4183, %v4174
        %v4187 = vmul.f32 %v4183, %v4175
        %v4188 = vmul.f32 %v4183, %v4176
        %v4189 = vmul.f32 %v4183, %v4177
        %v4190 = vmul.f32 %v4183, %v4178
        %v4191 = vmul.f32 %v4183, %v4179
        %v4192 = vadd.f32 %v4150, %v4184
        %v4193 = vadd.f32 %v4151, %v4185
        %v4194 = vadd.f32 %v4152, %v4186
        %v4195 = vadd.f32 %v4153, %v4187
        %v4196 = vadd.f32 %v4154, %v4188
        %v4197 = vadd.f32 %v4155, %v4189
        %v4198 = vadd.f32 %v4156, %v4190
        %v4199 = vadd.f32 %v4157, %v4191
        %v4200 = vld [vmem:[#allocation5 + $0x5d] sm:$0x1]
        %v4201 = vld [vmem:[#allocation7 + $0x5d] sm:$0x1]
        %v4202 = vlaneseq
        %v4203 = vshrl.u32 %v4202, 7
        %v4204 = vsub.s32 0, %v4203
        %v4205 = vrot.slane %v4200, %v4204
        %v4206 = vsub.f32 %v250, %v4205
        %v4207 = vsub.f32 %v251, %v4205
        %v4208 = vsub.f32 %v252, %v4205
        %v4209 = vsub.f32 %v253, %v4205
        %v4210 = vsub.f32 %v254, %v4205
        %v4211 = vsub.f32 %v255, %v4205
        %v4212 = vsub.f32 %v256, %v4205
        %v4213 = vsub.f32 %v257, %v4205
        %v4214 = vmax.f32 %v4206, 0.0
        %v4215 = vmax.f32 %v4207, 0.0
        %v4216 = vmax.f32 %v4208, 0.0
        %v4217 = vmax.f32 %v4209, 0.0
        %v4218 = vmax.f32 %v4210, 0.0
        %v4219 = vmax.f32 %v4211, 0.0
        %v4220 = vmax.f32 %v4212, 0.0
        %v4221 = vmax.f32 %v4213, 0.0
        %v4222 = vlaneseq
        %v4223 = vshrl.u32 %v4222, 7
        %v4224 = vsub.s32 0, %v4223
        %v4225 = vrot.slane %v4201, %v4224
        %v4226 = vmul.f32 %v4225, %v4214
        %v4227 = vmul.f32 %v4225, %v4215
        %v4228 = vmul.f32 %v4225, %v4216
        %v4229 = vmul.f32 %v4225, %v4217
        %v4230 = vmul.f32 %v4225, %v4218
        %v4231 = vmul.f32 %v4225, %v4219
        %v4232 = vmul.f32 %v4225, %v4220
        %v4233 = vmul.f32 %v4225, %v4221
        %v4234 = vadd.f32 %v4192, %v4226
        %v4235 = vadd.f32 %v4193, %v4227
        %v4236 = vadd.f32 %v4194, %v4228
        %v4237 = vadd.f32 %v4195, %v4229
        %v4238 = vadd.f32 %v4196, %v4230
        %v4239 = vadd.f32 %v4197, %v4231
        %v4240 = vadd.f32 %v4198, %v4232
        %v4241 = vadd.f32 %v4199, %v4233
        %v4242 = vld [vmem:[#allocation5 + $0x5e] sm:$0x1]
        %v4243 = vld [vmem:[#allocation7 + $0x5e] sm:$0x1]
        %v4244 = vlaneseq
        %v4245 = vshrl.u32 %v4244, 7
        %v4246 = vsub.s32 0, %v4245
        %v4247 = vrot.slane %v4242, %v4246
        %v4248 = vsub.f32 %v250, %v4247
        %v4249 = vsub.f32 %v251, %v4247
        %v4250 = vsub.f32 %v252, %v4247
        %v4251 = vsub.f32 %v253, %v4247
        %v4252 = vsub.f32 %v254, %v4247
        %v4253 = vsub.f32 %v255, %v4247
        %v4254 = vsub.f32 %v256, %v4247
        %v4255 = vsub.f32 %v257, %v4247
        %v4256 = vmax.f32 %v4248, 0.0
        %v4257 = vmax.f32 %v4249, 0.0
        %v4258 = vmax.f32 %v4250, 0.0
        %v4259 = vmax.f32 %v4251, 0.0
        %v4260 = vmax.f32 %v4252, 0.0
        %v4261 = vmax.f32 %v4253, 0.0
        %v4262 = vmax.f32 %v4254, 0.0
        %v4263 = vmax.f32 %v4255, 0.0
        %v4264 = vlaneseq
        %v4265 = vshrl.u32 %v4264, 7
        %v4266 = vsub.s32 0, %v4265
        %v4267 = vrot.slane %v4243, %v4266
        %v4268 = vmul.f32 %v4267, %v4256
        %v4269 = vmul.f32 %v4267, %v4257
        %v4270 = vmul.f32 %v4267, %v4258
        %v4271 = vmul.f32 %v4267, %v4259
        %v4272 = vmul.f32 %v4267, %v4260
        %v4273 = vmul.f32 %v4267, %v4261
        %v4274 = vmul.f32 %v4267, %v4262
        %v4275 = vmul.f32 %v4267, %v4263
        %v4276 = vadd.f32 %v4234, %v4268
        %v4277 = vadd.f32 %v4235, %v4269
        %v4278 = vadd.f32 %v4236, %v4270
        %v4279 = vadd.f32 %v4237, %v4271
        %v4280 = vadd.f32 %v4238, %v4272
        %v4281 = vadd.f32 %v4239, %v4273
        %v4282 = vadd.f32 %v4240, %v4274
        %v4283 = vadd.f32 %v4241, %v4275
        %v4284 = vld [vmem:[#allocation5 + $0x5f] sm:$0x1]
        %v4285 = vld [vmem:[#allocation7 + $0x5f] sm:$0x1]
        %v4286 = vlaneseq
        %v4287 = vshrl.u32 %v4286, 7
        %v4288 = vsub.s32 0, %v4287
        %v4289 = vrot.slane %v4284, %v4288
        %v4290 = vsub.f32 %v250, %v4289
        %v4291 = vsub.f32 %v251, %v4289
        %v4292 = vsub.f32 %v252, %v4289
        %v4293 = vsub.f32 %v253, %v4289
        %v4294 = vsub.f32 %v254, %v4289
        %v4295 = vsub.f32 %v255, %v4289
        %v4296 = vsub.f32 %v256, %v4289
        %v4297 = vsub.f32 %v257, %v4289
        %v4298 = vmax.f32 %v4290, 0.0
        %v4299 = vmax.f32 %v4291, 0.0
        %v4300 = vmax.f32 %v4292, 0.0
        %v4301 = vmax.f32 %v4293, 0.0
        %v4302 = vmax.f32 %v4294, 0.0
        %v4303 = vmax.f32 %v4295, 0.0
        %v4304 = vmax.f32 %v4296, 0.0
        %v4305 = vmax.f32 %v4297, 0.0
        %v4306 = vlaneseq
        %v4307 = vshrl.u32 %v4306, 7
        %v4308 = vsub.s32 0, %v4307
        %v4309 = vrot.slane %v4285, %v4308
        %v4310 = vmul.f32 %v4309, %v4298
        %v4311 = vmul.f32 %v4309, %v4299
        %v4312 = vmul.f32 %v4309, %v4300
        %v4313 = vmul.f32 %v4309, %v4301
        %v4314 = vmul.f32 %v4309, %v4302
        %v4315 = vmul.f32 %v4309, %v4303
        %v4316 = vmul.f32 %v4309, %v4304
        %v4317 = vmul.f32 %v4309, %v4305
        %v4318 = vadd.f32 %v4276, %v4310
        %v4319 = vadd.f32 %v4277, %v4311
        %v4320 = vadd.f32 %v4278, %v4312
        %v4321 = vadd.f32 %v4279, %v4313
        %v4322 = vadd.f32 %v4280, %v4314
        %v4323 = vadd.f32 %v4281, %v4315
        %v4324 = vadd.f32 %v4282, %v4316
        %v4325 = vadd.f32 %v4283, %v4317
        %v4326 = vld [vmem:[#allocation5 + $0x60] sm:$0x1]
        %v4327 = vld [vmem:[#allocation7 + $0x60] sm:$0x1]
        %v4328 = vlaneseq
        %v4329 = vshrl.u32 %v4328, 7
        %v4330 = vsub.s32 0, %v4329
        %v4331 = vrot.slane %v4326, %v4330
        %v4332 = vsub.f32 %v250, %v4331
        %v4333 = vsub.f32 %v251, %v4331
        %v4334 = vsub.f32 %v252, %v4331
        %v4335 = vsub.f32 %v253, %v4331
        %v4336 = vsub.f32 %v254, %v4331
        %v4337 = vsub.f32 %v255, %v4331
        %v4338 = vsub.f32 %v256, %v4331
        %v4339 = vsub.f32 %v257, %v4331
        %v4340 = vmax.f32 %v4332, 0.0
        %v4341 = vmax.f32 %v4333, 0.0
        %v4342 = vmax.f32 %v4334, 0.0
        %v4343 = vmax.f32 %v4335, 0.0
        %v4344 = vmax.f32 %v4336, 0.0
        %v4345 = vmax.f32 %v4337, 0.0
        %v4346 = vmax.f32 %v4338, 0.0
        %v4347 = vmax.f32 %v4339, 0.0
        %v4348 = vlaneseq
        %v4349 = vshrl.u32 %v4348, 7
        %v4350 = vsub.s32 0, %v4349
        %v4351 = vrot.slane %v4327, %v4350
        %v4352 = vmul.f32 %v4351, %v4340
        %v4353 = vmul.f32 %v4351, %v4341
        %v4354 = vmul.f32 %v4351, %v4342
        %v4355 = vmul.f32 %v4351, %v4343
        %v4356 = vmul.f32 %v4351, %v4344
        %v4357 = vmul.f32 %v4351, %v4345
        %v4358 = vmul.f32 %v4351, %v4346
        %v4359 = vmul.f32 %v4351, %v4347
        %v4360 = vadd.f32 %v4318, %v4352
        %v4361 = vadd.f32 %v4319, %v4353
        %v4362 = vadd.f32 %v4320, %v4354
        %v4363 = vadd.f32 %v4321, %v4355
        %v4364 = vadd.f32 %v4322, %v4356
        %v4365 = vadd.f32 %v4323, %v4357
        %v4366 = vadd.f32 %v4324, %v4358
        %v4367 = vadd.f32 %v4325, %v4359
        %v4368 = vld [vmem:[#allocation5 + $0x61] sm:$0x1]
        %v4369 = vld [vmem:[#allocation7 + $0x61] sm:$0x1]
        %v4370 = vlaneseq
        %v4371 = vshrl.u32 %v4370, 7
        %v4372 = vsub.s32 0, %v4371
        %v4373 = vrot.slane %v4368, %v4372
        %v4374 = vsub.f32 %v250, %v4373
        %v4375 = vsub.f32 %v251, %v4373
        %v4376 = vsub.f32 %v252, %v4373
        %v4377 = vsub.f32 %v253, %v4373
        %v4378 = vsub.f32 %v254, %v4373
        %v4379 = vsub.f32 %v255, %v4373
        %v4380 = vsub.f32 %v256, %v4373
        %v4381 = vsub.f32 %v257, %v4373
        %v4382 = vmax.f32 %v4374, 0.0
        %v4383 = vmax.f32 %v4375, 0.0
        %v4384 = vmax.f32 %v4376, 0.0
        %v4385 = vmax.f32 %v4377, 0.0
        %v4386 = vmax.f32 %v4378, 0.0
        %v4387 = vmax.f32 %v4379, 0.0
        %v4388 = vmax.f32 %v4380, 0.0
        %v4389 = vmax.f32 %v4381, 0.0
        %v4390 = vlaneseq
        %v4391 = vshrl.u32 %v4390, 7
        %v4392 = vsub.s32 0, %v4391
        %v4393 = vrot.slane %v4369, %v4392
        %v4394 = vmul.f32 %v4393, %v4382
        %v4395 = vmul.f32 %v4393, %v4383
        %v4396 = vmul.f32 %v4393, %v4384
        %v4397 = vmul.f32 %v4393, %v4385
        %v4398 = vmul.f32 %v4393, %v4386
        %v4399 = vmul.f32 %v4393, %v4387
        %v4400 = vmul.f32 %v4393, %v4388
        %v4401 = vmul.f32 %v4393, %v4389
        %v4402 = vadd.f32 %v4360, %v4394
        %v4403 = vadd.f32 %v4361, %v4395
        %v4404 = vadd.f32 %v4362, %v4396
        %v4405 = vadd.f32 %v4363, %v4397
        %v4406 = vadd.f32 %v4364, %v4398
        %v4407 = vadd.f32 %v4365, %v4399
        %v4408 = vadd.f32 %v4366, %v4400
        %v4409 = vadd.f32 %v4367, %v4401
        %v4410 = vld [vmem:[#allocation5 + $0x62] sm:$0x1]
        %v4411 = vld [vmem:[#allocation7 + $0x62] sm:$0x1]
        %v4412 = vlaneseq
        %v4413 = vshrl.u32 %v4412, 7
        %v4414 = vsub.s32 0, %v4413
        %v4415 = vrot.slane %v4410, %v4414
        %v4416 = vsub.f32 %v250, %v4415
        %v4417 = vsub.f32 %v251, %v4415
        %v4418 = vsub.f32 %v252, %v4415
        %v4419 = vsub.f32 %v253, %v4415
        %v4420 = vsub.f32 %v254, %v4415
        %v4421 = vsub.f32 %v255, %v4415
        %v4422 = vsub.f32 %v256, %v4415
        %v4423 = vsub.f32 %v257, %v4415
        %v4424 = vmax.f32 %v4416, 0.0
        %v4425 = vmax.f32 %v4417, 0.0
        %v4426 = vmax.f32 %v4418, 0.0
        %v4427 = vmax.f32 %v4419, 0.0
        %v4428 = vmax.f32 %v4420, 0.0
        %v4429 = vmax.f32 %v4421, 0.0
        %v4430 = vmax.f32 %v4422, 0.0
        %v4431 = vmax.f32 %v4423, 0.0
        %v4432 = vlaneseq
        %v4433 = vshrl.u32 %v4432, 7
        %v4434 = vsub.s32 0, %v4433
        %v4435 = vrot.slane %v4411, %v4434
        %v4436 = vmul.f32 %v4435, %v4424
        %v4437 = vmul.f32 %v4435, %v4425
        %v4438 = vmul.f32 %v4435, %v4426
        %v4439 = vmul.f32 %v4435, %v4427
        %v4440 = vmul.f32 %v4435, %v4428
        %v4441 = vmul.f32 %v4435, %v4429
        %v4442 = vmul.f32 %v4435, %v4430
        %v4443 = vmul.f32 %v4435, %v4431
        %v4444 = vadd.f32 %v4402, %v4436
        %v4445 = vadd.f32 %v4403, %v4437
        %v4446 = vadd.f32 %v4404, %v4438
        %v4447 = vadd.f32 %v4405, %v4439
        %v4448 = vadd.f32 %v4406, %v4440
        %v4449 = vadd.f32 %v4407, %v4441
        %v4450 = vadd.f32 %v4408, %v4442
        %v4451 = vadd.f32 %v4409, %v4443
        %v4452 = vld [vmem:[#allocation5 + $0x63] sm:$0x1]
        %v4453 = vld [vmem:[#allocation7 + $0x63] sm:$0x1]
        %v4454 = vlaneseq
        %v4455 = vshrl.u32 %v4454, 7
        %v4456 = vsub.s32 0, %v4455
        %v4457 = vrot.slane %v4452, %v4456
        %v4458 = vsub.f32 %v250, %v4457
        %v4459 = vsub.f32 %v251, %v4457
        %v4460 = vsub.f32 %v252, %v4457
        %v4461 = vsub.f32 %v253, %v4457
        %v4462 = vsub.f32 %v254, %v4457
        %v4463 = vsub.f32 %v255, %v4457
        %v4464 = vsub.f32 %v256, %v4457
        %v4465 = vsub.f32 %v257, %v4457
        %v4466 = vmax.f32 %v4458, 0.0
        %v4467 = vmax.f32 %v4459, 0.0
        %v4468 = vmax.f32 %v4460, 0.0
        %v4469 = vmax.f32 %v4461, 0.0
        %v4470 = vmax.f32 %v4462, 0.0
        %v4471 = vmax.f32 %v4463, 0.0
        %v4472 = vmax.f32 %v4464, 0.0
        %v4473 = vmax.f32 %v4465, 0.0
        %v4474 = vlaneseq
        %v4475 = vshrl.u32 %v4474, 7
        %v4476 = vsub.s32 0, %v4475
        %v4477 = vrot.slane %v4453, %v4476
        %v4478 = vmul.f32 %v4477, %v4466
        %v4479 = vmul.f32 %v4477, %v4467
        %v4480 = vmul.f32 %v4477, %v4468
        %v4481 = vmul.f32 %v4477, %v4469
        %v4482 = vmul.f32 %v4477, %v4470
        %v4483 = vmul.f32 %v4477, %v4471
        %v4484 = vmul.f32 %v4477, %v4472
        %v4485 = vmul.f32 %v4477, %v4473
        %v4486 = vadd.f32 %v4444, %v4478
        %v4487 = vadd.f32 %v4445, %v4479
        %v4488 = vadd.f32 %v4446, %v4480
        %v4489 = vadd.f32 %v4447, %v4481
        %v4490 = vadd.f32 %v4448, %v4482
        %v4491 = vadd.f32 %v4449, %v4483
        %v4492 = vadd.f32 %v4450, %v4484
        %v4493 = vadd.f32 %v4451, %v4485
        %v4494 = vld [vmem:[#allocation5 + $0x64] sm:$0x1]
        %v4495 = vld [vmem:[#allocation7 + $0x64] sm:$0x1]
        %v4496 = vlaneseq
        %v4497 = vshrl.u32 %v4496, 7
        %v4498 = vsub.s32 0, %v4497
        %v4499 = vrot.slane %v4494, %v4498
        %v4500 = vsub.f32 %v250, %v4499
        %v4501 = vsub.f32 %v251, %v4499
        %v4502 = vsub.f32 %v252, %v4499
        %v4503 = vsub.f32 %v253, %v4499
        %v4504 = vsub.f32 %v254, %v4499
        %v4505 = vsub.f32 %v255, %v4499
        %v4506 = vsub.f32 %v256, %v4499
        %v4507 = vsub.f32 %v257, %v4499
        %v4508 = vmax.f32 %v4500, 0.0
        %v4509 = vmax.f32 %v4501, 0.0
        %v4510 = vmax.f32 %v4502, 0.0
        %v4511 = vmax.f32 %v4503, 0.0
        %v4512 = vmax.f32 %v4504, 0.0
        %v4513 = vmax.f32 %v4505, 0.0
        %v4514 = vmax.f32 %v4506, 0.0
        %v4515 = vmax.f32 %v4507, 0.0
        %v4516 = vlaneseq
        %v4517 = vshrl.u32 %v4516, 7
        %v4518 = vsub.s32 0, %v4517
        %v4519 = vrot.slane %v4495, %v4518
        %v4520 = vmul.f32 %v4519, %v4508
        %v4521 = vmul.f32 %v4519, %v4509
        %v4522 = vmul.f32 %v4519, %v4510
        %v4523 = vmul.f32 %v4519, %v4511
        %v4524 = vmul.f32 %v4519, %v4512
        %v4525 = vmul.f32 %v4519, %v4513
        %v4526 = vmul.f32 %v4519, %v4514
        %v4527 = vmul.f32 %v4519, %v4515
        %v4528 = vadd.f32 %v4486, %v4520
        %v4529 = vadd.f32 %v4487, %v4521
        %v4530 = vadd.f32 %v4488, %v4522
        %v4531 = vadd.f32 %v4489, %v4523
        %v4532 = vadd.f32 %v4490, %v4524
        %v4533 = vadd.f32 %v4491, %v4525
        %v4534 = vadd.f32 %v4492, %v4526
        %v4535 = vadd.f32 %v4493, %v4527
        %4536 = vst [vmem:[%s244] sm:$0xff] %v4528
        %4537 = vst [vmem:[%s244 + $0x8] sm:$0xff] %v4529
        %4538 = vst [vmem:[%s244 + $0x10] sm:$0xff] %v4530
        %4539 = vst [vmem:[%s244 + $0x18] sm:$0xff] %v4531
        %4540 = vst [vmem:[%s244 + $0x20] sm:$0xff] %v4532
        %4541 = vst [vmem:[%s244 + $0x28] sm:$0xff] %v4533
        %4542 = vst [vmem:[%s244 + $0x30] sm:$0xff] %v4534
        %4543 = vst [vmem:[%s244 + $0x38] sm:$0xff] %v4535
        %s4544 = sand.u32 %s119, 1
        %s4545 = scalar_lea.sflag [#allocation4], %s4544
        %s4546 = sand.u32 %s119, 1
        %s4547 = smul.addr %s4546, 64
        %s4548 = scalar_lea.vmem [#allocation8], %s4547
        // Predicated region
        $region49: #{tpu_custom_call.1} parent=35 // pred_check
          %p4549 = pneg %p129
        $region50: #{tpu_custom_call.1} parent=35 // pred_check_branch
          %4551 = sbr.rel (%p4549) target = $region52
        $region51: #{tpu_custom_call.1} parent=35 // pred_region
          %s4552 = smul.u32 8, %s22
          %s4554 = ssub.s32 1024, 1024
          %4555 = vsyncadd %s4545, %s4554
          %s4556 = smul.addr %s4552, 128
          %s4557 = scalar_lea.hbm %s4, %s4556
          %s4558 = sshll.u32 %s4548, 4
          %s4559 = int_to_ptr.vmem [resolvable:$true] %s4558
          %4564 = dma.vmem_to_hbm [thread:$0]  %s4559, 1024, %s4557, %s4545, 128, 128, 8
        $region52: #{tpu_custom_call.1} parent=35 // pred_fallthru
          _
      $region36: #{tpu_custom_call.1} parent=5 // pred_fallthru
        _
      %p4565 = scmp.le.s32.totalorder 2, %s17
      // Predicated region
      $region53: #{tpu_custom_call.1} parent=5 // pred_check
        %p4566 = pneg %p4565
      $region54: #{tpu_custom_call.1} parent=5 // pred_check_branch
        %4568 = sbr.rel (%p4566) target = $region56
      $region55: #{tpu_custom_call.1} parent=5 // pred_region
        %s4569 = ssub.s32 %s17, 2
        // Predicated region
        $region57: #{tpu_custom_call.1} parent=55 // pred_check
          %p4570 = pneg %p135
        $region58: #{tpu_custom_call.1} parent=55 // pred_check_branch
          %4572 = sbr.rel (%p4570) target = $region60
        $region59: #{tpu_custom_call.1} parent=55 // pred_region
          %s4573 = sand.u32 %s120, 1
          %s4574 = scalar_lea.sflag [#allocation4], %s4573
          %s4575 = sand.u32 %s120, 1
          %s4576 = smul.addr %s4575, 64
          %s4577 = scalar_lea.vmem [#allocation8], %s4576
          %4578 = dma.done %s4574, 1024
        $region60: #{tpu_custom_call.1} parent=55 // pred_fallthru
          _
      $region56: #{tpu_custom_call.1} parent=5 // pred_fallthru
        _
    $region6: #{tpu_custom_call.1} parent=1 // loop_footer
      %s21 = sadd.s32 1, %s17
    $region7: #{tpu_custom_call.1} parent=1 // loop_footer_branch
      %16 = sbr.rel target = $region3
    $region8: #{tpu_custom_call.1} parent=1 // loop_exit
      _
    %4579 = vsyncpa [#allocation3], 1
    %s4580 = scalar_lea.sflag [#allocation3], 1
    %4581 = vsyncpa %s4580, 1
    %4582 = vsyncpa [#allocation6], 1
    %4583 = vsyncpa [#allocation4], 1
    %s4584 = scalar_lea.sflag [#allocation4], 1
    %4585 = vsyncpa %s4584, 1

</llo_original>
